<compile_context>
chip_gen: v5e
topology: v5e:2x2
jax: 0.10.0
libtpu: 0.0.40
codegen_flags: <defaults>
</compile_context>

<pallas_src>
import functools
import numpy as np
import jax
import jax.numpy as jnp
from jax.experimental import pallas as pl
from jax.experimental.pallas import tpu as pltpu


# ------------------------------ fused DQN kernel ------------------------------

def dqn_fused_kernel(*refs, heads1, ch1, heads2, ch2):
    (x_ref, adj_ref, e_ref, agent_ref,
     g1wl, g1bl, g1wr, g1br, g1we, g1att, g1bias,
     g2wl, g2bl, g2wr, g2br, g2we, g2att, g2bias,
     gw, gb,
     fw1, fb1, fw2, fb2,
     aw1, ab1, aw2, ab2, aw3, ab3, aw4, ab4,
     ow1g, ow1a, ob1, ow2, ob2,
     out_ref) = refs

    x = x_ref[...]        # [N, Fpad]
    adj = adj_ref[...]    # [N, N]   adj[i, j] = 1 if edge j -> i
    eattr = e_ref[...]    # [N, N]
    valid = adj > 0.5
    neg = jnp.float32(-1e30)

    def gat_layer(xin, wl, bl, wr, br, we, att_flat, bias, heads, C, concat):
        """Dense masked GATv2: all heads built at once (lane width heads*C)."""
        sl = jnp.dot(xin, wl[...], preferred_element_type=jnp.float32) + bl[...]  # source
        sr = jnp.dot(xin, wr[...], preferred_element_type=jnp.float32) + br[...]  # target
        # m[i, j, :] for edge j -> i, all heads at once: [N, N, H*C]
        m = sr[:, None, :] + sl[None, :, :] + eattr[:, :, None] * we[...][None]
        m = jnp.where(m >= 0.0, m, 0.2 * m)                  # leaky_relu(0.2), once
        weighted = m * att_flat[...][None]                   # att applied full-width

        outs = []
        for h in range(heads):
            lo = h * C
            logit = jnp.sum(weighted[:, :, lo:lo + C], axis=-1)        # [N, N]
            logit = jnp.where(valid, logit, neg)
            logit = logit - jnp.max(logit, axis=-1, keepdims=True)
            p = jnp.where(valid, jnp.exp(logit), 0.0)
            denom = jnp.maximum(jnp.sum(p, axis=-1, keepdims=True), jnp.float32(1e-30))
            alpha = p * pl.reciprocal(denom, approx=True)
            outs.append(jnp.dot(alpha, sl[:, lo:lo + C],
                                preferred_element_type=jnp.float32))   # [N, C]

        if concat:
            y = jnp.concatenate(outs, axis=-1) + bias[...]             # [N, H*C]
        else:
            acc = outs[0]
            for h in range(1, heads):
                acc = acc + outs[h]
            y = acc * jnp.float32(1.0 / heads) + bias[...]             # [N, C]
        return jnp.maximum(y, 0.0)                                      # F.relu

    # ---- GATv2 stack (intermediates stay in VMEM/vregs) ----
    h1 = gat_layer(x, g1wl, g1bl, g1wr, g1br, g1we, g1att, g1bias,
                   heads1, ch1, concat=True)        # [N, 64]
    h2 = gat_layer(h1, g2wl, g2bl, g2wr, g2br, g2we, g2att, g2bias,
                   heads2, ch2, concat=False)       # [N, 64]

    # ---- GlobalAttention pooling: per-feature softmax over the graph's nodes ----
    gate = jnp.dot(h2, gw[...], preferred_element_type=jnp.float32) + gb[...]
    gate = gate - jnp.max(gate, axis=0, keepdims=True)
    gate = jnp.exp(gate)
    gdenom = jnp.maximum(jnp.sum(gate, axis=0, keepdims=True), jnp.float32(1e-30))
    gate = gate * pl.reciprocal(gdenom, approx=True)
    pooled = jnp.sum(gate * h2, axis=0, keepdims=True)                  # [1, 64]

    relu = lambda v: jnp.maximum(v, 0.0)

    def dense(v, w, b):
        return jnp.dot(v, w[...], preferred_element_type=jnp.float32) + b[...]

    # graph_fc
    g = relu(dense(pooled, fw1, fb1))
    g = dense(g, fw2, fb2)                                              # [1, 64]

    # agent_fc
    a = agent_ref[...]                                                  # [1, 64]
    a = relu(dense(a, aw1, ab1))
    a = relu(dense(a, aw2, ab2))
    a = relu(dense(a, aw3, ab3))
    a = dense(a, aw4, ab4)                                              # [1, 32]

    # fc_output on concat([g, a], -1): weight split into 64- and 32-row halves.
    hcat = relu(jnp.dot(g, ow1g[...], preferred_element_type=jnp.float32)
                + jnp.dot(a, ow1a[...], preferred_element_type=jnp.float32)
                + ob1[...])
    out_ref[...] = dense(hcat, ow2, ob2)                                # [1, A]


# --------------------------------- DQN forward ---------------------------------

_FPAD = 8  # pad Fin=3 -> 8 (zero-padded; result unchanged, regular MXU K dim)


def _const_spec(a):
    nd = a.ndim
    return pl.BlockSpec(tuple(a.shape), lambda b, _nd=nd: (0,) * _nd)


@functools.partial(jax.jit, static_argnames=("num_actions",))
def dqn_forward(x, adj, eattr, agent_state, params, num_actions):
    B, N, Fin = x.shape
    g1, g2 = params["g1"], params["g2"]

    # Host-side layout prep (zero-padding / flattening only; semantics unchanged).
    x_p = jnp.pad(x, ((0, 0), (0, 0), (0, _FPAD - Fin)))
    wl1 = jnp.pad(g1["wl"], ((0, _FPAD - Fin), (0, 0)))
    wr1 = jnp.pad(g1["wr"], ((0, _FPAD - Fin), (0, 0)))
    att1 = g1["att"].reshape(1, -1)        # [1, H1*C1]
    att2 = g2["att"].reshape(1, -1)        # [1, H2*C2]
    agent3 = agent_state[:, None, :]       # [B, 1, 64]

    weights = [
        wl1, g1["bl"], wr1, g1["br"], g1["we"], att1, g1["bias"],
        g2["wl"], g2["bl"], g2["wr"], g2["br"], g2["we"], att2, g2["bias"],
        params["gate"]["w"], params["gate"]["b"],
        params["graph_fc"]["w1"], params["graph_fc"]["b1"],
        params["graph_fc"]["w2"], params["graph_fc"]["b2"],
        params["agent_fc"]["w1"], params["agent_fc"]["b1"],
        params["agent_fc"]["w2"], params["agent_fc"]["b2"],
        params["agent_fc"]["w3"], params["agent_fc"]["b3"],
        params["agent_fc"]["w4"], params["agent_fc"]["b4"],
        params["out"]["w1g"], params["out"]["w1a"], params["out"]["b1"],
        params["out"]["w2"], params["out"]["b2"],
    ]

    in_specs = [
        pl.BlockSpec((None, N, _FPAD), lambda b: (b, 0, 0)),   # x (leading dim squeezed)
        pl.BlockSpec((None, N, N), lambda b: (b, 0, 0)),       # adj
        pl.BlockSpec((None, N, N), lambda b: (b, 0, 0)),       # eattr
        pl.BlockSpec((None, 1, 64), lambda b: (b, 0, 0)),      # agent_state row
    ] + [_const_spec(w) for w in weights]                       # weights stay VMEM-resident

    out = pl.pallas_call(
        functools.partial(dqn_fused_kernel, heads1=2, ch1=32, heads2=2, ch2=64),
        out_shape=jax.ShapeDtypeStruct((B, 1, num_actions), jnp.float32),
        grid=(B,),
        in_specs=in_specs,
        out_specs=pl.BlockSpec((None, 1, num_actions), lambda b: (b, 0, 0)),
        compiler_params=pltpu.CompilerParams(dimension_semantics=("parallel",)),
    )(x_p, adj, eattr, agent3, *weights)
    return out.reshape(B, num_actions)


# ------------------------------ parameter init ---------------------------------

def init_params(key, num_actions):
    keys = iter(jax.random.split(key, 32))

    def xavier(shape):
        fan_in, fan_out = shape[0], shape[-1]
        bound = float(np.sqrt(6.0 / (fan_in + fan_out)))
        return jax.random.uniform(next(keys), shape, jnp.float32, -bound, bound)

    zeros = lambda s: jnp.zeros(s, jnp.float32)
    p = {}
    H1, C1 = 2, 32
    p["g1"] = dict(wl=xavier((3, H1 * C1)), bl=zeros((1, H1 * C1)),
                   wr=xavier((3, H1 * C1)), br=zeros((1, H1 * C1)),
                   we=xavier((1, H1 * C1)), att=xavier((H1, C1)),
                   bias=zeros((1, H1 * C1)))
    H2, C2 = 2, 64
    p["g2"] = dict(wl=xavier((64, H2 * C2)), bl=zeros((1, H2 * C2)),
                   wr=xavier((64, H2 * C2)), br=zeros((1, H2 * C2)),
                   we=xavier((1, H2 * C2)), att=xavier((H2, C2)),
                   bias=zeros((1, C2)))
    p["gate"] = dict(w=xavier((64, 64)), b=zeros((1, 64)))
    p["graph_fc"] = dict(w1=xavier((64, 128)), b1=zeros((1, 128)),
                         w2=xavier((128, 64)), b2=zeros((1, 64)))
    p["agent_fc"] = dict(w1=xavier((64, 256)), b1=zeros((1, 256)),
                         w2=xavier((256, 128)), b2=zeros((1, 128)),
                         w3=xavier((128, 64)), b3=zeros((1, 64)),
                         w4=xavier((64, 32)), b4=zeros((1, 32)))
    ow1 = xavier((96, 128))
    p["out"] = dict(w1g=ow1[:64], w1a=ow1[64:], b1=zeros((1, 128)),
                    w2=xavier((128, num_actions)), b2=zeros((1, num_actions)))
    return p


# ---------------------------- synthetic graph inputs ----------------------------

def build_dense_graph(key, batch, n):
    """Bidirectional ring per graph + self loops with fill_value='mean'."""
    attrs = np.array(jax.random.uniform(key, (batch, 2 * n), jnp.float32))
    adj = np.zeros((batch, n, n), np.float32)
    eattr = np.zeros((batch, n, n), np.float32)
    for b in range(batch):
        e = 0
        for i in range(n):
            for (s, d) in ((i, (i + 1) % n), ((i + 1) % n, i)):
                adj[b, d, s] = 1.0          # edge s -> d stored at [target, source]
                eattr[b, d, s] = attrs[b, e]
                e += 1
    for b in range(batch):                   # add_self_loops(fill_value='mean')
        for i in range(n):
            deg = adj[b, i, :].sum()
            mean = eattr[b, i, :].sum() / max(deg, 1.0)
            adj[b, i, i] = 1.0
            eattr[b, i, i] = mean
    return jnp.asarray(adj), jnp.asarray(eattr)


# ------------------------------------- main -------------------------------------

if __name__ == "__main__":
    B, N, NUM_ACTIONS = 2, 8, 4
    root = jax.random.PRNGKey(0)
    k_params, k_x, k_edge, k_agent = jax.random.split(root, 4)

    params = init_params(k_params, NUM_ACTIONS)
    x = jax.random.normal(k_x, (B, N, 3), jnp.float32)            # node features
    adj, eattr = build_dense_graph(k_edge, B, N)                   # dense graph
    agent_state = jax.random.normal(k_agent, (B, 64), jnp.float32)

    q_values = dqn_forward(x, adj, eattr, agent_state, params, NUM_ACTIONS)
    q_values = jax.block_until_ready(q_values)
    assert q_values.shape == (B, NUM_ACTIONS)
    assert bool(jnp.all(jnp.isfinite(q_values)))
    print("KERNEL_OK")
</pallas_src>

<mosaic_0001>
module attributes {stable_mosaic.version = 11 : i64} {
  func.func @dqn_fused_kernel(%arg0: i32, %arg1: memref<1x8x8xf32, #tpu.memory_space<vmem>>, %arg2: memref<1x8x8xf32, #tpu.memory_space<vmem>>, %arg3: memref<1x8x8xf32, #tpu.memory_space<vmem>>, %arg4: memref<1x1x64xf32, #tpu.memory_space<vmem>>, %arg5: memref<8x64xf32, #tpu.memory_space<vmem>>, %arg6: memref<1x64xf32, #tpu.memory_space<vmem>>, %arg7: memref<8x64xf32, #tpu.memory_space<vmem>>, %arg8: memref<1x64xf32, #tpu.memory_space<vmem>>, %arg9: memref<1x64xf32, #tpu.memory_space<vmem>>, %arg10: memref<1x64xf32, #tpu.memory_space<vmem>>, %arg11: memref<1x64xf32, #tpu.memory_space<vmem>>, %arg12: memref<64x128xf32, #tpu.memory_space<vmem>>, %arg13: memref<1x128xf32, #tpu.memory_space<vmem>>, %arg14: memref<64x128xf32, #tpu.memory_space<vmem>>, %arg15: memref<1x128xf32, #tpu.memory_space<vmem>>, %arg16: memref<1x128xf32, #tpu.memory_space<vmem>>, %arg17: memref<1x128xf32, #tpu.memory_space<vmem>>, %arg18: memref<1x64xf32, #tpu.memory_space<vmem>>, %arg19: memref<64x64xf32, #tpu.memory_space<vmem>>, %arg20: memref<1x64xf32, #tpu.memory_space<vmem>>, %arg21: memref<64x128xf32, #tpu.memory_space<vmem>>, %arg22: memref<1x128xf32, #tpu.memory_space<vmem>>, %arg23: memref<128x64xf32, #tpu.memory_space<vmem>>, %arg24: memref<1x64xf32, #tpu.memory_space<vmem>>, %arg25: memref<64x256xf32, #tpu.memory_space<vmem>>, %arg26: memref<1x256xf32, #tpu.memory_space<vmem>>, %arg27: memref<256x128xf32, #tpu.memory_space<vmem>>, %arg28: memref<1x128xf32, #tpu.memory_space<vmem>>, %arg29: memref<128x64xf32, #tpu.memory_space<vmem>>, %arg30: memref<1x64xf32, #tpu.memory_space<vmem>>, %arg31: memref<64x32xf32, #tpu.memory_space<vmem>>, %arg32: memref<1x32xf32, #tpu.memory_space<vmem>>, %arg33: memref<64x128xf32, #tpu.memory_space<vmem>>, %arg34: memref<32x128xf32, #tpu.memory_space<vmem>>, %arg35: memref<1x128xf32, #tpu.memory_space<vmem>>, %arg36: memref<128x4xf32, #tpu.memory_space<vmem>>, %arg37: memref<1x4xf32, #tpu.memory_space<vmem>>, %arg38: memref<1x1x4xf32, #tpu.memory_space<vmem>>) attributes {dimension_semantics = [#tpu.dimension_semantics<parallel>], iteration_bounds = array<i64: 2>, scalar_prefetch = 0 : i64, scratch_operands = 0 : i64, tpu.core_type = #tpu.core_type<tc>, window_params = [{transform_indices = @transform_0, window_bounds = array<i64: 1, 8, 8>}, {transform_indices = @transform_1, window_bounds = array<i64: 1, 8, 8>}, {transform_indices = @transform_2, window_bounds = array<i64: 1, 8, 8>}, {transform_indices = @transform_3, window_bounds = array<i64: 1, 1, 64>}, {pipeline_mode = #tpu.pipeline_mode<synchronous>, transform_indices = @transform_4, window_bounds = array<i64: 8, 64>}, {pipeline_mode = #tpu.pipeline_mode<synchronous>, transform_indices = @transform_5, window_bounds = array<i64: 1, 64>}, {pipeline_mode = #tpu.pipeline_mode<synchronous>, transform_indices = @transform_6, window_bounds = array<i64: 8, 64>}, {pipeline_mode = #tpu.pipeline_mode<synchronous>, transform_indices = @transform_7, window_bounds = array<i64: 1, 64>}, {pipeline_mode = #tpu.pipeline_mode<synchronous>, transform_indices = @transform_8, window_bounds = array<i64: 1, 64>}, {pipeline_mode = #tpu.pipeline_mode<synchronous>, transform_indices = @transform_9, window_bounds = array<i64: 1, 64>}, {pipeline_mode = #tpu.pipeline_mode<synchronous>, transform_indices = @transform_10, window_bounds = array<i64: 1, 64>}, {pipeline_mode = #tpu.pipeline_mode<synchronous>, transform_indices = @transform_11, window_bounds = array<i64: 64, 128>}, {pipeline_mode = #tpu.pipeline_mode<synchronous>, transform_indices = @transform_12, window_bounds = array<i64: 1, 128>}, {pipeline_mode = #tpu.pipeline_mode<synchronous>, transform_indices = @transform_13, window_bounds = array<i64: 64, 128>}, {pipeline_mode = #tpu.pipeline_mode<synchronous>, transform_indices = @transform_14, window_bounds = array<i64: 1, 128>}, {pipeline_mode = #tpu.pipeline_mode<synchronous>, transform_indices = @transform_15, window_bounds = array<i64: 1, 128>}, {pipeline_mode = #tpu.pipeline_mode<synchronous>, transform_indices = @transform_16, window_bounds = array<i64: 1, 128>}, {pipeline_mode = #tpu.pipeline_mode<synchronous>, transform_indices = @transform_17, window_bounds = array<i64: 1, 64>}, {pipeline_mode = #tpu.pipeline_mode<synchronous>, transform_indices = @transform_18, window_bounds = array<i64: 64, 64>}, {pipeline_mode = #tpu.pipeline_mode<synchronous>, transform_indices = @transform_19, window_bounds = array<i64: 1, 64>}, {pipeline_mode = #tpu.pipeline_mode<synchronous>, transform_indices = @transform_20, window_bounds = array<i64: 64, 128>}, {pipeline_mode = #tpu.pipeline_mode<synchronous>, transform_indices = @transform_21, window_bounds = array<i64: 1, 128>}, {pipeline_mode = #tpu.pipeline_mode<synchronous>, transform_indices = @transform_22, window_bounds = array<i64: 128, 64>}, {pipeline_mode = #tpu.pipeline_mode<synchronous>, transform_indices = @transform_23, window_bounds = array<i64: 1, 64>}, {pipeline_mode = #tpu.pipeline_mode<synchronous>, transform_indices = @transform_24, window_bounds = array<i64: 64, 256>}, {pipeline_mode = #tpu.pipeline_mode<synchronous>, transform_indices = @transform_25, window_bounds = array<i64: 1, 256>}, {pipeline_mode = #tpu.pipeline_mode<synchronous>, transform_indices = @transform_26, window_bounds = array<i64: 256, 128>}, {pipeline_mode = #tpu.pipeline_mode<synchronous>, transform_indices = @transform_27, window_bounds = array<i64: 1, 128>}, {pipeline_mode = #tpu.pipeline_mode<synchronous>, transform_indices = @transform_28, window_bounds = array<i64: 128, 64>}, {pipeline_mode = #tpu.pipeline_mode<synchronous>, transform_indices = @transform_29, window_bounds = array<i64: 1, 64>}, {pipeline_mode = #tpu.pipeline_mode<synchronous>, transform_indices = @transform_30, window_bounds = array<i64: 64, 32>}, {pipeline_mode = #tpu.pipeline_mode<synchronous>, transform_indices = @transform_31, window_bounds = array<i64: 1, 32>}, {pipeline_mode = #tpu.pipeline_mode<synchronous>, transform_indices = @transform_32, window_bounds = array<i64: 64, 128>}, {pipeline_mode = #tpu.pipeline_mode<synchronous>, transform_indices = @transform_33, window_bounds = array<i64: 32, 128>}, {pipeline_mode = #tpu.pipeline_mode<synchronous>, transform_indices = @transform_34, window_bounds = array<i64: 1, 128>}, {pipeline_mode = #tpu.pipeline_mode<synchronous>, transform_indices = @transform_35, window_bounds = array<i64: 128, 4>}, {pipeline_mode = #tpu.pipeline_mode<synchronous>, transform_indices = @transform_36, window_bounds = array<i64: 1, 4>}, {transform_indices = @transform_37, window_bounds = array<i64: 1, 1, 4>}]} {
    %c0 = arith.constant 0 : index
    %c0_0 = arith.constant 0 : index
    %c0_1 = arith.constant 0 : index
    %0 = vector.load %arg1[%c0, %c0_0, %c0_1] : memref<1x8x8xf32, #tpu.memory_space<vmem>>, vector<1x8x8xf32>
    %1 = vector.shape_cast %0 : vector<1x8x8xf32> to vector<8x8xf32>
    %c0_2 = arith.constant 0 : index
    %c0_3 = arith.constant 0 : index
    %c0_4 = arith.constant 0 : index
    %2 = vector.load %arg2[%c0_2, %c0_3, %c0_4] : memref<1x8x8xf32, #tpu.memory_space<vmem>>, vector<1x8x8xf32>
    %3 = vector.shape_cast %2 : vector<1x8x8xf32> to vector<8x8xf32>
    %c0_5 = arith.constant 0 : index
    %c0_6 = arith.constant 0 : index
    %c0_7 = arith.constant 0 : index
    %4 = vector.load %arg3[%c0_5, %c0_6, %c0_7] : memref<1x8x8xf32, #tpu.memory_space<vmem>>, vector<1x8x8xf32>
    %5 = vector.shape_cast %4 : vector<1x8x8xf32> to vector<8x8xf32>
    %cst = arith.constant 5.000000e-01 : f32
    %6 = vector.broadcast %cst : f32 to vector<8x8xf32>
    %7 = arith.cmpf ogt, %3, %6 : vector<8x8xf32>
    %c0_8 = arith.constant 0 : index
    %c0_9 = arith.constant 0 : index
    %8 = vector.load %arg5[%c0_8, %c0_9] : memref<8x64xf32, #tpu.memory_space<vmem>>, vector<8x64xf32>
    %cst_10 = arith.constant dense<0.000000e+00> : vector<8x64xf32>
    %9 = tpu.matmul %1, %8, %cst_10 {dimension_numbers = #tpu.dot_dimension_numbers<[1], [0], [0], [1], [0, 0, 1, 1], [], []>} : vector<8x8xf32>, vector<8x64xf32>, vector<8x64xf32> -> vector<8x64xf32>
    %c0_11 = arith.constant 0 : index
    %c0_12 = arith.constant 0 : index
    %10 = vector.load %arg6[%c0_11, %c0_12] : memref<1x64xf32, #tpu.memory_space<vmem>>, vector<1x64xf32>
    %11 = vector.broadcast %10 : vector<1x64xf32> to vector<8x64xf32>
    %12 = arith.addf %9, %11 : vector<8x64xf32>
    %c0_13 = arith.constant 0 : index
    %c0_14 = arith.constant 0 : index
    %13 = vector.load %arg7[%c0_13, %c0_14] : memref<8x64xf32, #tpu.memory_space<vmem>>, vector<8x64xf32>
    %cst_15 = arith.constant dense<0.000000e+00> : vector<8x64xf32>
    %14 = tpu.matmul %1, %13, %cst_15 {dimension_numbers = #tpu.dot_dimension_numbers<[1], [0], [0], [1], [0, 0, 1, 1], [], []>} : vector<8x8xf32>, vector<8x64xf32>, vector<8x64xf32> -> vector<8x64xf32>
    %c0_16 = arith.constant 0 : index
    %c0_17 = arith.constant 0 : index
    %15 = vector.load %arg8[%c0_16, %c0_17] : memref<1x64xf32, #tpu.memory_space<vmem>>, vector<1x64xf32>
    %16 = vector.broadcast %15 : vector<1x64xf32> to vector<8x64xf32>
    %17 = arith.addf %14, %16 : vector<8x64xf32>
    %18 = vector.shape_cast %17 : vector<8x64xf32> to vector<8x1x64xf32>
    %19 = vector.shape_cast %12 : vector<8x64xf32> to vector<1x8x64xf32>
    %20 = vector.broadcast %18 : vector<8x1x64xf32> to vector<8x8x64xf32>
    %21 = vector.broadcast %19 : vector<1x8x64xf32> to vector<8x8x64xf32>
    %22 = arith.addf %20, %21 : vector<8x8x64xf32>
    %23 = vector.shape_cast %5 : vector<8x8xf32> to vector<8x8x1xf32>
    %c0_18 = arith.constant 0 : index
    %c0_19 = arith.constant 0 : index
    %24 = vector.load %arg9[%c0_18, %c0_19] : memref<1x64xf32, #tpu.memory_space<vmem>>, vector<1x64xf32>
    %25 = vector.shape_cast %24 : vector<1x64xf32> to vector<1x1x64xf32>
    %26 = vector.broadcast %23 : vector<8x8x1xf32> to vector<8x8x64xf32>
    %27 = vector.broadcast %25 : vector<1x1x64xf32> to vector<8x8x64xf32>
    %28 = arith.mulf %26, %27 : vector<8x8x64xf32>
    %29 = arith.addf %22, %28 : vector<8x8x64xf32>
    %cst_20 = arith.constant 0.000000e+00 : f32
    %30 = vector.broadcast %cst_20 : f32 to vector<8x8x64xf32>
    %31 = arith.cmpf oge, %29, %30 : vector<8x8x64xf32>
    %cst_21 = arith.constant 2.000000e-01 : f32
    %32 = vector.broadcast %cst_21 : f32 to vector<8x8x64xf32>
    %33 = arith.mulf %32, %29 : vector<8x8x64xf32>
    %34 = arith.select %31, %29, %33 : vector<8x8x64xi1>, vector<8x8x64xf32>
    %c0_22 = arith.constant 0 : index
    %c0_23 = arith.constant 0 : index
    %35 = vector.load %arg10[%c0_22, %c0_23] : memref<1x64xf32, #tpu.memory_space<vmem>>, vector<1x64xf32>
    %36 = vector.shape_cast %35 : vector<1x64xf32> to vector<1x1x64xf32>
    %37 = vector.broadcast %36 : vector<1x1x64xf32> to vector<8x8x64xf32>
    %38 = arith.mulf %34, %37 : vector<8x8x64xf32>
    %39 = vector.extract_strided_slice %38 {offsets = [0, 0, 0], sizes = [8, 8, 32], strides = [1, 1, 1]} : vector<8x8x64xf32> to vector<8x8x32xf32>
    %cst_24 = arith.constant dense<0.000000e+00> : vector<8x8xf32>
    %40 = vector.multi_reduction <add>, %39, %cst_24 [2] : vector<8x8x32xf32> to vector<8x8xf32>
    %cst_25 = arith.constant -1.000000e+30 : f32
    %41 = vector.broadcast %cst_25 : f32 to vector<8x8xf32>
    %42 = arith.select %7, %40, %41 : vector<8x8xi1>, vector<8x8xf32>
    %cst_26 = arith.constant dense<0xFF800000> : vector<8xf32>
    %43 = vector.multi_reduction <maximumf>, %42, %cst_26 [1] : vector<8x8xf32> to vector<8xf32>
    %44 = vector.shape_cast %43 : vector<8xf32> to vector<8x1xf32>
    %45 = vector.broadcast %44 : vector<8x1xf32> to vector<8x8xf32>
    %46 = arith.subf %42, %45 : vector<8x8xf32>
    %47 = math.exp %46 : vector<8x8xf32>
    %cst_27 = arith.constant 0.000000e+00 : f32
    %48 = vector.broadcast %cst_27 : f32 to vector<8x8xf32>
    %49 = arith.select %7, %47, %48 : vector<8x8xi1>, vector<8x8xf32>
    %cst_28 = arith.constant dense<0.000000e+00> : vector<8xf32>
    %50 = vector.multi_reduction <add>, %49, %cst_28 [1] : vector<8x8xf32> to vector<8xf32>
    %51 = vector.shape_cast %50 : vector<8xf32> to vector<8x1xf32>
    %cst_29 = arith.constant 1.000000e-30 : f32
    %52 = vector.broadcast %cst_29 : f32 to vector<8x1xf32>
    %53 = arith.maximumf %51, %52 : vector<8x1xf32>
    %54 = tpu.reciprocal %53 {approx = true} : vector<8x1xf32> -> vector<8x1xf32>
    %55 = vector.broadcast %54 : vector<8x1xf32> to vector<8x8xf32>
    %56 = arith.mulf %49, %55 : vector<8x8xf32>
    %57 = vector.extract_strided_slice %12 {offsets = [0, 0], sizes = [8, 32], strides = [1, 1]} : vector<8x64xf32> to vector<8x32xf32>
    %cst_30 = arith.constant dense<0.000000e+00> : vector<8x32xf32>
    %58 = tpu.matmul %56, %57, %cst_30 {dimension_numbers = #tpu.dot_dimension_numbers<[1], [0], [0], [1], [0, 0, 1, 1], [], []>} : vector<8x8xf32>, vector<8x32xf32>, vector<8x32xf32> -> vector<8x32xf32>
    %59 = vector.extract_strided_slice %38 {offsets = [0, 0, 32], sizes = [8, 8, 32], strides = [1, 1, 1]} : vector<8x8x64xf32> to vector<8x8x32xf32>
    %cst_31 = arith.constant dense<0.000000e+00> : vector<8x8xf32>
    %60 = vector.multi_reduction <add>, %59, %cst_31 [2] : vector<8x8x32xf32> to vector<8x8xf32>
    %cst_32 = arith.constant -1.000000e+30 : f32
    %61 = vector.broadcast %cst_32 : f32 to vector<8x8xf32>
    %62 = arith.select %7, %60, %61 : vector<8x8xi1>, vector<8x8xf32>
    %cst_33 = arith.constant dense<0xFF800000> : vector<8xf32>
    %63 = vector.multi_reduction <maximumf>, %62, %cst_33 [1] : vector<8x8xf32> to vector<8xf32>
    %64 = vector.shape_cast %63 : vector<8xf32> to vector<8x1xf32>
    %65 = vector.broadcast %64 : vector<8x1xf32> to vector<8x8xf32>
    %66 = arith.subf %62, %65 : vector<8x8xf32>
    %67 = math.exp %66 : vector<8x8xf32>
    %cst_34 = arith.constant 0.000000e+00 : f32
    %68 = vector.broadcast %cst_34 : f32 to vector<8x8xf32>
    %69 = arith.select %7, %67, %68 : vector<8x8xi1>, vector<8x8xf32>
    %cst_35 = arith.constant dense<0.000000e+00> : vector<8xf32>
    %70 = vector.multi_reduction <add>, %69, %cst_35 [1] : vector<8x8xf32> to vector<8xf32>
    %71 = vector.shape_cast %70 : vector<8xf32> to vector<8x1xf32>
    %cst_36 = arith.constant 1.000000e-30 : f32
    %72 = vector.broadcast %cst_36 : f32 to vector<8x1xf32>
    %73 = arith.maximumf %71, %72 : vector<8x1xf32>
    %74 = tpu.reciprocal %73 {approx = true} : vector<8x1xf32> -> vector<8x1xf32>
    %75 = vector.broadcast %74 : vector<8x1xf32> to vector<8x8xf32>
    %76 = arith.mulf %69, %75 : vector<8x8xf32>
    %77 = vector.extract_strided_slice %12 {offsets = [0, 32], sizes = [8, 32], strides = [1, 1]} : vector<8x64xf32> to vector<8x32xf32>
    %cst_37 = arith.constant dense<0.000000e+00> : vector<8x32xf32>
    %78 = tpu.matmul %76, %77, %cst_37 {dimension_numbers = #tpu.dot_dimension_numbers<[1], [0], [0], [1], [0, 0, 1, 1], [], []>} : vector<8x8xf32>, vector<8x32xf32>, vector<8x32xf32> -> vector<8x32xf32>
    %79 = tpu.concatenate %58, %78 in 1 : vector<8x32xf32>, vector<8x32xf32> -> vector<8x64xf32>
    %c0_38 = arith.constant 0 : index
    %c0_39 = arith.constant 0 : index
    %80 = vector.load %arg11[%c0_38, %c0_39] : memref<1x64xf32, #tpu.memory_space<vmem>>, vector<1x64xf32>
    %81 = vector.broadcast %80 : vector<1x64xf32> to vector<8x64xf32>
    %82 = arith.addf %79, %81 : vector<8x64xf32>
    %cst_40 = arith.constant 0.000000e+00 : f32
    %83 = vector.broadcast %cst_40 : f32 to vector<8x64xf32>
    %84 = arith.maximumf %82, %83 : vector<8x64xf32>
    %c0_41 = arith.constant 0 : index
    %c0_42 = arith.constant 0 : index
    %85 = vector.load %arg12[%c0_41, %c0_42] : memref<64x128xf32, #tpu.memory_space<vmem>>, vector<64x128xf32>
    %cst_43 = arith.constant dense<0.000000e+00> : vector<8x128xf32>
    %86 = tpu.matmul %84, %85, %cst_43 {dimension_numbers = #tpu.dot_dimension_numbers<[1], [0], [0], [1], [0, 0, 1, 1], [], []>} : vector<8x64xf32>, vector<64x128xf32>, vector<8x128xf32> -> vector<8x128xf32>
    %c0_44 = arith.constant 0 : index
    %c0_45 = arith.constant 0 : index
    %87 = vector.load %arg13[%c0_44, %c0_45] : memref<1x128xf32, #tpu.memory_space<vmem>>, vector<1x128xf32>
    %88 = vector.broadcast %87 : vector<1x128xf32> to vector<8x128xf32>
    %89 = arith.addf %86, %88 : vector<8x128xf32>
    %c0_46 = arith.constant 0 : index
    %c0_47 = arith.constant 0 : index
    %90 = vector.load %arg14[%c0_46, %c0_47] : memref<64x128xf32, #tpu.memory_space<vmem>>, vector<64x128xf32>
    %cst_48 = arith.constant dense<0.000000e+00> : vector<8x128xf32>
    %91 = tpu.matmul %84, %90, %cst_48 {dimension_numbers = #tpu.dot_dimension_numbers<[1], [0], [0], [1], [0, 0, 1, 1], [], []>} : vector<8x64xf32>, vector<64x128xf32>, vector<8x128xf32> -> vector<8x128xf32>
    %c0_49 = arith.constant 0 : index
    %c0_50 = arith.constant 0 : index
    %92 = vector.load %arg15[%c0_49, %c0_50] : memref<1x128xf32, #tpu.memory_space<vmem>>, vector<1x128xf32>
    %93 = vector.broadcast %92 : vector<1x128xf32> to vector<8x128xf32>
    %94 = arith.addf %91, %93 : vector<8x128xf32>
    %95 = vector.shape_cast %94 : vector<8x128xf32> to vector<8x1x128xf32>
    %96 = vector.shape_cast %89 : vector<8x128xf32> to vector<1x8x128xf32>
    %97 = vector.broadcast %95 : vector<8x1x128xf32> to vector<8x8x128xf32>
    %98 = vector.broadcast %96 : vector<1x8x128xf32> to vector<8x8x128xf32>
    %99 = arith.addf %97, %98 : vector<8x8x128xf32>
    %100 = vector.shape_cast %5 : vector<8x8xf32> to vector<8x8x1xf32>
    %c0_51 = arith.constant 0 : index
    %c0_52 = arith.constant 0 : index
    %101 = vector.load %arg16[%c0_51, %c0_52] : memref<1x128xf32, #tpu.memory_space<vmem>>, vector<1x128xf32>
    %102 = vector.shape_cast %101 : vector<1x128xf32> to vector<1x1x128xf32>
    %103 = vector.broadcast %100 : vector<8x8x1xf32> to vector<8x8x128xf32>
    %104 = vector.broadcast %102 : vector<1x1x128xf32> to vector<8x8x128xf32>
    %105 = arith.mulf %103, %104 : vector<8x8x128xf32>
    %106 = arith.addf %99, %105 : vector<8x8x128xf32>
    %cst_53 = arith.constant 0.000000e+00 : f32
    %107 = vector.broadcast %cst_53 : f32 to vector<8x8x128xf32>
    %108 = arith.cmpf oge, %106, %107 : vector<8x8x128xf32>
    %cst_54 = arith.constant 2.000000e-01 : f32
    %109 = vector.broadcast %cst_54 : f32 to vector<8x8x128xf32>
    %110 = arith.mulf %109, %106 : vector<8x8x128xf32>
    %111 = arith.select %108, %106, %110 : vector<8x8x128xi1>, vector<8x8x128xf32>
    %c0_55 = arith.constant 0 : index
    %c0_56 = arith.constant 0 : index
    %112 = vector.load %arg17[%c0_55, %c0_56] : memref<1x128xf32, #tpu.memory_space<vmem>>, vector<1x128xf32>
    %113 = vector.shape_cast %112 : vector<1x128xf32> to vector<1x1x128xf32>
    %114 = vector.broadcast %113 : vector<1x1x128xf32> to vector<8x8x128xf32>
    %115 = arith.mulf %111, %114 : vector<8x8x128xf32>
    %116 = vector.extract_strided_slice %115 {offsets = [0, 0, 0], sizes = [8, 8, 64], strides = [1, 1, 1]} : vector<8x8x128xf32> to vector<8x8x64xf32>
    %cst_57 = arith.constant dense<0.000000e+00> : vector<8x8xf32>
    %117 = vector.multi_reduction <add>, %116, %cst_57 [2] : vector<8x8x64xf32> to vector<8x8xf32>
    %cst_58 = arith.constant -1.000000e+30 : f32
    %118 = vector.broadcast %cst_58 : f32 to vector<8x8xf32>
    %119 = arith.select %7, %117, %118 : vector<8x8xi1>, vector<8x8xf32>
    %cst_59 = arith.constant dense<0xFF800000> : vector<8xf32>
    %120 = vector.multi_reduction <maximumf>, %119, %cst_59 [1] : vector<8x8xf32> to vector<8xf32>
    %121 = vector.shape_cast %120 : vector<8xf32> to vector<8x1xf32>
    %122 = vector.broadcast %121 : vector<8x1xf32> to vector<8x8xf32>
    %123 = arith.subf %119, %122 : vector<8x8xf32>
    %124 = math.exp %123 : vector<8x8xf32>
    %cst_60 = arith.constant 0.000000e+00 : f32
    %125 = vector.broadcast %cst_60 : f32 to vector<8x8xf32>
    %126 = arith.select %7, %124, %125 : vector<8x8xi1>, vector<8x8xf32>
    %cst_61 = arith.constant dense<0.000000e+00> : vector<8xf32>
    %127 = vector.multi_reduction <add>, %126, %cst_61 [1] : vector<8x8xf32> to vector<8xf32>
    %128 = vector.shape_cast %127 : vector<8xf32> to vector<8x1xf32>
    %cst_62 = arith.constant 1.000000e-30 : f32
    %129 = vector.broadcast %cst_62 : f32 to vector<8x1xf32>
    %130 = arith.maximumf %128, %129 : vector<8x1xf32>
    %131 = tpu.reciprocal %130 {approx = true} : vector<8x1xf32> -> vector<8x1xf32>
    %132 = vector.broadcast %131 : vector<8x1xf32> to vector<8x8xf32>
    %133 = arith.mulf %126, %132 : vector<8x8xf32>
    %134 = vector.extract_strided_slice %89 {offsets = [0, 0], sizes = [8, 64], strides = [1, 1]} : vector<8x128xf32> to vector<8x64xf32>
    %cst_63 = arith.constant dense<0.000000e+00> : vector<8x64xf32>
    %135 = tpu.matmul %133, %134, %cst_63 {dimension_numbers = #tpu.dot_dimension_numbers<[1], [0], [0], [1], [0, 0, 1, 1], [], []>} : vector<8x8xf32>, vector<8x64xf32>, vector<8x64xf32> -> vector<8x64xf32>
    %136 = vector.extract_strided_slice %115 {offsets = [0, 0, 64], sizes = [8, 8, 64], strides = [1, 1, 1]} : vector<8x8x128xf32> to vector<8x8x64xf32>
    %cst_64 = arith.constant dense<0.000000e+00> : vector<8x8xf32>
    %137 = vector.multi_reduction <add>, %136, %cst_64 [2] : vector<8x8x64xf32> to vector<8x8xf32>
    %cst_65 = arith.constant -1.000000e+30 : f32
    %138 = vector.broadcast %cst_65 : f32 to vector<8x8xf32>
    %139 = arith.select %7, %137, %138 : vector<8x8xi1>, vector<8x8xf32>
    %cst_66 = arith.constant dense<0xFF800000> : vector<8xf32>
    %140 = vector.multi_reduction <maximumf>, %139, %cst_66 [1] : vector<8x8xf32> to vector<8xf32>
    %141 = vector.shape_cast %140 : vector<8xf32> to vector<8x1xf32>
    %142 = vector.broadcast %141 : vector<8x1xf32> to vector<8x8xf32>
    %143 = arith.subf %139, %142 : vector<8x8xf32>
    %144 = math.exp %143 : vector<8x8xf32>
    %cst_67 = arith.constant 0.000000e+00 : f32
    %145 = vector.broadcast %cst_67 : f32 to vector<8x8xf32>
    %146 = arith.select %7, %144, %145 : vector<8x8xi1>, vector<8x8xf32>
    %cst_68 = arith.constant dense<0.000000e+00> : vector<8xf32>
    %147 = vector.multi_reduction <add>, %146, %cst_68 [1] : vector<8x8xf32> to vector<8xf32>
    %148 = vector.shape_cast %147 : vector<8xf32> to vector<8x1xf32>
    %cst_69 = arith.constant 1.000000e-30 : f32
    %149 = vector.broadcast %cst_69 : f32 to vector<8x1xf32>
    %150 = arith.maximumf %148, %149 : vector<8x1xf32>
    %151 = tpu.reciprocal %150 {approx = true} : vector<8x1xf32> -> vector<8x1xf32>
    %152 = vector.broadcast %151 : vector<8x1xf32> to vector<8x8xf32>
    %153 = arith.mulf %146, %152 : vector<8x8xf32>
    %154 = vector.extract_strided_slice %89 {offsets = [0, 64], sizes = [8, 64], strides = [1, 1]} : vector<8x128xf32> to vector<8x64xf32>
    %cst_70 = arith.constant dense<0.000000e+00> : vector<8x64xf32>
    %155 = tpu.matmul %153, %154, %cst_70 {dimension_numbers = #tpu.dot_dimension_numbers<[1], [0], [0], [1], [0, 0, 1, 1], [], []>} : vector<8x8xf32>, vector<8x64xf32>, vector<8x64xf32> -> vector<8x64xf32>
    %156 = arith.addf %135, %155 : vector<8x64xf32>
    %cst_71 = arith.constant 5.000000e-01 : f32
    %157 = vector.broadcast %cst_71 : f32 to vector<8x64xf32>
    %158 = arith.mulf %156, %157 : vector<8x64xf32>
    %c0_72 = arith.constant 0 : index
    %c0_73 = arith.constant 0 : index
    %159 = vector.load %arg18[%c0_72, %c0_73] : memref<1x64xf32, #tpu.memory_space<vmem>>, vector<1x64xf32>
    %160 = vector.broadcast %159 : vector<1x64xf32> to vector<8x64xf32>
    %161 = arith.addf %158, %160 : vector<8x64xf32>
    %cst_74 = arith.constant 0.000000e+00 : f32
    %162 = vector.broadcast %cst_74 : f32 to vector<8x64xf32>
    %163 = arith.maximumf %161, %162 : vector<8x64xf32>
    %c0_75 = arith.constant 0 : index
    %c0_76 = arith.constant 0 : index
    %164 = vector.load %arg19[%c0_75, %c0_76] : memref<64x64xf32, #tpu.memory_space<vmem>>, vector<64x64xf32>
    %cst_77 = arith.constant dense<0.000000e+00> : vector<8x64xf32>
    %165 = tpu.matmul %163, %164, %cst_77 {dimension_numbers = #tpu.dot_dimension_numbers<[1], [0], [0], [1], [0, 0, 1, 1], [], []>} : vector<8x64xf32>, vector<64x64xf32>, vector<8x64xf32> -> vector<8x64xf32>
    %c0_78 = arith.constant 0 : index
    %c0_79 = arith.constant 0 : index
    %166 = vector.load %arg20[%c0_78, %c0_79] : memref<1x64xf32, #tpu.memory_space<vmem>>, vector<1x64xf32>
    %167 = vector.broadcast %166 : vector<1x64xf32> to vector<8x64xf32>
    %168 = arith.addf %165, %167 : vector<8x64xf32>
    %cst_80 = arith.constant dense<0xFF800000> : vector<64xf32>
    %169 = vector.multi_reduction <maximumf>, %168, %cst_80 [0] : vector<8x64xf32> to vector<64xf32>
    %170 = vector.shape_cast %169 : vector<64xf32> to vector<1x64xf32>
    %171 = vector.broadcast %170 : vector<1x64xf32> to vector<8x64xf32>
    %172 = arith.subf %168, %171 : vector<8x64xf32>
    %173 = math.exp %172 : vector<8x64xf32>
    %cst_81 = arith.constant dense<0.000000e+00> : vector<64xf32>
    %174 = vector.multi_reduction <add>, %173, %cst_81 [0] : vector<8x64xf32> to vector<64xf32>
    %175 = vector.shape_cast %174 : vector<64xf32> to vector<1x64xf32>
    %cst_82 = arith.constant 1.000000e-30 : f32
    %176 = vector.broadcast %cst_82 : f32 to vector<1x64xf32>
    %177 = arith.maximumf %175, %176 : vector<1x64xf32>
    %178 = tpu.reciprocal %177 {approx = true} : vector<1x64xf32> -> vector<1x64xf32>
    %179 = vector.broadcast %178 : vector<1x64xf32> to vector<8x64xf32>
    %180 = arith.mulf %173, %179 : vector<8x64xf32>
    %181 = arith.mulf %180, %163 : vector<8x64xf32>
    %cst_83 = arith.constant dense<0.000000e+00> : vector<64xf32>
    %182 = vector.multi_reduction <add>, %181, %cst_83 [0] : vector<8x64xf32> to vector<64xf32>
    %183 = vector.shape_cast %182 : vector<64xf32> to vector<1x64xf32>
    %c0_84 = arith.constant 0 : index
    %c0_85 = arith.constant 0 : index
    %184 = vector.load %arg21[%c0_84, %c0_85] : memref<64x128xf32, #tpu.memory_space<vmem>>, vector<64x128xf32>
    %cst_86 = arith.constant dense<0.000000e+00> : vector<1x128xf32>
    %185 = tpu.matmul %183, %184, %cst_86 {dimension_numbers = #tpu.dot_dimension_numbers<[1], [0], [0], [1], [0, 0, 1, 1], [], []>} : vector<1x64xf32>, vector<64x128xf32>, vector<1x128xf32> -> vector<1x128xf32>
    %c0_87 = arith.constant 0 : index
    %c0_88 = arith.constant 0 : index
    %186 = vector.load %arg22[%c0_87, %c0_88] : memref<1x128xf32, #tpu.memory_space<vmem>>, vector<1x128xf32>
    %187 = arith.addf %185, %186 : vector<1x128xf32>
    %cst_89 = arith.constant 0.000000e+00 : f32
    %188 = vector.broadcast %cst_89 : f32 to vector<1x128xf32>
    %189 = arith.maximumf %187, %188 : vector<1x128xf32>
    %c0_90 = arith.constant 0 : index
    %c0_91 = arith.constant 0 : index
    %190 = vector.load %arg23[%c0_90, %c0_91] : memref<128x64xf32, #tpu.memory_space<vmem>>, vector<128x64xf32>
    %cst_92 = arith.constant dense<0.000000e+00> : vector<1x64xf32>
    %191 = tpu.matmul %189, %190, %cst_92 {dimension_numbers = #tpu.dot_dimension_numbers<[1], [0], [0], [1], [0, 0, 1, 1], [], []>} : vector<1x128xf32>, vector<128x64xf32>, vector<1x64xf32> -> vector<1x64xf32>
    %c0_93 = arith.constant 0 : index
    %c0_94 = arith.constant 0 : index
    %192 = vector.load %arg24[%c0_93, %c0_94] : memref<1x64xf32, #tpu.memory_space<vmem>>, vector<1x64xf32>
    %193 = arith.addf %191, %192 : vector<1x64xf32>
    %c0_95 = arith.constant 0 : index
    %c0_96 = arith.constant 0 : index
    %c0_97 = arith.constant 0 : index
    %194 = vector.load %arg4[%c0_95, %c0_96, %c0_97] : memref<1x1x64xf32, #tpu.memory_space<vmem>>, vector<1x1x64xf32>
    %195 = vector.shape_cast %194 : vector<1x1x64xf32> to vector<1x64xf32>
    %c0_98 = arith.constant 0 : index
    %c0_99 = arith.constant 0 : index
    %196 = vector.load %arg25[%c0_98, %c0_99] : memref<64x256xf32, #tpu.memory_space<vmem>>, vector<64x256xf32>
    %cst_100 = arith.constant dense<0.000000e+00> : vector<1x256xf32>
    %197 = tpu.matmul %195, %196, %cst_100 {dimension_numbers = #tpu.dot_dimension_numbers<[1], [0], [0], [1], [0, 0, 1, 1], [], []>} : vector<1x64xf32>, vector<64x256xf32>, vector<1x256xf32> -> vector<1x256xf32>
    %c0_101 = arith.constant 0 : index
    %c0_102 = arith.constant 0 : index
    %198 = vector.load %arg26[%c0_101, %c0_102] : memref<1x256xf32, #tpu.memory_space<vmem>>, vector<1x256xf32>
    %199 = arith.addf %197, %198 : vector<1x256xf32>
    %cst_103 = arith.constant 0.000000e+00 : f32
    %200 = vector.broadcast %cst_103 : f32 to vector<1x256xf32>
    %201 = arith.maximumf %199, %200 : vector<1x256xf32>
    %c0_104 = arith.constant 0 : index
    %c0_105 = arith.constant 0 : index
    %202 = vector.load %arg27[%c0_104, %c0_105] : memref<256x128xf32, #tpu.memory_space<vmem>>, vector<256x128xf32>
    %cst_106 = arith.constant dense<0.000000e+00> : vector<1x128xf32>
    %203 = tpu.matmul %201, %202, %cst_106 {dimension_numbers = #tpu.dot_dimension_numbers<[1], [0], [0], [1], [0, 0, 1, 1], [], []>} : vector<1x256xf32>, vector<256x128xf32>, vector<1x128xf32> -> vector<1x128xf32>
    %c0_107 = arith.constant 0 : index
    %c0_108 = arith.constant 0 : index
    %204 = vector.load %arg28[%c0_107, %c0_108] : memref<1x128xf32, #tpu.memory_space<vmem>>, vector<1x128xf32>
    %205 = arith.addf %203, %204 : vector<1x128xf32>
    %cst_109 = arith.constant 0.000000e+00 : f32
    %206 = vector.broadcast %cst_109 : f32 to vector<1x128xf32>
    %207 = arith.maximumf %205, %206 : vector<1x128xf32>
    %c0_110 = arith.constant 0 : index
    %c0_111 = arith.constant 0 : index
    %208 = vector.load %arg29[%c0_110, %c0_111] : memref<128x64xf32, #tpu.memory_space<vmem>>, vector<128x64xf32>
    %cst_112 = arith.constant dense<0.000000e+00> : vector<1x64xf32>
    %209 = tpu.matmul %207, %208, %cst_112 {dimension_numbers = #tpu.dot_dimension_numbers<[1], [0], [0], [1], [0, 0, 1, 1], [], []>} : vector<1x128xf32>, vector<128x64xf32>, vector<1x64xf32> -> vector<1x64xf32>
    %c0_113 = arith.constant 0 : index
    %c0_114 = arith.constant 0 : index
    %210 = vector.load %arg30[%c0_113, %c0_114] : memref<1x64xf32, #tpu.memory_space<vmem>>, vector<1x64xf32>
    %211 = arith.addf %209, %210 : vector<1x64xf32>
    %cst_115 = arith.constant 0.000000e+00 : f32
    %212 = vector.broadcast %cst_115 : f32 to vector<1x64xf32>
    %213 = arith.maximumf %211, %212 : vector<1x64xf32>
    %c0_116 = arith.constant 0 : index
    %c0_117 = arith.constant 0 : index
    %214 = vector.load %arg31[%c0_116, %c0_117] : memref<64x32xf32, #tpu.memory_space<vmem>>, vector<64x32xf32>
    %cst_118 = arith.constant dense<0.000000e+00> : vector<1x32xf32>
    %215 = tpu.matmul %213, %214, %cst_118 {dimension_numbers = #tpu.dot_dimension_numbers<[1], [0], [0], [1], [0, 0, 1, 1], [], []>} : vector<1x64xf32>, vector<64x32xf32>, vector<1x32xf32> -> vector<1x32xf32>
    %c0_119 = arith.constant 0 : index
    %c0_120 = arith.constant 0 : index
    %216 = vector.load %arg32[%c0_119, %c0_120] : memref<1x32xf32, #tpu.memory_space<vmem>>, vector<1x32xf32>
    %217 = arith.addf %215, %216 : vector<1x32xf32>
    %c0_121 = arith.constant 0 : index
    %c0_122 = arith.constant 0 : index
    %218 = vector.load %arg33[%c0_121, %c0_122] : memref<64x128xf32, #tpu.memory_space<vmem>>, vector<64x128xf32>
    %cst_123 = arith.constant dense<0.000000e+00> : vector<1x128xf32>
    %219 = tpu.matmul %193, %218, %cst_123 {dimension_numbers = #tpu.dot_dimension_numbers<[1], [0], [0], [1], [0, 0, 1, 1], [], []>} : vector<1x64xf32>, vector<64x128xf32>, vector<1x128xf32> -> vector<1x128xf32>
    %c0_124 = arith.constant 0 : index
    %c0_125 = arith.constant 0 : index
    %220 = vector.load %arg34[%c0_124, %c0_125] : memref<32x128xf32, #tpu.memory_space<vmem>>, vector<32x128xf32>
    %cst_126 = arith.constant dense<0.000000e+00> : vector<1x128xf32>
    %221 = tpu.matmul %217, %220, %cst_126 {dimension_numbers = #tpu.dot_dimension_numbers<[1], [0], [0], [1], [0, 0, 1, 1], [], []>} : vector<1x32xf32>, vector<32x128xf32>, vector<1x128xf32> -> vector<1x128xf32>
    %222 = arith.addf %219, %221 : vector<1x128xf32>
    %c0_127 = arith.constant 0 : index
    %c0_128 = arith.constant 0 : index
    %223 = vector.load %arg35[%c0_127, %c0_128] : memref<1x128xf32, #tpu.memory_space<vmem>>, vector<1x128xf32>
    %224 = arith.addf %222, %223 : vector<1x128xf32>
    %cst_129 = arith.constant 0.000000e+00 : f32
    %225 = vector.broadcast %cst_129 : f32 to vector<1x128xf32>
    %226 = arith.maximumf %224, %225 : vector<1x128xf32>
    %c0_130 = arith.constant 0 : index
    %c0_131 = arith.constant 0 : index
    %227 = vector.load %arg36[%c0_130, %c0_131] : memref<128x4xf32, #tpu.memory_space<vmem>>, vector<128x4xf32>
    %cst_132 = arith.constant dense<0.000000e+00> : vector<1x4xf32>
    %228 = tpu.matmul %226, %227, %cst_132 {dimension_numbers = #tpu.dot_dimension_numbers<[1], [0], [0], [1], [0, 0, 1, 1], [], []>} : vector<1x128xf32>, vector<128x4xf32>, vector<1x4xf32> -> vector<1x4xf32>
    %c0_133 = arith.constant 0 : index
    %c0_134 = arith.constant 0 : index
    %229 = vector.load %arg37[%c0_133, %c0_134] : memref<1x4xf32, #tpu.memory_space<vmem>>, vector<1x4xf32>
    %230 = arith.addf %228, %229 : vector<1x4xf32>
    %c0_135 = arith.constant 0 : index
    %c0_136 = arith.constant 0 : index
    %c0_137 = arith.constant 0 : index
    %231 = vector.load %arg38[%c0_135, %c0_136, %c0_137] : memref<1x1x4xf32, #tpu.memory_space<vmem>>, vector<1x1x4xf32>
    %232 = vector.shape_cast %231 : vector<1x1x4xf32> to vector<1x4xf32>
    %233 = vector.shape_cast %230 : vector<1x4xf32> to vector<1x1x4xf32>
    tpu.vector_store %arg38[%c0_135, %c0_136, %c0_137], %233 {strides = array<i32>} : memref<1x1x4xf32, #tpu.memory_space<vmem>>, vector<1x1x4xf32>,
    return
  }
  func.func @transform_0(%arg0: i32) -> (i32, i32, i32) {
    %c0_i32 = arith.constant 0 : i32
    %c0_i32_0 = arith.constant 0 : i32
    %c0_i32_1 = arith.constant 0 : i32
    return %arg0, %c0_i32, %c0_i32_0 : i32, i32, i32
  }
  func.func @transform_1(%arg0: i32) -> (i32, i32, i32) {
    %c0_i32 = arith.constant 0 : i32
    %c0_i32_0 = arith.constant 0 : i32
    %c0_i32_1 = arith.constant 0 : i32
    return %arg0, %c0_i32, %c0_i32_0 : i32, i32, i32
  }
  func.func @transform_2(%arg0: i32) -> (i32, i32, i32) {
    %c0_i32 = arith.constant 0 : i32
    %c0_i32_0 = arith.constant 0 : i32
    %c0_i32_1 = arith.constant 0 : i32
    return %arg0, %c0_i32, %c0_i32_0 : i32, i32, i32
  }
  func.func @transform_3(%arg0: i32) -> (i32, i32, i32) {
    %c0_i32 = arith.constant 0 : i32
    %c0_i32_0 = arith.constant 0 : i32
    %c0_i32_1 = arith.constant 0 : i32
    return %arg0, %c0_i32, %c0_i32_0 : i32, i32, i32
  }
  func.func @transform_4(%arg0: i32) -> (i32, i32) {
    %c0_i32 = arith.constant 0 : i32
    %c0_i32_0 = arith.constant 0 : i32
    %c0_i32_1 = arith.constant 0 : i32
    return %c0_i32, %c0_i32_0 : i32, i32
  }
  func.func @transform_5(%arg0: i32) -> (i32, i32) {
    %c0_i32 = arith.constant 0 : i32
    %c0_i32_0 = arith.constant 0 : i32
    %c0_i32_1 = arith.constant 0 : i32
    return %c0_i32, %c0_i32_0 : i32, i32
  }
  func.func @transform_6(%arg0: i32) -> (i32, i32) {
    %c0_i32 = arith.constant 0 : i32
    %c0_i32_0 = arith.constant 0 : i32
    %c0_i32_1 = arith.constant 0 : i32
    return %c0_i32, %c0_i32_0 : i32, i32
  }
  func.func @transform_7(%arg0: i32) -> (i32, i32) {
    %c0_i32 = arith.constant 0 : i32
    %c0_i32_0 = arith.constant 0 : i32
    %c0_i32_1 = arith.constant 0 : i32
    return %c0_i32, %c0_i32_0 : i32, i32
  }
  func.func @transform_8(%arg0: i32) -> (i32, i32) {
    %c0_i32 = arith.constant 0 : i32
    %c0_i32_0 = arith.constant 0 : i32
    %c0_i32_1 = arith.constant 0 : i32
    return %c0_i32, %c0_i32_0 : i32, i32
  }
  func.func @transform_9(%arg0: i32) -> (i32, i32) {
    %c0_i32 = arith.constant 0 : i32
    %c0_i32_0 = arith.constant 0 : i32
    %c0_i32_1 = arith.constant 0 : i32
    return %c0_i32, %c0_i32_0 : i32, i32
  }
  func.func @transform_10(%arg0: i32) -> (i32, i32) {
    %c0_i32 = arith.constant 0 : i32
    %c0_i32_0 = arith.constant 0 : i32
    %c0_i32_1 = arith.constant 0 : i32
    return %c0_i32, %c0_i32_0 : i32, i32
  }
  func.func @transform_11(%arg0: i32) -> (i32, i32) {
    %c0_i32 = arith.constant 0 : i32
    %c0_i32_0 = arith.constant 0 : i32
    %c0_i32_1 = arith.constant 0 : i32
    return %c0_i32, %c0_i32_0 : i32, i32
  }
  func.func @transform_12(%arg0: i32) -> (i32, i32) {
    %c0_i32 = arith.constant 0 : i32
    %c0_i32_0 = arith.constant 0 : i32
    %c0_i32_1 = arith.constant 0 : i32
    return %c0_i32, %c0_i32_0 : i32, i32
  }
  func.func @transform_13(%arg0: i32) -> (i32, i32) {
    %c0_i32 = arith.constant 0 : i32
    %c0_i32_0 = arith.constant 0 : i32
    %c0_i32_1 = arith.constant 0 : i32
    return %c0_i32, %c0_i32_0 : i32, i32
  }
  func.func @transform_14(%arg0: i32) -> (i32, i32) {
    %c0_i32 = arith.constant 0 : i32
    %c0_i32_0 = arith.constant 0 : i32
    %c0_i32_1 = arith.constant 0 : i32
    return %c0_i32, %c0_i32_0 : i32, i32
  }
  func.func @transform_15(%arg0: i32) -> (i32, i32) {
    %c0_i32 = arith.constant 0 : i32
    %c0_i32_0 = arith.constant 0 : i32
    %c0_i32_1 = arith.constant 0 : i32
    return %c0_i32, %c0_i32_0 : i32, i32
  }
  func.func @transform_16(%arg0: i32) -> (i32, i32) {
    %c0_i32 = arith.constant 0 : i32
    %c0_i32_0 = arith.constant 0 : i32
    %c0_i32_1 = arith.constant 0 : i32
    return %c0_i32, %c0_i32_0 : i32, i32
  }
  func.func @transform_17(%arg0: i32) -> (i32, i32) {
    %c0_i32 = arith.constant 0 : i32
    %c0_i32_0 = arith.constant 0 : i32
    %c0_i32_1 = arith.constant 0 : i32
    return %c0_i32, %c0_i32_0 : i32, i32
  }
  func.func @transform_18(%arg0: i32) -> (i32, i32) {
    %c0_i32 = arith.constant 0 : i32
    %c0_i32_0 = arith.constant 0 : i32
    %c0_i32_1 = arith.constant 0 : i32
    return %c0_i32, %c0_i32_0 : i32, i32
  }
  func.func @transform_19(%arg0: i32) -> (i32, i32) {
    %c0_i32 = arith.constant 0 : i32
    %c0_i32_0 = arith.constant 0 : i32
    %c0_i32_1 = arith.constant 0 : i32
    return %c0_i32, %c0_i32_0 : i32, i32
  }
  func.func @transform_20(%arg0: i32) -> (i32, i32) {
    %c0_i32 = arith.constant 0 : i32
    %c0_i32_0 = arith.constant 0 : i32
    %c0_i32_1 = arith.constant 0 : i32
    return %c0_i32, %c0_i32_0 : i32, i32
  }
  func.func @transform_21(%arg0: i32) -> (i32, i32) {
    %c0_i32 = arith.constant 0 : i32
    %c0_i32_0 = arith.constant 0 : i32
    %c0_i32_1 = arith.constant 0 : i32
    return %c0_i32, %c0_i32_0 : i32, i32
  }
  func.func @transform_22(%arg0: i32) -> (i32, i32) {
    %c0_i32 = arith.constant 0 : i32
    %c0_i32_0 = arith.constant 0 : i32
    %c0_i32_1 = arith.constant 0 : i32
    return %c0_i32, %c0_i32_0 : i32, i32
  }
  func.func @transform_23(%arg0: i32) -> (i32, i32) {
    %c0_i32 = arith.constant 0 : i32
    %c0_i32_0 = arith.constant 0 : i32
    %c0_i32_1 = arith.constant 0 : i32
    return %c0_i32, %c0_i32_0 : i32, i32
  }
  func.func @transform_24(%arg0: i32) -> (i32, i32) {
    %c0_i32 = arith.constant 0 : i32
    %c0_i32_0 = arith.constant 0 : i32
    %c0_i32_1 = arith.constant 0 : i32
    return %c0_i32, %c0_i32_0 : i32, i32
  }
  func.func @transform_25(%arg0: i32) -> (i32, i32) {
    %c0_i32 = arith.constant 0 : i32
    %c0_i32_0 = arith.constant 0 : i32
    %c0_i32_1 = arith.constant 0 : i32
    return %c0_i32, %c0_i32_0 : i32, i32
  }
  func.func @transform_26(%arg0: i32) -> (i32, i32) {
    %c0_i32 = arith.constant 0 : i32
    %c0_i32_0 = arith.constant 0 : i32
    %c0_i32_1 = arith.constant 0 : i32
    return %c0_i32, %c0_i32_0 : i32, i32
  }
  func.func @transform_27(%arg0: i32) -> (i32, i32) {
    %c0_i32 = arith.constant 0 : i32
    %c0_i32_0 = arith.constant 0 : i32
    %c0_i32_1 = arith.constant 0 : i32
    return %c0_i32, %c0_i32_0 : i32, i32
  }
  func.func @transform_28(%arg0: i32) -> (i32, i32) {
    %c0_i32 = arith.constant 0 : i32
    %c0_i32_0 = arith.constant 0 : i32
    %c0_i32_1 = arith.constant 0 : i32
    return %c0_i32, %c0_i32_0 : i32, i32
  }
  func.func @transform_29(%arg0: i32) -> (i32, i32) {
    %c0_i32 = arith.constant 0 : i32
    %c0_i32_0 = arith.constant 0 : i32
    %c0_i32_1 = arith.constant 0 : i32
    return %c0_i32, %c0_i32_0 : i32, i32
  }
  func.func @transform_30(%arg0: i32) -> (i32, i32) {
    %c0_i32 = arith.constant 0 : i32
    %c0_i32_0 = arith.constant 0 : i32
    %c0_i32_1 = arith.constant 0 : i32
    return %c0_i32, %c0_i32_0 : i32, i32
  }
  func.func @transform_31(%arg0: i32) -> (i32, i32) {
    %c0_i32 = arith.constant 0 : i32
    %c0_i32_0 = arith.constant 0 : i32
    %c0_i32_1 = arith.constant 0 : i32
    return %c0_i32, %c0_i32_0 : i32, i32
  }
  func.func @transform_32(%arg0: i32) -> (i32, i32) {
    %c0_i32 = arith.constant 0 : i32
    %c0_i32_0 = arith.constant 0 : i32
    %c0_i32_1 = arith.constant 0 : i32
    return %c0_i32, %c0_i32_0 : i32, i32
  }
  func.func @transform_33(%arg0: i32) -> (i32, i32) {
    %c0_i32 = arith.constant 0 : i32
    %c0_i32_0 = arith.constant 0 : i32
    %c0_i32_1 = arith.constant 0 : i32
    return %c0_i32, %c0_i32_0 : i32, i32
  }
  func.func @transform_34(%arg0: i32) -> (i32, i32) {
    %c0_i32 = arith.constant 0 : i32
    %c0_i32_0 = arith.constant 0 : i32
    %c0_i32_1 = arith.constant 0 : i32
    return %c0_i32, %c0_i32_0 : i32, i32
  }
  func.func @transform_35(%arg0: i32) -> (i32, i32) {
    %c0_i32 = arith.constant 0 : i32
    %c0_i32_0 = arith.constant 0 : i32
    %c0_i32_1 = arith.constant 0 : i32
    return %c0_i32, %c0_i32_0 : i32, i32
  }
  func.func @transform_36(%arg0: i32) -> (i32, i32) {
    %c0_i32 = arith.constant 0 : i32
    %c0_i32_0 = arith.constant 0 : i32
    %c0_i32_1 = arith.constant 0 : i32
    return %c0_i32, %c0_i32_0 : i32, i32
  }
  func.func @transform_37(%arg0: i32) -> (i32, i32, i32) {
    %c0_i32 = arith.constant 0 : i32
    %c0_i32_0 = arith.constant 0 : i32
    %c0_i32_1 = arith.constant 0 : i32
    return %arg0, %c0_i32, %c0_i32_0 : i32, i32, i32
  }
}

</mosaic_0001>

<llo_original>
// kernel: dqn_forward.1
$region0: #{dqn_forward.1}
  #allocation0 [shape = 'u32[]', space=smem, size = 0x4, offset = 0x4, fixed_abs, tag = 'smem constant byte address 0x4 - core index']
  #allocation1 [shape = 'u32[72,128]{1,0:T(1,128)}', space=vmem, size = 0x9000, scoped, tag = 'internal scratch']
  %s0 = inlined_call_operand.smem [shape: u32[38], index: -1, kind: input, shape index: {}]
  %s1 = sld [smem:[%s0]]
  %s2 = scalar_lea.smem %s0, 1
  %s3 = sld [smem:[%s2]]
  %s4 = scalar_lea.smem %s0, 2
  %s5 = sld [smem:[%s4]]
  %s6 = scalar_lea.smem %s0, 3
  %s7 = sld [smem:[%s6]]
  %s8 = scalar_lea.smem %s0, 4
  %s9 = sld [smem:[%s8]]
  %s10 = scalar_lea.smem %s0, 5
  %s11 = sld [smem:[%s10]]
  %s12 = scalar_lea.smem %s0, 6
  %s13 = sld [smem:[%s12]]
  %s14 = scalar_lea.smem %s0, 7
  %s15 = sld [smem:[%s14]]
  %s16 = scalar_lea.smem %s0, 8
  %s17 = sld [smem:[%s16]]
  %s18 = scalar_lea.smem %s0, 9
  %s19 = sld [smem:[%s18]]
  %s20 = scalar_lea.smem %s0, 10
  %s21 = sld [smem:[%s20]]
  %s22 = scalar_lea.smem %s0, 11
  %s23 = sld [smem:[%s22]]
  %s24 = scalar_lea.smem %s0, 12
  %s25 = sld [smem:[%s24]]
  %s26 = scalar_lea.smem %s0, 13
  %s27 = sld [smem:[%s26]]
  %s28 = scalar_lea.smem %s0, 14
  %s29 = sld [smem:[%s28]]
  %s30 = scalar_lea.smem %s0, 15
  %s31 = sld [smem:[%s30]]
  %s32 = scalar_lea.smem %s0, 16
  %s33 = sld [smem:[%s32]]
  %s34 = scalar_lea.smem %s0, 17
  %s35 = sld [smem:[%s34]]
  %s36 = scalar_lea.smem %s0, 18
  %s37 = sld [smem:[%s36]]
  %s38 = scalar_lea.smem %s0, 19
  %s39 = sld [smem:[%s38]]
  %s40 = scalar_lea.smem %s0, 20
  %s41 = sld [smem:[%s40]]
  %s42 = scalar_lea.smem %s0, 21
  %s43 = sld [smem:[%s42]]
  %s44 = scalar_lea.smem %s0, 22
  %s45 = sld [smem:[%s44]]
  %s46 = scalar_lea.smem %s0, 23
  %s47 = sld [smem:[%s46]]
  %s48 = scalar_lea.smem %s0, 24
  %s49 = sld [smem:[%s48]]
  %s50 = scalar_lea.smem %s0, 25
  %s51 = sld [smem:[%s50]]
  %s52 = scalar_lea.smem %s0, 26
  %s53 = sld [smem:[%s52]]
  %s54 = scalar_lea.smem %s0, 27
  %s55 = sld [smem:[%s54]]
  %s56 = scalar_lea.smem %s0, 28
  %s57 = sld [smem:[%s56]]
  %s58 = scalar_lea.smem %s0, 29
  %s59 = sld [smem:[%s58]]
  %s60 = scalar_lea.smem %s0, 30
  %s61 = sld [smem:[%s60]]
  %s62 = scalar_lea.smem %s0, 31
  %s63 = sld [smem:[%s62]]
  %s64 = scalar_lea.smem %s0, 32
  %s65 = sld [smem:[%s64]]
  %s66 = scalar_lea.smem %s0, 33
  %s67 = sld [smem:[%s66]]
  %s68 = scalar_lea.smem %s0, 34
  %s69 = sld [smem:[%s68]]
  %s70 = scalar_lea.smem %s0, 35
  %s71 = sld [smem:[%s70]]
  %s72 = scalar_lea.smem %s0, 36
  %s73 = sld [smem:[%s72]]
  %s74 = scalar_lea.smem %s0, 37
  %s75 = sld [smem:[%s74]]
  %s76 = sld [smem:[#allocation0]]
  $region217: #{dqn_forward.1} parent=0
    _
  %s78 = ssub.s32 1, %s76
  %s79 = scalar_select 0, %s78, %s76
  $region1: #{dqn_forward.1} parent=0
    #allocation2 [shape = 'u8[8192]{0}', space=vmem, size = 0x2000, scoped, tag = 'input window, operand 1']
    #allocation3 [shape = 's32[2]{0}', space=sflag, size = 0x8, scoped, tag = 'scoped memory for dqn_forward.1']
    #allocation4 [shape = 's32[2]{0}', space=sflag, size = 0x8, scoped, tag = 'scoped memory for dqn_forward.1']
    #allocation5 [shape = 'u8[8192]{0}', space=vmem, size = 0x2000, scoped, tag = 'input window, operand 2']
    #allocation6 [shape = 's32[2]{0}', space=sflag, size = 0x8, scoped, tag = 'scoped memory for dqn_forward.1']
    #allocation7 [shape = 'u8[32768]{0}', space=vmem, size = 0x8000, scoped, tag = 'input window, operand 18, single buffered']
    #allocation8 [shape = 'u8[32768]{0}', space=vmem, size = 0x8000, scoped, tag = 'input window, operand 20, single buffered']
    #allocation9 [shape = 's32[1]{0}', space=sflag, size = 0x4, scoped, tag = 'scoped memory for dqn_forward.1']
    #allocation10 [shape = 'u8[512]{0}', space=vmem, size = 0x400, scoped, tag = 'input window, operand 27, single buffered']
    #allocation11 [shape = 'u8[512]{0}', space=vmem, size = 0x400, scoped, tag = 'input window, operand 29, single buffered']
    #allocation12 [shape = 's32[1]{0}', space=sflag, size = 0x4, scoped, tag = 'scoped memory for dqn_forward.1']
    #allocation13 [shape = 'u8[512]{0}', space=vmem, size = 0x400, scoped, tag = 'input window, operand 31, single buffered']
    #allocation14 [shape = 'u8[32768]{0}', space=vmem, size = 0x8000, scoped, tag = 'input window, operand 32, single buffered']
    #allocation15 [shape = 's32[1]{0}', space=sflag, size = 0x4, scoped, tag = 'scoped memory for dqn_forward.1']
    #allocation16 [shape = 'u8[16384]{0}', space=vmem, size = 0x4000, scoped, tag = 'input window, operand 33, single buffered']
    #allocation17 [shape = 'u8[1024]{0}', space=vmem, size = 0x400, scoped, tag = 'output window, operand 0']
    %80 = vsyncpa [#allocation3], 0
    %s81 = scalar_lea.sflag [#allocation3], 1
    %82 = vsyncpa %s81, 0
    %83 = vsyncpa [#allocation6], 0
    %s84 = scalar_lea.sflag [#allocation6], 1
    %85 = vsyncpa %s84, 0
    %86 = vsyncpa [#allocation9], 0
    %87 = vsyncpa [#allocation12], 0
    %88 = vsyncpa [#allocation15], 0
    %89 = vsyncpa [#allocation4], 0
    %s90 = scalar_lea.sflag [#allocation4], 1
    %91 = vsyncpa %s90, 0
    loop: start=0, step=1, limit=4
    $region2: #{dqn_forward.1} parent=1 // loop_pre_header
      _
    $region3: #{dqn_forward.1} parent=1 // loop_header
      %s93 = sphi 0, %s97
      %p94 = scmp.ge.s32.totalorder %s93, 4
      %s103 = sphi 0, %s105
      %s106 = sphi 0, %s103
      %s107 = sphi 0, %s106
      %s123 = sphi 0, %s107
      %s129 = sphi 0, %s131
      %s132 = sphi 0, %s129
      %s133 = sphi 0, %s132
      %s149 = sphi 0, %s133
      %s155 = sphi 0, %s157
      %s158 = sphi 0, %s155
      %s159 = sphi 0, %s158
      %s175 = sphi 0, %s159
      %s181 = sphi 0, %s183
      %s184 = sphi 0, %s181
      %s185 = sphi 0, %s184
      %s201 = sphi 0, %s185
      %s205 = sphi 0, %s205
      %s207 = sphi 0, %s205
      %s208 = sphi 0, %s207
      %s222 = sphi 0, %s208
      %s226 = sphi 0, %s226
      %s228 = sphi 0, %s226
      %s229 = sphi 0, %s228
      %s243 = sphi 0, %s229
      %s247 = sphi 0, %s247
      %s249 = sphi 0, %s247
      %s250 = sphi 0, %s249
      %s264 = sphi 0, %s250
      %s268 = sphi 0, %s268
      %s270 = sphi 0, %s268
      %s271 = sphi 0, %s270
      %s285 = sphi 0, %s271
      %s289 = sphi 0, %s289
      %s291 = sphi 0, %s289
      %s292 = sphi 0, %s291
      %s306 = sphi 0, %s292
      %s310 = sphi 0, %s310
      %s312 = sphi 0, %s310
      %s313 = sphi 0, %s312
      %s327 = sphi 0, %s313
      %s331 = sphi 0, %s331
      %s333 = sphi 0, %s331
      %s334 = sphi 0, %s333
      %s348 = sphi 0, %s334
      %s352 = sphi 0, %s352
      %s354 = sphi 0, %s352
      %s355 = sphi 0, %s354
      %s369 = sphi 0, %s355
      %s373 = sphi 0, %s373
      %s375 = sphi 0, %s373
      %s376 = sphi 0, %s375
      %s390 = sphi 0, %s376
      %s394 = sphi 0, %s394
      %s396 = sphi 0, %s394
      %s397 = sphi 0, %s396
      %s411 = sphi 0, %s397
      %s415 = sphi 0, %s415
      %s417 = sphi 0, %s415
      %s418 = sphi 0, %s417
      %s432 = sphi 0, %s418
      %s436 = sphi 0, %s436
      %s438 = sphi 0, %s436
      %s439 = sphi 0, %s438
      %s453 = sphi 0, %s439
      %s457 = sphi 0, %s457
      %s459 = sphi 0, %s457
      %s460 = sphi 0, %s459
      %s474 = sphi 0, %s460
      %s478 = sphi 0, %s478
      %s480 = sphi 0, %s478
      %s481 = sphi 0, %s480
      %s495 = sphi 0, %s481
      %s499 = sphi 0, %s499
      %s501 = sphi 0, %s499
      %s502 = sphi 0, %s501
      %s516 = sphi 0, %s502
      %s520 = sphi 0, %s520
      %s522 = sphi 0, %s520
      %s523 = sphi 0, %s522
      %s537 = sphi 0, %s523
      %s541 = sphi 0, %s541
      %s543 = sphi 0, %s541
      %s544 = sphi 0, %s543
      %s558 = sphi 0, %s544
      %s562 = sphi 0, %s562
      %s564 = sphi 0, %s562
      %s565 = sphi 0, %s564
      %s579 = sphi 0, %s565
      %s583 = sphi 0, %s583
      %s585 = sphi 0, %s583
      %s586 = sphi 0, %s585
      %s600 = sphi 0, %s586
      %s604 = sphi 0, %s604
      %s606 = sphi 0, %s604
      %s607 = sphi 0, %s606
      %s621 = sphi 0, %s607
      %s625 = sphi 0, %s625
      %s627 = sphi 0, %s625
      %s628 = sphi 0, %s627
      %s642 = sphi 0, %s628
      %s646 = sphi 0, %s646
      %s648 = sphi 0, %s646
      %s649 = sphi 0, %s648
      %s663 = sphi 0, %s649
      %s667 = sphi 0, %s667
      %s669 = sphi 0, %s667
      %s670 = sphi 0, %s669
      %s684 = sphi 0, %s670
      %s688 = sphi 0, %s688
      %s690 = sphi 0, %s688
      %s691 = sphi 0, %s690
      %s705 = sphi 0, %s691
      %s709 = sphi 0, %s709
      %s711 = sphi 0, %s709
      %s712 = sphi 0, %s711
      %s726 = sphi 0, %s712
      %s730 = sphi 0, %s730
      %s732 = sphi 0, %s730
      %s733 = sphi 0, %s732
      %s747 = sphi 0, %s733
      %s751 = sphi 0, %s751
      %s753 = sphi 0, %s751
      %s754 = sphi 0, %s753
      %s768 = sphi 0, %s754
      %s772 = sphi 0, %s772
      %s774 = sphi 0, %s772
      %s775 = sphi 0, %s774
      %s789 = sphi 0, %s775
      %s793 = sphi 0, %s793
      %s795 = sphi 0, %s793
      %s796 = sphi 0, %s795
      %s810 = sphi 0, %s796
      %s814 = sphi 0, %s814
      %s816 = sphi 0, %s814
      %s817 = sphi 0, %s816
      %s831 = sphi 0, %s817
      %s835 = sphi 0, %s835
      %s837 = sphi 0, %s835
      %s838 = sphi 0, %s837
      %s852 = sphi 0, %s838
      %s856 = sphi 0, %s856
      %s858 = sphi 0, %s856
      %s859 = sphi 0, %s858
      %s873 = sphi 0, %s859
      %s877 = sphi 0, %s877
      %s879 = sphi 0, %s877
      %s880 = sphi 0, %s879
      %s894 = sphi 0, %s880
      %s900 = sphi 0, %s902
      %s903 = sphi 0, %s900
      %s904 = sphi 0, %s903
      %s920 = sphi 0, %s904
    $region4: #{dqn_forward.1} parent=1 // loop_header_branch
      %96 = sbr.rel (%p94) target = $region8
    $region5: #{dqn_forward.1} parent=1 // loop_body
      %s98 = ssub.s32 %s93, 1
      %s99 = ssub.s32 %s93, 2
      %s100 = sadd.s32 %s93, 1
      %s101 = ssub.s32 %s93, %s100
      %p102 = scmp.eq.s32.totalorder %s101, 0
      %s104 = sadd.s32 %s103, 1
      %s105 = scalar_select %p102, %s103, %s104
      %p108 = pneg %p102
      %p109 = scmp.eq.s32.totalorder %s93, 1
      %p110 = por %p108, %p109
      %p111 = scmp.ne.s32.totalorder %s103, %s106
      %p112 = scmp.eq.s32.totalorder %s93, 0
      %p113 = por %p111, %p112
      %p114 = scmp.ne.s32.totalorder %s103, %s106
      %p115 = scmp.eq.s32.totalorder %s98, 1
      %p116 = por %p114, %p115
      %p117 = scmp.ne.s32.totalorder %s106, %s107
      %p118 = scmp.eq.s32.totalorder %s98, 0
      %p119 = por %p117, %p118
      %p120 = scmp.ne.s32.totalorder %s106, %s107
      %p121 = scmp.eq.s32.totalorder %s99, 1
      %p122 = por %p120, %p121
      %p124 = scmp.ne.s32.totalorder %s107, %s123
      %p125 = scmp.eq.s32.totalorder %s99, 0
      %p126 = por %p124, %p125
      %s127 = ssub.s32 %s93, %s100
      %p128 = scmp.eq.s32.totalorder %s127, 0
      %s130 = sadd.s32 %s129, 1
      %s131 = scalar_select %p128, %s129, %s130
      %p134 = pneg %p128
      %p135 = scmp.eq.s32.totalorder %s93, 1
      %p136 = por %p134, %p135
      %p137 = scmp.ne.s32.totalorder %s129, %s132
      %p138 = scmp.eq.s32.totalorder %s93, 0
      %p139 = por %p137, %p138
      %p140 = scmp.ne.s32.totalorder %s129, %s132
      %p141 = scmp.eq.s32.totalorder %s98, 1
      %p142 = por %p140, %p141
      %p143 = scmp.ne.s32.totalorder %s132, %s133
      %p144 = scmp.eq.s32.totalorder %s98, 0
      %p145 = por %p143, %p144
      %p146 = scmp.ne.s32.totalorder %s132, %s133
      %p147 = scmp.eq.s32.totalorder %s99, 1
      %p148 = por %p146, %p147
      %p150 = scmp.ne.s32.totalorder %s133, %s149
      %p151 = scmp.eq.s32.totalorder %s99, 0
      %p152 = por %p150, %p151
      %s153 = ssub.s32 %s93, %s100
      %p154 = scmp.eq.s32.totalorder %s153, 0
      %s156 = sadd.s32 %s155, 1
      %s157 = scalar_select %p154, %s155, %s156
      %p160 = pneg %p154
      %p161 = scmp.eq.s32.totalorder %s93, 1
      %p162 = por %p160, %p161
      %p163 = scmp.ne.s32.totalorder %s155, %s158
      %p164 = scmp.eq.s32.totalorder %s93, 0
      %p165 = por %p163, %p164
      %p166 = scmp.ne.s32.totalorder %s155, %s158
      %p167 = scmp.eq.s32.totalorder %s98, 1
      %p168 = por %p166, %p167
      %p169 = scmp.ne.s32.totalorder %s158, %s159
      %p170 = scmp.eq.s32.totalorder %s98, 0
      %p171 = por %p169, %p170
      %p172 = scmp.ne.s32.totalorder %s158, %s159
      %p173 = scmp.eq.s32.totalorder %s99, 1
      %p174 = por %p172, %p173
      %p176 = scmp.ne.s32.totalorder %s159, %s175
      %p177 = scmp.eq.s32.totalorder %s99, 0
      %p178 = por %p176, %p177
      %s179 = ssub.s32 %s93, %s100
      %p180 = scmp.eq.s32.totalorder %s179, 0
      %s182 = sadd.s32 %s181, 1
      %s183 = scalar_select %p180, %s181, %s182
      %p186 = pneg %p180
      %p187 = scmp.eq.s32.totalorder %s93, 1
      %p188 = por %p186, %p187
      %p189 = scmp.ne.s32.totalorder %s181, %s184
      %p190 = scmp.eq.s32.totalorder %s93, 0
      %p191 = por %p189, %p190
      %p192 = scmp.ne.s32.totalorder %s181, %s184
      %p193 = scmp.eq.s32.totalorder %s98, 1
      %p194 = por %p192, %p193
      %p195 = scmp.ne.s32.totalorder %s184, %s185
      %p196 = scmp.eq.s32.totalorder %s98, 0
      %p197 = por %p195, %p196
      %p198 = scmp.ne.s32.totalorder %s184, %s185
      %p199 = scmp.eq.s32.totalorder %s99, 1
      %p200 = por %p198, %p199
      %p202 = scmp.ne.s32.totalorder %s185, %s201
      %p203 = scmp.eq.s32.totalorder %s99, 0
      %p204 = por %p202, %p203
      %s206 = sadd.s32 %s205, 1
      %p209 = scmp.eq.s32.totalorder %s93, 1
      %p210 = scmp.ne.s32.totalorder %s205, %s207
      %p211 = scmp.eq.s32.totalorder %s93, 0
      %p212 = por %p210, %p211
      %p213 = scmp.ne.s32.totalorder %s205, %s207
      %p214 = scmp.eq.s32.totalorder %s98, 1
      %p215 = por %p213, %p214
      %p216 = scmp.ne.s32.totalorder %s207, %s208
      %p217 = scmp.eq.s32.totalorder %s98, 0
      %p218 = por %p216, %p217
      %p219 = scmp.ne.s32.totalorder %s207, %s208
      %p220 = scmp.eq.s32.totalorder %s99, 1
      %p221 = por %p219, %p220
      %p223 = scmp.ne.s32.totalorder %s208, %s222
      %p224 = scmp.eq.s32.totalorder %s99, 0
      %p225 = por %p223, %p224
      %s227 = sadd.s32 %s226, 1
      %p230 = scmp.eq.s32.totalorder %s93, 1
      %p231 = scmp.ne.s32.totalorder %s226, %s228
      %p232 = scmp.eq.s32.totalorder %s93, 0
      %p233 = por %p231, %p232
      %p234 = scmp.ne.s32.totalorder %s226, %s228
      %p235 = scmp.eq.s32.totalorder %s98, 1
      %p236 = por %p234, %p235
      %p237 = scmp.ne.s32.totalorder %s228, %s229
      %p238 = scmp.eq.s32.totalorder %s98, 0
      %p239 = por %p237, %p238
      %p240 = scmp.ne.s32.totalorder %s228, %s229
      %p241 = scmp.eq.s32.totalorder %s99, 1
      %p242 = por %p240, %p241
      %p244 = scmp.ne.s32.totalorder %s229, %s243
      %p245 = scmp.eq.s32.totalorder %s99, 0
      %p246 = por %p244, %p245
      %s248 = sadd.s32 %s247, 1
      %p251 = scmp.eq.s32.totalorder %s93, 1
      %p252 = scmp.ne.s32.totalorder %s247, %s249
      %p253 = scmp.eq.s32.totalorder %s93, 0
      %p254 = por %p252, %p253
      %p255 = scmp.ne.s32.totalorder %s247, %s249
      %p256 = scmp.eq.s32.totalorder %s98, 1
      %p257 = por %p255, %p256
      %p258 = scmp.ne.s32.totalorder %s249, %s250
      %p259 = scmp.eq.s32.totalorder %s98, 0
      %p260 = por %p258, %p259
      %p261 = scmp.ne.s32.totalorder %s249, %s250
      %p262 = scmp.eq.s32.totalorder %s99, 1
      %p263 = por %p261, %p262
      %p265 = scmp.ne.s32.totalorder %s250, %s264
      %p266 = scmp.eq.s32.totalorder %s99, 0
      %p267 = por %p265, %p266
      %s269 = sadd.s32 %s268, 1
      %p272 = scmp.eq.s32.totalorder %s93, 1
      %p273 = scmp.ne.s32.totalorder %s268, %s270
      %p274 = scmp.eq.s32.totalorder %s93, 0
      %p275 = por %p273, %p274
      %p276 = scmp.ne.s32.totalorder %s268, %s270
      %p277 = scmp.eq.s32.totalorder %s98, 1
      %p278 = por %p276, %p277
      %p279 = scmp.ne.s32.totalorder %s270, %s271
      %p280 = scmp.eq.s32.totalorder %s98, 0
      %p281 = por %p279, %p280
      %p282 = scmp.ne.s32.totalorder %s270, %s271
      %p283 = scmp.eq.s32.totalorder %s99, 1
      %p284 = por %p282, %p283
      %p286 = scmp.ne.s32.totalorder %s271, %s285
      %p287 = scmp.eq.s32.totalorder %s99, 0
      %p288 = por %p286, %p287
      %s290 = sadd.s32 %s289, 1
      %p293 = scmp.eq.s32.totalorder %s93, 1
      %p294 = scmp.ne.s32.totalorder %s289, %s291
      %p295 = scmp.eq.s32.totalorder %s93, 0
      %p296 = por %p294, %p295
      %p297 = scmp.ne.s32.totalorder %s289, %s291
      %p298 = scmp.eq.s32.totalorder %s98, 1
      %p299 = por %p297, %p298
      %p300 = scmp.ne.s32.totalorder %s291, %s292
      %p301 = scmp.eq.s32.totalorder %s98, 0
      %p302 = por %p300, %p301
      %p303 = scmp.ne.s32.totalorder %s291, %s292
      %p304 = scmp.eq.s32.totalorder %s99, 1
      %p305 = por %p303, %p304
      %p307 = scmp.ne.s32.totalorder %s292, %s306
      %p308 = scmp.eq.s32.totalorder %s99, 0
      %p309 = por %p307, %p308
      %s311 = sadd.s32 %s310, 1
      %p314 = scmp.eq.s32.totalorder %s93, 1
      %p315 = scmp.ne.s32.totalorder %s310, %s312
      %p316 = scmp.eq.s32.totalorder %s93, 0
      %p317 = por %p315, %p316
      %p318 = scmp.ne.s32.totalorder %s310, %s312
      %p319 = scmp.eq.s32.totalorder %s98, 1
      %p320 = por %p318, %p319
      %p321 = scmp.ne.s32.totalorder %s312, %s313
      %p322 = scmp.eq.s32.totalorder %s98, 0
      %p323 = por %p321, %p322
      %p324 = scmp.ne.s32.totalorder %s312, %s313
      %p325 = scmp.eq.s32.totalorder %s99, 1
      %p326 = por %p324, %p325
      %p328 = scmp.ne.s32.totalorder %s313, %s327
      %p329 = scmp.eq.s32.totalorder %s99, 0
      %p330 = por %p328, %p329
      %s332 = sadd.s32 %s331, 1
      %p335 = scmp.eq.s32.totalorder %s93, 1
      %p336 = scmp.ne.s32.totalorder %s331, %s333
      %p337 = scmp.eq.s32.totalorder %s93, 0
      %p338 = por %p336, %p337
      %p339 = scmp.ne.s32.totalorder %s331, %s333
      %p340 = scmp.eq.s32.totalorder %s98, 1
      %p341 = por %p339, %p340
      %p342 = scmp.ne.s32.totalorder %s333, %s334
      %p343 = scmp.eq.s32.totalorder %s98, 0
      %p344 = por %p342, %p343
      %p345 = scmp.ne.s32.totalorder %s333, %s334
      %p346 = scmp.eq.s32.totalorder %s99, 1
      %p347 = por %p345, %p346
      %p349 = scmp.ne.s32.totalorder %s334, %s348
      %p350 = scmp.eq.s32.totalorder %s99, 0
      %p351 = por %p349, %p350
      %s353 = sadd.s32 %s352, 1
      %p356 = scmp.eq.s32.totalorder %s93, 1
      %p357 = scmp.ne.s32.totalorder %s352, %s354
      %p358 = scmp.eq.s32.totalorder %s93, 0
      %p359 = por %p357, %p358
      %p360 = scmp.ne.s32.totalorder %s352, %s354
      %p361 = scmp.eq.s32.totalorder %s98, 1
      %p362 = por %p360, %p361
      %p363 = scmp.ne.s32.totalorder %s354, %s355
      %p364 = scmp.eq.s32.totalorder %s98, 0
      %p365 = por %p363, %p364
      %p366 = scmp.ne.s32.totalorder %s354, %s355
      %p367 = scmp.eq.s32.totalorder %s99, 1
      %p368 = por %p366, %p367
      %p370 = scmp.ne.s32.totalorder %s355, %s369
      %p371 = scmp.eq.s32.totalorder %s99, 0
      %p372 = por %p370, %p371
      %s374 = sadd.s32 %s373, 1
      %p377 = scmp.eq.s32.totalorder %s93, 1
      %p378 = scmp.ne.s32.totalorder %s373, %s375
      %p379 = scmp.eq.s32.totalorder %s93, 0
      %p380 = por %p378, %p379
      %p381 = scmp.ne.s32.totalorder %s373, %s375
      %p382 = scmp.eq.s32.totalorder %s98, 1
      %p383 = por %p381, %p382
      %p384 = scmp.ne.s32.totalorder %s375, %s376
      %p385 = scmp.eq.s32.totalorder %s98, 0
      %p386 = por %p384, %p385
      %p387 = scmp.ne.s32.totalorder %s375, %s376
      %p388 = scmp.eq.s32.totalorder %s99, 1
      %p389 = por %p387, %p388
      %p391 = scmp.ne.s32.totalorder %s376, %s390
      %p392 = scmp.eq.s32.totalorder %s99, 0
      %p393 = por %p391, %p392
      %s395 = sadd.s32 %s394, 1
      %p398 = scmp.eq.s32.totalorder %s93, 1
      %p399 = scmp.ne.s32.totalorder %s394, %s396
      %p400 = scmp.eq.s32.totalorder %s93, 0
      %p401 = por %p399, %p400
      %p402 = scmp.ne.s32.totalorder %s394, %s396
      %p403 = scmp.eq.s32.totalorder %s98, 1
      %p404 = por %p402, %p403
      %p405 = scmp.ne.s32.totalorder %s396, %s397
      %p406 = scmp.eq.s32.totalorder %s98, 0
      %p407 = por %p405, %p406
      %p408 = scmp.ne.s32.totalorder %s396, %s397
      %p409 = scmp.eq.s32.totalorder %s99, 1
      %p410 = por %p408, %p409
      %p412 = scmp.ne.s32.totalorder %s397, %s411
      %p413 = scmp.eq.s32.totalorder %s99, 0
      %p414 = por %p412, %p413
      %s416 = sadd.s32 %s415, 1
      %p419 = scmp.eq.s32.totalorder %s93, 1
      %p420 = scmp.ne.s32.totalorder %s415, %s417
      %p421 = scmp.eq.s32.totalorder %s93, 0
      %p422 = por %p420, %p421
      %p423 = scmp.ne.s32.totalorder %s415, %s417
      %p424 = scmp.eq.s32.totalorder %s98, 1
      %p425 = por %p423, %p424
      %p426 = scmp.ne.s32.totalorder %s417, %s418
      %p427 = scmp.eq.s32.totalorder %s98, 0
      %p428 = por %p426, %p427
      %p429 = scmp.ne.s32.totalorder %s417, %s418
      %p430 = scmp.eq.s32.totalorder %s99, 1
      %p431 = por %p429, %p430
      %p433 = scmp.ne.s32.totalorder %s418, %s432
      %p434 = scmp.eq.s32.totalorder %s99, 0
      %p435 = por %p433, %p434
      %s437 = sadd.s32 %s436, 1
      %p440 = scmp.eq.s32.totalorder %s93, 1
      %p441 = scmp.ne.s32.totalorder %s436, %s438
      %p442 = scmp.eq.s32.totalorder %s93, 0
      %p443 = por %p441, %p442
      %p444 = scmp.ne.s32.totalorder %s436, %s438
      %p445 = scmp.eq.s32.totalorder %s98, 1
      %p446 = por %p444, %p445
      %p447 = scmp.ne.s32.totalorder %s438, %s439
      %p448 = scmp.eq.s32.totalorder %s98, 0
      %p449 = por %p447, %p448
      %p450 = scmp.ne.s32.totalorder %s438, %s439
      %p451 = scmp.eq.s32.totalorder %s99, 1
      %p452 = por %p450, %p451
      %p454 = scmp.ne.s32.totalorder %s439, %s453
      %p455 = scmp.eq.s32.totalorder %s99, 0
      %p456 = por %p454, %p455
      %s458 = sadd.s32 %s457, 1
      %p461 = scmp.eq.s32.totalorder %s93, 1
      %p462 = scmp.ne.s32.totalorder %s457, %s459
      %p463 = scmp.eq.s32.totalorder %s93, 0
      %p464 = por %p462, %p463
      %p465 = scmp.ne.s32.totalorder %s457, %s459
      %p466 = scmp.eq.s32.totalorder %s98, 1
      %p467 = por %p465, %p466
      %p468 = scmp.ne.s32.totalorder %s459, %s460
      %p469 = scmp.eq.s32.totalorder %s98, 0
      %p470 = por %p468, %p469
      %p471 = scmp.ne.s32.totalorder %s459, %s460
      %p472 = scmp.eq.s32.totalorder %s99, 1
      %p473 = por %p471, %p472
      %p475 = scmp.ne.s32.totalorder %s460, %s474
      %p476 = scmp.eq.s32.totalorder %s99, 0
      %p477 = por %p475, %p476
      %s479 = sadd.s32 %s478, 1
      %p482 = scmp.eq.s32.totalorder %s93, 1
      %p483 = scmp.ne.s32.totalorder %s478, %s480
      %p484 = scmp.eq.s32.totalorder %s93, 0
      %p485 = por %p483, %p484
      %p486 = scmp.ne.s32.totalorder %s478, %s480
      %p487 = scmp.eq.s32.totalorder %s98, 1
      %p488 = por %p486, %p487
      %p489 = scmp.ne.s32.totalorder %s480, %s481
      %p490 = scmp.eq.s32.totalorder %s98, 0
      %p491 = por %p489, %p490
      %p492 = scmp.ne.s32.totalorder %s480, %s481
      %p493 = scmp.eq.s32.totalorder %s99, 1
      %p494 = por %p492, %p493
      %p496 = scmp.ne.s32.totalorder %s481, %s495
      %p497 = scmp.eq.s32.totalorder %s99, 0
      %p498 = por %p496, %p497
      %s500 = sadd.s32 %s499, 1
      %p503 = scmp.eq.s32.totalorder %s93, 1
      %p504 = scmp.ne.s32.totalorder %s499, %s501
      %p505 = scmp.eq.s32.totalorder %s93, 0
      %p506 = por %p504, %p505
      %p507 = scmp.ne.s32.totalorder %s499, %s501
      %p508 = scmp.eq.s32.totalorder %s98, 1
      %p509 = por %p507, %p508
      %p510 = scmp.ne.s32.totalorder %s501, %s502
      %p511 = scmp.eq.s32.totalorder %s98, 0
      %p512 = por %p510, %p511
      %p513 = scmp.ne.s32.totalorder %s501, %s502
      %p514 = scmp.eq.s32.totalorder %s99, 1
      %p515 = por %p513, %p514
      %p517 = scmp.ne.s32.totalorder %s502, %s516
      %p518 = scmp.eq.s32.totalorder %s99, 0
      %p519 = por %p517, %p518
      %s521 = sadd.s32 %s520, 1
      %p524 = scmp.eq.s32.totalorder %s93, 1
      %p525 = scmp.ne.s32.totalorder %s520, %s522
      %p526 = scmp.eq.s32.totalorder %s93, 0
      %p527 = por %p525, %p526
      %p528 = scmp.ne.s32.totalorder %s520, %s522
      %p529 = scmp.eq.s32.totalorder %s98, 1
      %p530 = por %p528, %p529
      %p531 = scmp.ne.s32.totalorder %s522, %s523
      %p532 = scmp.eq.s32.totalorder %s98, 0
      %p533 = por %p531, %p532
      %p534 = scmp.ne.s32.totalorder %s522, %s523
      %p535 = scmp.eq.s32.totalorder %s99, 1
      %p536 = por %p534, %p535
      %p538 = scmp.ne.s32.totalorder %s523, %s537
      %p539 = scmp.eq.s32.totalorder %s99, 0
      %p540 = por %p538, %p539
      %s542 = sadd.s32 %s541, 1
      %p545 = scmp.eq.s32.totalorder %s93, 1
      %p546 = scmp.ne.s32.totalorder %s541, %s543
      %p547 = scmp.eq.s32.totalorder %s93, 0
      %p548 = por %p546, %p547
      %p549 = scmp.ne.s32.totalorder %s541, %s543
      %p550 = scmp.eq.s32.totalorder %s98, 1
      %p551 = por %p549, %p550
      %p552 = scmp.ne.s32.totalorder %s543, %s544
      %p553 = scmp.eq.s32.totalorder %s98, 0
      %p554 = por %p552, %p553
      %p555 = scmp.ne.s32.totalorder %s543, %s544
      %p556 = scmp.eq.s32.totalorder %s99, 1
      %p557 = por %p555, %p556
      %p559 = scmp.ne.s32.totalorder %s544, %s558
      %p560 = scmp.eq.s32.totalorder %s99, 0
      %p561 = por %p559, %p560
      %s563 = sadd.s32 %s562, 1
      %p566 = scmp.eq.s32.totalorder %s93, 1
      %p567 = scmp.ne.s32.totalorder %s562, %s564
      %p568 = scmp.eq.s32.totalorder %s93, 0
      %p569 = por %p567, %p568
      %p570 = scmp.ne.s32.totalorder %s562, %s564
      %p571 = scmp.eq.s32.totalorder %s98, 1
      %p572 = por %p570, %p571
      %p573 = scmp.ne.s32.totalorder %s564, %s565
      %p574 = scmp.eq.s32.totalorder %s98, 0
      %p575 = por %p573, %p574
      %p576 = scmp.ne.s32.totalorder %s564, %s565
      %p577 = scmp.eq.s32.totalorder %s99, 1
      %p578 = por %p576, %p577
      %p580 = scmp.ne.s32.totalorder %s565, %s579
      %p581 = scmp.eq.s32.totalorder %s99, 0
      %p582 = por %p580, %p581
      %s584 = sadd.s32 %s583, 1
      %p587 = scmp.eq.s32.totalorder %s93, 1
      %p588 = scmp.ne.s32.totalorder %s583, %s585
      %p589 = scmp.eq.s32.totalorder %s93, 0
      %p590 = por %p588, %p589
      %p591 = scmp.ne.s32.totalorder %s583, %s585
      %p592 = scmp.eq.s32.totalorder %s98, 1
      %p593 = por %p591, %p592
      %p594 = scmp.ne.s32.totalorder %s585, %s586
      %p595 = scmp.eq.s32.totalorder %s98, 0
      %p596 = por %p594, %p595
      %p597 = scmp.ne.s32.totalorder %s585, %s586
      %p598 = scmp.eq.s32.totalorder %s99, 1
      %p599 = por %p597, %p598
      %p601 = scmp.ne.s32.totalorder %s586, %s600
      %p602 = scmp.eq.s32.totalorder %s99, 0
      %p603 = por %p601, %p602
      %s605 = sadd.s32 %s604, 1
      %p608 = scmp.eq.s32.totalorder %s93, 1
      %p609 = scmp.ne.s32.totalorder %s604, %s606
      %p610 = scmp.eq.s32.totalorder %s93, 0
      %p611 = por %p609, %p610
      %p612 = scmp.ne.s32.totalorder %s604, %s606
      %p613 = scmp.eq.s32.totalorder %s98, 1
      %p614 = por %p612, %p613
      %p615 = scmp.ne.s32.totalorder %s606, %s607
      %p616 = scmp.eq.s32.totalorder %s98, 0
      %p617 = por %p615, %p616
      %p618 = scmp.ne.s32.totalorder %s606, %s607
      %p619 = scmp.eq.s32.totalorder %s99, 1
      %p620 = por %p618, %p619
      %p622 = scmp.ne.s32.totalorder %s607, %s621
      %p623 = scmp.eq.s32.totalorder %s99, 0
      %p624 = por %p622, %p623
      %s626 = sadd.s32 %s625, 1
      %p629 = scmp.eq.s32.totalorder %s93, 1
      %p630 = scmp.ne.s32.totalorder %s625, %s627
      %p631 = scmp.eq.s32.totalorder %s93, 0
      %p632 = por %p630, %p631
      %p633 = scmp.ne.s32.totalorder %s625, %s627
      %p634 = scmp.eq.s32.totalorder %s98, 1
      %p635 = por %p633, %p634
      %p636 = scmp.ne.s32.totalorder %s627, %s628
      %p637 = scmp.eq.s32.totalorder %s98, 0
      %p638 = por %p636, %p637
      %p639 = scmp.ne.s32.totalorder %s627, %s628
      %p640 = scmp.eq.s32.totalorder %s99, 1
      %p641 = por %p639, %p640
      %p643 = scmp.ne.s32.totalorder %s628, %s642
      %p644 = scmp.eq.s32.totalorder %s99, 0
      %p645 = por %p643, %p644
      %s647 = sadd.s32 %s646, 1
      %p650 = scmp.eq.s32.totalorder %s93, 1
      %p651 = scmp.ne.s32.totalorder %s646, %s648
      %p652 = scmp.eq.s32.totalorder %s93, 0
      %p653 = por %p651, %p652
      %p654 = scmp.ne.s32.totalorder %s646, %s648
      %p655 = scmp.eq.s32.totalorder %s98, 1
      %p656 = por %p654, %p655
      %p657 = scmp.ne.s32.totalorder %s648, %s649
      %p658 = scmp.eq.s32.totalorder %s98, 0
      %p659 = por %p657, %p658
      %p660 = scmp.ne.s32.totalorder %s648, %s649
      %p661 = scmp.eq.s32.totalorder %s99, 1
      %p662 = por %p660, %p661
      %p664 = scmp.ne.s32.totalorder %s649, %s663
      %p665 = scmp.eq.s32.totalorder %s99, 0
      %p666 = por %p664, %p665
      %s668 = sadd.s32 %s667, 1
      %p671 = scmp.eq.s32.totalorder %s93, 1
      %p672 = scmp.ne.s32.totalorder %s667, %s669
      %p673 = scmp.eq.s32.totalorder %s93, 0
      %p674 = por %p672, %p673
      %p675 = scmp.ne.s32.totalorder %s667, %s669
      %p676 = scmp.eq.s32.totalorder %s98, 1
      %p677 = por %p675, %p676
      %p678 = scmp.ne.s32.totalorder %s669, %s670
      %p679 = scmp.eq.s32.totalorder %s98, 0
      %p680 = por %p678, %p679
      %p681 = scmp.ne.s32.totalorder %s669, %s670
      %p682 = scmp.eq.s32.totalorder %s99, 1
      %p683 = por %p681, %p682
      %p685 = scmp.ne.s32.totalorder %s670, %s684
      %p686 = scmp.eq.s32.totalorder %s99, 0
      %p687 = por %p685, %p686
      %s689 = sadd.s32 %s688, 1
      %p692 = scmp.eq.s32.totalorder %s93, 1
      %p693 = scmp.ne.s32.totalorder %s688, %s690
      %p694 = scmp.eq.s32.totalorder %s93, 0
      %p695 = por %p693, %p694
      %p696 = scmp.ne.s32.totalorder %s688, %s690
      %p697 = scmp.eq.s32.totalorder %s98, 1
      %p698 = por %p696, %p697
      %p699 = scmp.ne.s32.totalorder %s690, %s691
      %p700 = scmp.eq.s32.totalorder %s98, 0
      %p701 = por %p699, %p700
      %p702 = scmp.ne.s32.totalorder %s690, %s691
      %p703 = scmp.eq.s32.totalorder %s99, 1
      %p704 = por %p702, %p703
      %p706 = scmp.ne.s32.totalorder %s691, %s705
      %p707 = scmp.eq.s32.totalorder %s99, 0
      %p708 = por %p706, %p707
      %s710 = sadd.s32 %s709, 1
      %p713 = scmp.eq.s32.totalorder %s93, 1
      %p714 = scmp.ne.s32.totalorder %s709, %s711
      %p715 = scmp.eq.s32.totalorder %s93, 0
      %p716 = por %p714, %p715
      %p717 = scmp.ne.s32.totalorder %s709, %s711
      %p718 = scmp.eq.s32.totalorder %s98, 1
      %p719 = por %p717, %p718
      %p720 = scmp.ne.s32.totalorder %s711, %s712
      %p721 = scmp.eq.s32.totalorder %s98, 0
      %p722 = por %p720, %p721
      %p723 = scmp.ne.s32.totalorder %s711, %s712
      %p724 = scmp.eq.s32.totalorder %s99, 1
      %p725 = por %p723, %p724
      %p727 = scmp.ne.s32.totalorder %s712, %s726
      %p728 = scmp.eq.s32.totalorder %s99, 0
      %p729 = por %p727, %p728
      %s731 = sadd.s32 %s730, 1
      %p734 = scmp.eq.s32.totalorder %s93, 1
      %p735 = scmp.ne.s32.totalorder %s730, %s732
      %p736 = scmp.eq.s32.totalorder %s93, 0
      %p737 = por %p735, %p736
      %p738 = scmp.ne.s32.totalorder %s730, %s732
      %p739 = scmp.eq.s32.totalorder %s98, 1
      %p740 = por %p738, %p739
      %p741 = scmp.ne.s32.totalorder %s732, %s733
      %p742 = scmp.eq.s32.totalorder %s98, 0
      %p743 = por %p741, %p742
      %p744 = scmp.ne.s32.totalorder %s732, %s733
      %p745 = scmp.eq.s32.totalorder %s99, 1
      %p746 = por %p744, %p745
      %p748 = scmp.ne.s32.totalorder %s733, %s747
      %p749 = scmp.eq.s32.totalorder %s99, 0
      %p750 = por %p748, %p749
      %s752 = sadd.s32 %s751, 1
      %p755 = scmp.eq.s32.totalorder %s93, 1
      %p756 = scmp.ne.s32.totalorder %s751, %s753
      %p757 = scmp.eq.s32.totalorder %s93, 0
      %p758 = por %p756, %p757
      %p759 = scmp.ne.s32.totalorder %s751, %s753
      %p760 = scmp.eq.s32.totalorder %s98, 1
      %p761 = por %p759, %p760
      %p762 = scmp.ne.s32.totalorder %s753, %s754
      %p763 = scmp.eq.s32.totalorder %s98, 0
      %p764 = por %p762, %p763
      %p765 = scmp.ne.s32.totalorder %s753, %s754
      %p766 = scmp.eq.s32.totalorder %s99, 1
      %p767 = por %p765, %p766
      %p769 = scmp.ne.s32.totalorder %s754, %s768
      %p770 = scmp.eq.s32.totalorder %s99, 0
      %p771 = por %p769, %p770
      %s773 = sadd.s32 %s772, 1
      %p776 = scmp.eq.s32.totalorder %s93, 1
      %p777 = scmp.ne.s32.totalorder %s772, %s774
      %p778 = scmp.eq.s32.totalorder %s93, 0
      %p779 = por %p777, %p778
      %p780 = scmp.ne.s32.totalorder %s772, %s774
      %p781 = scmp.eq.s32.totalorder %s98, 1
      %p782 = por %p780, %p781
      %p783 = scmp.ne.s32.totalorder %s774, %s775
      %p784 = scmp.eq.s32.totalorder %s98, 0
      %p785 = por %p783, %p784
      %p786 = scmp.ne.s32.totalorder %s774, %s775
      %p787 = scmp.eq.s32.totalorder %s99, 1
      %p788 = por %p786, %p787
      %p790 = scmp.ne.s32.totalorder %s775, %s789
      %p791 = scmp.eq.s32.totalorder %s99, 0
      %p792 = por %p790, %p791
      %s794 = sadd.s32 %s793, 1
      %p797 = scmp.eq.s32.totalorder %s93, 1
      %p798 = scmp.ne.s32.totalorder %s793, %s795
      %p799 = scmp.eq.s32.totalorder %s93, 0
      %p800 = por %p798, %p799
      %p801 = scmp.ne.s32.totalorder %s793, %s795
      %p802 = scmp.eq.s32.totalorder %s98, 1
      %p803 = por %p801, %p802
      %p804 = scmp.ne.s32.totalorder %s795, %s796
      %p805 = scmp.eq.s32.totalorder %s98, 0
      %p806 = por %p804, %p805
      %p807 = scmp.ne.s32.totalorder %s795, %s796
      %p808 = scmp.eq.s32.totalorder %s99, 1
      %p809 = por %p807, %p808
      %p811 = scmp.ne.s32.totalorder %s796, %s810
      %p812 = scmp.eq.s32.totalorder %s99, 0
      %p813 = por %p811, %p812
      %s815 = sadd.s32 %s814, 1
      %p818 = scmp.eq.s32.totalorder %s93, 1
      %p819 = scmp.ne.s32.totalorder %s814, %s816
      %p820 = scmp.eq.s32.totalorder %s93, 0
      %p821 = por %p819, %p820
      %p822 = scmp.ne.s32.totalorder %s814, %s816
      %p823 = scmp.eq.s32.totalorder %s98, 1
      %p824 = por %p822, %p823
      %p825 = scmp.ne.s32.totalorder %s816, %s817
      %p826 = scmp.eq.s32.totalorder %s98, 0
      %p827 = por %p825, %p826
      %p828 = scmp.ne.s32.totalorder %s816, %s817
      %p829 = scmp.eq.s32.totalorder %s99, 1
      %p830 = por %p828, %p829
      %p832 = scmp.ne.s32.totalorder %s817, %s831
      %p833 = scmp.eq.s32.totalorder %s99, 0
      %p834 = por %p832, %p833
      %s836 = sadd.s32 %s835, 1
      %p839 = scmp.eq.s32.totalorder %s93, 1
      %p840 = scmp.ne.s32.totalorder %s835, %s837
      %p841 = scmp.eq.s32.totalorder %s93, 0
      %p842 = por %p840, %p841
      %p843 = scmp.ne.s32.totalorder %s835, %s837
      %p844 = scmp.eq.s32.totalorder %s98, 1
      %p845 = por %p843, %p844
      %p846 = scmp.ne.s32.totalorder %s837, %s838
      %p847 = scmp.eq.s32.totalorder %s98, 0
      %p848 = por %p846, %p847
      %p849 = scmp.ne.s32.totalorder %s837, %s838
      %p850 = scmp.eq.s32.totalorder %s99, 1
      %p851 = por %p849, %p850
      %p853 = scmp.ne.s32.totalorder %s838, %s852
      %p854 = scmp.eq.s32.totalorder %s99, 0
      %p855 = por %p853, %p854
      %s857 = sadd.s32 %s856, 1
      %p860 = scmp.eq.s32.totalorder %s93, 1
      %p861 = scmp.ne.s32.totalorder %s856, %s858
      %p862 = scmp.eq.s32.totalorder %s93, 0
      %p863 = por %p861, %p862
      %p864 = scmp.ne.s32.totalorder %s856, %s858
      %p865 = scmp.eq.s32.totalorder %s98, 1
      %p866 = por %p864, %p865
      %p867 = scmp.ne.s32.totalorder %s858, %s859
      %p868 = scmp.eq.s32.totalorder %s98, 0
      %p869 = por %p867, %p868
      %p870 = scmp.ne.s32.totalorder %s858, %s859
      %p871 = scmp.eq.s32.totalorder %s99, 1
      %p872 = por %p870, %p871
      %p874 = scmp.ne.s32.totalorder %s859, %s873
      %p875 = scmp.eq.s32.totalorder %s99, 0
      %p876 = por %p874, %p875
      %s878 = sadd.s32 %s877, 1
      %p881 = scmp.eq.s32.totalorder %s93, 1
      %p882 = scmp.ne.s32.totalorder %s877, %s879
      %p883 = scmp.eq.s32.totalorder %s93, 0
      %p884 = por %p882, %p883
      %p885 = scmp.ne.s32.totalorder %s877, %s879
      %p886 = scmp.eq.s32.totalorder %s98, 1
      %p887 = por %p885, %p886
      %p888 = scmp.ne.s32.totalorder %s879, %s880
      %p889 = scmp.eq.s32.totalorder %s98, 0
      %p890 = por %p888, %p889
      %p891 = scmp.ne.s32.totalorder %s879, %s880
      %p892 = scmp.eq.s32.totalorder %s99, 1
      %p893 = por %p891, %p892
      %p895 = scmp.ne.s32.totalorder %s880, %s894
      %p896 = scmp.eq.s32.totalorder %s99, 0
      %p897 = por %p895, %p896
      %s898 = ssub.s32 %s93, %s100
      %p899 = scmp.eq.s32.totalorder %s898, 0
      %s901 = sadd.s32 %s900, 1
      %s902 = scalar_select %p899, %s900, %s901
      %p905 = pneg %p899
      %p906 = scmp.eq.s32.totalorder %s93, 1
      %p907 = por %p905, %p906
      %p908 = scmp.ne.s32.totalorder %s900, %s903
      %p909 = scmp.eq.s32.totalorder %s93, 0
      %p910 = por %p908, %p909
      %p911 = scmp.ne.s32.totalorder %s900, %s903
      %p912 = scmp.eq.s32.totalorder %s98, 1
      %p913 = por %p911, %p912
      %p914 = scmp.ne.s32.totalorder %s903, %s904
      %p915 = scmp.eq.s32.totalorder %s98, 0
      %p916 = por %p914, %p915
      %p917 = scmp.ne.s32.totalorder %s903, %s904
      %p918 = scmp.eq.s32.totalorder %s99, 1
      %p919 = por %p917, %p918
      %p921 = scmp.ne.s32.totalorder %s904, %s920
      %p922 = scmp.eq.s32.totalorder %s99, 0
      %p923 = por %p921, %p922
      %p924 = scmp.le.s32.totalorder 1, %s93
      %p925 = scmp.lt.s32.totalorder %s93, 3
      %p926 = pnand %p924, %p925
      %p927 = pneg %p926
      // Predicated region
      $region9: #{dqn_forward.1} parent=5 // pred_check
        _
      $region10: #{dqn_forward.1} parent=5 // pred_check_branch
        %929 = sbr.rel (%p926) target = $region12
      $region11: #{dqn_forward.1} parent=5 // pred_region
        %s930 = ssub.s32 %s93, 1
        // Predicated region
        $region13: #{dqn_forward.1} parent=11 // pred_check
          %p931 = pneg %p218
        $region14: #{dqn_forward.1} parent=11 // pred_check_branch
          %933 = sbr.rel (%p931) target = $region16
        $region15: #{dqn_forward.1} parent=11 // pred_region
          _
        $region16: #{dqn_forward.1} parent=11 // pred_fallthru
          _
        // Predicated region
        $region17: #{dqn_forward.1} parent=11 // pred_check
          %p934 = pneg %p239
        $region18: #{dqn_forward.1} parent=11 // pred_check_branch
          %936 = sbr.rel (%p934) target = $region20
        $region19: #{dqn_forward.1} parent=11 // pred_region
          _
        $region20: #{dqn_forward.1} parent=11 // pred_fallthru
          _
        // Predicated region
        $region21: #{dqn_forward.1} parent=11 // pred_check
          %p937 = pneg %p260
        $region22: #{dqn_forward.1} parent=11 // pred_check_branch
          %939 = sbr.rel (%p937) target = $region24
        $region23: #{dqn_forward.1} parent=11 // pred_region
          _
        $region24: #{dqn_forward.1} parent=11 // pred_fallthru
          _
        // Predicated region
        $region25: #{dqn_forward.1} parent=11 // pred_check
          %p940 = pneg %p281
        $region26: #{dqn_forward.1} parent=11 // pred_check_branch
          %942 = sbr.rel (%p940) target = $region28
        $region27: #{dqn_forward.1} parent=11 // pred_region
          _
        $region28: #{dqn_forward.1} parent=11 // pred_fallthru
          _
        // Predicated region
        $region29: #{dqn_forward.1} parent=11 // pred_check
          %p943 = pneg %p302
        $region30: #{dqn_forward.1} parent=11 // pred_check_branch
          %945 = sbr.rel (%p943) target = $region32
        $region31: #{dqn_forward.1} parent=11 // pred_region
          _
        $region32: #{dqn_forward.1} parent=11 // pred_fallthru
          _
        // Predicated region
        $region33: #{dqn_forward.1} parent=11 // pred_check
          %p946 = pneg %p323
        $region34: #{dqn_forward.1} parent=11 // pred_check_branch
          %948 = sbr.rel (%p946) target = $region36
        $region35: #{dqn_forward.1} parent=11 // pred_region
          _
        $region36: #{dqn_forward.1} parent=11 // pred_fallthru
          _
        // Predicated region
        $region37: #{dqn_forward.1} parent=11 // pred_check
          %p949 = pneg %p344
        $region38: #{dqn_forward.1} parent=11 // pred_check_branch
          %951 = sbr.rel (%p949) target = $region40
        $region39: #{dqn_forward.1} parent=11 // pred_region
          _
        $region40: #{dqn_forward.1} parent=11 // pred_fallthru
          _
        // Predicated region
        $region41: #{dqn_forward.1} parent=11 // pred_check
          %p952 = pneg %p365
        $region42: #{dqn_forward.1} parent=11 // pred_check_branch
          %954 = sbr.rel (%p952) target = $region44
        $region43: #{dqn_forward.1} parent=11 // pred_region
          _
        $region44: #{dqn_forward.1} parent=11 // pred_fallthru
          _
        // Predicated region
        $region45: #{dqn_forward.1} parent=11 // pred_check
          %p955 = pneg %p386
        $region46: #{dqn_forward.1} parent=11 // pred_check_branch
          %957 = sbr.rel (%p955) target = $region48
        $region47: #{dqn_forward.1} parent=11 // pred_region
          _
        $region48: #{dqn_forward.1} parent=11 // pred_fallthru
          _
        // Predicated region
        $region49: #{dqn_forward.1} parent=11 // pred_check
          %p958 = pneg %p407
        $region50: #{dqn_forward.1} parent=11 // pred_check_branch
          %960 = sbr.rel (%p958) target = $region52
        $region51: #{dqn_forward.1} parent=11 // pred_region
          _
        $region52: #{dqn_forward.1} parent=11 // pred_fallthru
          _
        // Predicated region
        $region53: #{dqn_forward.1} parent=11 // pred_check
          %p961 = pneg %p428
        $region54: #{dqn_forward.1} parent=11 // pred_check_branch
          %963 = sbr.rel (%p961) target = $region56
        $region55: #{dqn_forward.1} parent=11 // pred_region
          _
        $region56: #{dqn_forward.1} parent=11 // pred_fallthru
          _
        // Predicated region
        $region57: #{dqn_forward.1} parent=11 // pred_check
          %p964 = pneg %p449
        $region58: #{dqn_forward.1} parent=11 // pred_check_branch
          %966 = sbr.rel (%p964) target = $region60
        $region59: #{dqn_forward.1} parent=11 // pred_region
          _
        $region60: #{dqn_forward.1} parent=11 // pred_fallthru
          _
        // Predicated region
        $region61: #{dqn_forward.1} parent=11 // pred_check
          %p967 = pneg %p470
        $region62: #{dqn_forward.1} parent=11 // pred_check_branch
          %969 = sbr.rel (%p967) target = $region64
        $region63: #{dqn_forward.1} parent=11 // pred_region
          _
        $region64: #{dqn_forward.1} parent=11 // pred_fallthru
          _
        // Predicated region
        $region65: #{dqn_forward.1} parent=11 // pred_check
          %p970 = pneg %p491
        $region66: #{dqn_forward.1} parent=11 // pred_check_branch
          %972 = sbr.rel (%p970) target = $region68
        $region67: #{dqn_forward.1} parent=11 // pred_region
          _
        $region68: #{dqn_forward.1} parent=11 // pred_fallthru
          _
        // Predicated region
        $region69: #{dqn_forward.1} parent=11 // pred_check
          %p973 = pneg %p512
        $region70: #{dqn_forward.1} parent=11 // pred_check_branch
          %975 = sbr.rel (%p973) target = $region72
        $region71: #{dqn_forward.1} parent=11 // pred_region
          %977 = vsyncadd [#allocation6], 0
          %s978 = sshll.u32 %s37, 4
          %s979 = int_to_ptr.hbm [resolvable:$true] %s978
          %s980 = sshll.u32 [#allocation7], 4
          %s981 = int_to_ptr.vmem [resolvable:$true] %s980
          %986 = dma.hbm_to_vmem [thread:$0]  %s979, 1024, %s981, [#allocation6], 128, 128, 8
        $region72: #{dqn_forward.1} parent=11 // pred_fallthru
          _
        // Predicated region
        $region73: #{dqn_forward.1} parent=11 // pred_check
          %p987 = pneg %p533
        $region74: #{dqn_forward.1} parent=11 // pred_check_branch
          %989 = sbr.rel (%p987) target = $region76
        $region75: #{dqn_forward.1} parent=11 // pred_region
          _
        $region76: #{dqn_forward.1} parent=11 // pred_fallthru
          _
        // Predicated region
        $region77: #{dqn_forward.1} parent=11 // pred_check
          %p990 = pneg %p554
        $region78: #{dqn_forward.1} parent=11 // pred_check_branch
          %992 = sbr.rel (%p990) target = $region80
        $region79: #{dqn_forward.1} parent=11 // pred_region
          %994 = vsyncadd [#allocation9], 0
          %s995 = sshll.u32 %s41, 4
          %s996 = int_to_ptr.hbm [resolvable:$true] %s995
          %s997 = sshll.u32 [#allocation8], 4
          %s998 = int_to_ptr.vmem [resolvable:$true] %s997
          %1003 = dma.hbm_to_vmem [thread:$0]  %s996, 1024, %s998, [#allocation9], 128, 128, 8
        $region80: #{dqn_forward.1} parent=11 // pred_fallthru
          _
        // Predicated region
        $region81: #{dqn_forward.1} parent=11 // pred_check
          %p1004 = pneg %p575
        $region82: #{dqn_forward.1} parent=11 // pred_check_branch
          %1006 = sbr.rel (%p1004) target = $region84
        $region83: #{dqn_forward.1} parent=11 // pred_region
          _
        $region84: #{dqn_forward.1} parent=11 // pred_fallthru
          _
        // Predicated region
        $region85: #{dqn_forward.1} parent=11 // pred_check
          %p1007 = pneg %p596
        $region86: #{dqn_forward.1} parent=11 // pred_check_branch
          %1009 = sbr.rel (%p1007) target = $region88
        $region87: #{dqn_forward.1} parent=11 // pred_region
          _
        $region88: #{dqn_forward.1} parent=11 // pred_fallthru
          _
        // Predicated region
        $region89: #{dqn_forward.1} parent=11 // pred_check
          %p1010 = pneg %p617
        $region90: #{dqn_forward.1} parent=11 // pred_check_branch
          %1012 = sbr.rel (%p1010) target = $region92
        $region91: #{dqn_forward.1} parent=11 // pred_region
          _
        $region92: #{dqn_forward.1} parent=11 // pred_fallthru
          _
        // Predicated region
        $region93: #{dqn_forward.1} parent=11 // pred_check
          %p1013 = pneg %p638
        $region94: #{dqn_forward.1} parent=11 // pred_check_branch
          %1015 = sbr.rel (%p1013) target = $region96
        $region95: #{dqn_forward.1} parent=11 // pred_region
          _
        $region96: #{dqn_forward.1} parent=11 // pred_fallthru
          _
        // Predicated region
        $region97: #{dqn_forward.1} parent=11 // pred_check
          %p1016 = pneg %p659
        $region98: #{dqn_forward.1} parent=11 // pred_check_branch
          %1018 = sbr.rel (%p1016) target = $region100
        $region99: #{dqn_forward.1} parent=11 // pred_region
          _
        $region100: #{dqn_forward.1} parent=11 // pred_fallthru
          _
        // Predicated region
        $region101: #{dqn_forward.1} parent=11 // pred_check
          %p1019 = pneg %p680
        $region102: #{dqn_forward.1} parent=11 // pred_check_branch
          %1021 = sbr.rel (%p1019) target = $region104
        $region103: #{dqn_forward.1} parent=11 // pred_region
          _
        $region104: #{dqn_forward.1} parent=11 // pred_fallthru
          _
        // Predicated region
        $region105: #{dqn_forward.1} parent=11 // pred_check
          %p1022 = pneg %p701
        $region106: #{dqn_forward.1} parent=11 // pred_check_branch
          %1024 = sbr.rel (%p1022) target = $region108
        $region107: #{dqn_forward.1} parent=11 // pred_region
          %1026 = vsyncadd [#allocation9], 0
          %s1028 = sshll.u32 %s55, 4
          %s1029 = int_to_ptr.hbm [resolvable:$true] %s1028
          %s1030 = sshll.u32 [#allocation10], 4
          %s1031 = int_to_ptr.vmem [resolvable:$true] %s1030
          %1033 = dma.hbm_to_vmem [thread:$0]  %s1029, 16, %s1031, [#allocation9]
        $region108: #{dqn_forward.1} parent=11 // pred_fallthru
          _
        // Predicated region
        $region109: #{dqn_forward.1} parent=11 // pred_check
          %p1034 = pneg %p722
        $region110: #{dqn_forward.1} parent=11 // pred_check_branch
          %1036 = sbr.rel (%p1034) target = $region112
        $region111: #{dqn_forward.1} parent=11 // pred_region
          _
        $region112: #{dqn_forward.1} parent=11 // pred_fallthru
          _
        // Predicated region
        $region113: #{dqn_forward.1} parent=11 // pred_check
          %p1037 = pneg %p743
        $region114: #{dqn_forward.1} parent=11 // pred_check_branch
          %1039 = sbr.rel (%p1037) target = $region116
        $region115: #{dqn_forward.1} parent=11 // pred_region
          %1041 = vsyncadd [#allocation12], 0
          %s1043 = sshll.u32 %s59, 4
          %s1044 = int_to_ptr.hbm [resolvable:$true] %s1043
          %s1045 = sshll.u32 [#allocation11], 4
          %s1046 = int_to_ptr.vmem [resolvable:$true] %s1045
          %1048 = dma.hbm_to_vmem [thread:$0]  %s1044, 16, %s1046, [#allocation12]
        $region116: #{dqn_forward.1} parent=11 // pred_fallthru
          _
        // Predicated region
        $region117: #{dqn_forward.1} parent=11 // pred_check
          %p1049 = pneg %p764
        $region118: #{dqn_forward.1} parent=11 // pred_check_branch
          %1051 = sbr.rel (%p1049) target = $region120
        $region119: #{dqn_forward.1} parent=11 // pred_region
          _
        $region120: #{dqn_forward.1} parent=11 // pred_fallthru
          _
        // Predicated region
        $region121: #{dqn_forward.1} parent=11 // pred_check
          %p1052 = pneg %p785
        $region122: #{dqn_forward.1} parent=11 // pred_check_branch
          %1054 = sbr.rel (%p1052) target = $region124
        $region123: #{dqn_forward.1} parent=11 // pred_region
          %1056 = vsyncadd [#allocation12], 0
          %s1058 = sshll.u32 %s63, 4
          %s1059 = int_to_ptr.hbm [resolvable:$true] %s1058
          %s1060 = sshll.u32 [#allocation13], 4
          %s1061 = int_to_ptr.vmem [resolvable:$true] %s1060
          %1063 = dma.hbm_to_vmem [thread:$0]  %s1059, 16, %s1061, [#allocation12]
        $region124: #{dqn_forward.1} parent=11 // pred_fallthru
          _
        // Predicated region
        $region125: #{dqn_forward.1} parent=11 // pred_check
          %p1064 = pneg %p806
        $region126: #{dqn_forward.1} parent=11 // pred_check_branch
          %1066 = sbr.rel (%p1064) target = $region128
        $region127: #{dqn_forward.1} parent=11 // pred_region
          %1068 = vsyncadd [#allocation15], 0
          %s1069 = sshll.u32 %s65, 4
          %s1070 = int_to_ptr.hbm [resolvable:$true] %s1069
          %s1071 = sshll.u32 [#allocation14], 4
          %s1072 = int_to_ptr.vmem [resolvable:$true] %s1071
          %1077 = dma.hbm_to_vmem [thread:$0]  %s1070, 1024, %s1072, [#allocation15], 128, 128, 8
        $region128: #{dqn_forward.1} parent=11 // pred_fallthru
          _
        // Predicated region
        $region129: #{dqn_forward.1} parent=11 // pred_check
          %p1078 = pneg %p827
        $region130: #{dqn_forward.1} parent=11 // pred_check_branch
          %1080 = sbr.rel (%p1078) target = $region132
        $region131: #{dqn_forward.1} parent=11 // pred_region
          %1082 = vsyncadd [#allocation15], 0
          %s1083 = sshll.u32 %s67, 4
          %s1084 = int_to_ptr.hbm [resolvable:$true] %s1083
          %s1085 = sshll.u32 [#allocation16], 4
          %s1086 = int_to_ptr.vmem [resolvable:$true] %s1085
          %1091 = dma.hbm_to_vmem [thread:$0]  %s1084, 512, %s1086, [#allocation15], 128, 128, 8
        $region132: #{dqn_forward.1} parent=11 // pred_fallthru
          _
        // Predicated region
        $region133: #{dqn_forward.1} parent=11 // pred_check
          %p1092 = pneg %p848
        $region134: #{dqn_forward.1} parent=11 // pred_check_branch
          %1094 = sbr.rel (%p1092) target = $region136
        $region135: #{dqn_forward.1} parent=11 // pred_region
          _
        $region136: #{dqn_forward.1} parent=11 // pred_fallthru
          _
        // Predicated region
        $region137: #{dqn_forward.1} parent=11 // pred_check
          %p1095 = pneg %p869
        $region138: #{dqn_forward.1} parent=11 // pred_check_branch
          %1097 = sbr.rel (%p1095) target = $region140
        $region139: #{dqn_forward.1} parent=11 // pred_region
          _
        $region140: #{dqn_forward.1} parent=11 // pred_fallthru
          _
        // Predicated region
        $region141: #{dqn_forward.1} parent=11 // pred_check
          %p1098 = pneg %p890
        $region142: #{dqn_forward.1} parent=11 // pred_check_branch
          %1100 = sbr.rel (%p1098) target = $region144
        $region143: #{dqn_forward.1} parent=11 // pred_region
          _
        $region144: #{dqn_forward.1} parent=11 // pred_fallthru
          _
      $region12: #{dqn_forward.1} parent=5 // pred_fallthru
        _
      %p1101 = scmp.lt.s32.totalorder %s93, 2
      // Predicated region
      $region145: #{dqn_forward.1} parent=5 // pred_check
        %p1102 = pneg %p1101
      $region146: #{dqn_forward.1} parent=5 // pred_check_branch
        %1104 = sbr.rel (%p1102) target = $region148
      $region147: #{dqn_forward.1} parent=5 // pred_region
        // Predicated region
        $region149: #{dqn_forward.1} parent=147 // pred_check
          %p1105 = pneg %p113
        $region150: #{dqn_forward.1} parent=147 // pred_check_branch
          %1107 = sbr.rel (%p1105) target = $region152
        $region151: #{dqn_forward.1} parent=147 // pred_region
          %p1108 = scmp.lt.s32.totalorder %s93, 1
          %s1109 = scalar_select %p1108, %s93, 1
          %s1110 = smul.addr %s1109, 8
          %s1111 = scalar_lea.vmem %s1, %s1110
        $region152: #{dqn_forward.1} parent=147 // pred_fallthru
          _
        // Predicated region
        $region153: #{dqn_forward.1} parent=147 // pred_check
          %p1112 = pneg %p139
        $region154: #{dqn_forward.1} parent=147 // pred_check_branch
          %1114 = sbr.rel (%p1112) target = $region156
        $region155: #{dqn_forward.1} parent=147 // pred_region
          %s1115 = sand.u32 %s129, 1
          %s1116 = scalar_lea.sflag [#allocation3], %s1115
          %s1117 = sand.u32 %s129, 1
          %s1118 = smul.addr %s1117, 8
          %s1119 = scalar_lea.vmem [#allocation2], %s1118
          %1121 = vsyncadd %s1116, 0
          %s1122 = smul.addr %s93, 8
          %s1123 = scalar_lea.hbm %s3, %s1122
          %s1125 = sshll.u32 %s1123, 4
          %s1126 = int_to_ptr.hbm [resolvable:$true] %s1125
          %s1127 = sshll.u32 %s1119, 4
          %s1128 = int_to_ptr.vmem [resolvable:$true] %s1127
          %1130 = dma.hbm_to_vmem [thread:$0]  %s1126, 128, %s1128, %s1116
        $region156: #{dqn_forward.1} parent=147 // pred_fallthru
          _
        // Predicated region
        $region157: #{dqn_forward.1} parent=147 // pred_check
          %p1131 = pneg %p165
        $region158: #{dqn_forward.1} parent=147 // pred_check_branch
          %1133 = sbr.rel (%p1131) target = $region160
        $region159: #{dqn_forward.1} parent=147 // pred_region
          %s1134 = sand.u32 %s93, 1
          %s1135 = scalar_lea.sflag [#allocation6], %s1134
          %s1136 = sand.u32 %s155, 1
          %s1137 = smul.addr %s1136, 8
          %s1138 = scalar_lea.vmem [#allocation5], %s1137
          %1140 = vsyncadd %s1135, 0
          %s1141 = smul.addr %s93, 8
          %s1142 = scalar_lea.hbm %s5, %s1141
          %s1144 = sshll.u32 %s1142, 4
          %s1145 = int_to_ptr.hbm [resolvable:$true] %s1144
          %s1146 = sshll.u32 %s1138, 4
          %s1147 = int_to_ptr.vmem [resolvable:$true] %s1146
          %1149 = dma.hbm_to_vmem [thread:$0]  %s1145, 128, %s1147, %s1135
        $region160: #{dqn_forward.1} parent=147 // pred_fallthru
          _
        // Predicated region
        $region161: #{dqn_forward.1} parent=147 // pred_check
          %p1150 = pneg %p191
        $region162: #{dqn_forward.1} parent=147 // pred_check_branch
          %1152 = sbr.rel (%p1150) target = $region164
        $region163: #{dqn_forward.1} parent=147 // pred_region
          %p1153 = scmp.lt.s32.totalorder %s93, 1
          %s1154 = scalar_select %p1153, %s93, 1
          %s1155 = scalar_lea.vmem %s7, %s1154
        $region164: #{dqn_forward.1} parent=147 // pred_fallthru
          _
      $region148: #{dqn_forward.1} parent=5 // pred_fallthru
        _
      %p1156 = scmp.le.s32.totalorder 1, %s93
      %p1157 = scmp.lt.s32.totalorder %s93, 3
      %p1158 = pnand %p1156, %p1157
      %p1159 = pneg %p1158
      // Predicated region
      $region165: #{dqn_forward.1} parent=5 // pred_check
        _
      $region166: #{dqn_forward.1} parent=5 // pred_check_branch
        %1161 = sbr.rel (%p1158) target = $region168
      $region167: #{dqn_forward.1} parent=5 // pred_region
        %s1162 = ssub.s32 %s93, 1
        %s1163 = sand.u32 %s132, 1
        %s1164 = scalar_lea.sflag [#allocation3], %s1163
        %s1165 = sand.u32 %s132, 1
        %s1166 = smul.addr %s1165, 8
        %s1167 = scalar_lea.vmem [#allocation2], %s1166
        // Predicated region
        $region169: #{dqn_forward.1} parent=167 // pred_check
          %p1168 = pneg %p145
        $region170: #{dqn_forward.1} parent=167 // pred_check_branch
          %1170 = sbr.rel (%p1168) target = $region172
        $region171: #{dqn_forward.1} parent=167 // pred_region
          %1172 = dma.done %s1164, 128
        $region172: #{dqn_forward.1} parent=167 // pred_fallthru
          _
        %s1173 = sand.u32 %s98, 1
        %s1174 = scalar_lea.sflag [#allocation6], %s1173
        %s1175 = sand.u32 %s158, 1
        %s1176 = smul.addr %s1175, 8
        %s1177 = scalar_lea.vmem [#allocation5], %s1176
        // Predicated region
        $region173: #{dqn_forward.1} parent=167 // pred_check
          %p1178 = pneg %p171
        $region174: #{dqn_forward.1} parent=167 // pred_check_branch
          %1180 = sbr.rel (%p1178) target = $region176
        $region175: #{dqn_forward.1} parent=167 // pred_region
          %1182 = dma.done %s1174, 128
        $region176: #{dqn_forward.1} parent=167 // pred_fallthru
          _
        // Predicated region
        $region177: #{dqn_forward.1} parent=167 // pred_check
          %p1183 = pneg %p512
        $region178: #{dqn_forward.1} parent=167 // pred_check_branch
          %1185 = sbr.rel (%p1183) target = $region180
        $region179: #{dqn_forward.1} parent=167 // pred_region
          %1187 = dma.done [#allocation6], 1024
        $region180: #{dqn_forward.1} parent=167 // pred_fallthru
          _
        // Predicated region
        $region181: #{dqn_forward.1} parent=167 // pred_check
          %p1188 = pneg %p554
        $region182: #{dqn_forward.1} parent=167 // pred_check_branch
          %1190 = sbr.rel (%p1188) target = $region184
        $region183: #{dqn_forward.1} parent=167 // pred_region
          %1192 = dma.done [#allocation9], 1024
        $region184: #{dqn_forward.1} parent=167 // pred_fallthru
          _
        // Predicated region
        $region185: #{dqn_forward.1} parent=167 // pred_check
          %p1193 = pneg %p701
        $region186: #{dqn_forward.1} parent=167 // pred_check_branch
          %1195 = sbr.rel (%p1193) target = $region188
        $region187: #{dqn_forward.1} parent=167 // pred_region
          %1197 = dma.done [#allocation9], 16
        $region188: #{dqn_forward.1} parent=167 // pred_fallthru
          _
        // Predicated region
        $region189: #{dqn_forward.1} parent=167 // pred_check
          %p1198 = pneg %p743
        $region190: #{dqn_forward.1} parent=167 // pred_check_branch
          %1200 = sbr.rel (%p1198) target = $region192
        $region191: #{dqn_forward.1} parent=167 // pred_region
          %1202 = dma.done [#allocation12], 16
        $region192: #{dqn_forward.1} parent=167 // pred_fallthru
          _
        // Predicated region
        $region193: #{dqn_forward.1} parent=167 // pred_check
          %p1203 = pneg %p785
        $region194: #{dqn_forward.1} parent=167 // pred_check_branch
          %1205 = sbr.rel (%p1203) target = $region196
        $region195: #{dqn_forward.1} parent=167 // pred_region
          %1207 = dma.done [#allocation12], 16
        $region196: #{dqn_forward.1} parent=167 // pred_fallthru
          _
        // Predicated region
        $region197: #{dqn_forward.1} parent=167 // pred_check
          %p1208 = pneg %p806
        $region198: #{dqn_forward.1} parent=167 // pred_check_branch
          %1210 = sbr.rel (%p1208) target = $region200
        $region199: #{dqn_forward.1} parent=167 // pred_region
          %1212 = dma.done [#allocation15], 1024
        $region200: #{dqn_forward.1} parent=167 // pred_fallthru
          _
        // Predicated region
        $region201: #{dqn_forward.1} parent=167 // pred_check
          %p1213 = pneg %p827
        $region202: #{dqn_forward.1} parent=167 // pred_check_branch
          %1215 = sbr.rel (%p1213) target = $region204
        $region203: #{dqn_forward.1} parent=167 // pred_region
          %1217 = dma.done [#allocation15], 512
        $region204: #{dqn_forward.1} parent=167 // pred_fallthru
          _
        %p1218 = scmp.lt.s32.totalorder %s98, 1
        %s1219 = scalar_select %p1218, %s98, 1
        %s1220 = smul.addr %s1219, 8
        %s1221 = scalar_lea.vmem %s1, %s1220
        %p1222 = pneg %p119
        %p1223 = pneg %p116
        %s1224 = sand.u32 %s132, 1
        %s1225 = scalar_lea.sflag [#allocation3], %s1224
        %s1226 = sand.u32 %s132, 1
        %s1227 = smul.addr %s1226, 8
        %s1228 = scalar_lea.vmem [#allocation2], %s1227
        %p1229 = pneg %p145
        %p1230 = pneg %p142
        %s1231 = sand.u32 %s98, 1
        %s1232 = scalar_lea.sflag [#allocation6], %s1231
        %s1233 = sand.u32 %s158, 1
        %s1234 = smul.addr %s1233, 8
        %s1235 = scalar_lea.vmem [#allocation5], %s1234
        %p1236 = pneg %p171
        %p1237 = pneg %p168
        %p1238 = scmp.lt.s32.totalorder %s98, 1
        %s1239 = scalar_select %p1238, %s98, 1
        %s1240 = scalar_lea.vmem %s7, %s1239
        %p1241 = pneg %p197
        %p1242 = pneg %p194
        %p1243 = pneg %p218
        %p1244 = pneg %p215
        %p1245 = pneg %p239
        %p1246 = pneg %p236
        %p1247 = pneg %p260
        %p1248 = pneg %p257
        %p1249 = pneg %p281
        %p1250 = pneg %p278
        %p1251 = pneg %p302
        %p1252 = pneg %p299
        %p1253 = pneg %p323
        %p1254 = pneg %p320
        %p1255 = pneg %p344
        %p1256 = pneg %p341
        %p1257 = pneg %p365
        %p1258 = pneg %p362
        %p1259 = pneg %p386
        %p1260 = pneg %p383
        %p1261 = pneg %p407
        %p1262 = pneg %p404
        %p1263 = pneg %p428
        %p1264 = pneg %p425
        %p1265 = pneg %p449
        %p1266 = pneg %p446
        %p1267 = pneg %p470
        %p1268 = pneg %p467
        %p1269 = pneg %p491
        %p1270 = pneg %p488
        %p1271 = pneg %p512
        %p1272 = pneg %p509
        %p1273 = pneg %p533
        %p1274 = pneg %p530
        %p1275 = pneg %p554
        %p1276 = pneg %p551
        %p1277 = pneg %p575
        %p1278 = pneg %p572
        %p1279 = pneg %p596
        %p1280 = pneg %p593
        %p1281 = pneg %p617
        %p1282 = pneg %p614
        %p1283 = pneg %p638
        %p1284 = pneg %p635
        %p1285 = pneg %p659
        %p1286 = pneg %p656
        %p1287 = pneg %p680
        %p1288 = pneg %p677
        %p1289 = pneg %p701
        %p1290 = pneg %p698
        %p1291 = pneg %p722
        %p1292 = pneg %p719
        %p1293 = pneg %p743
        %p1294 = pneg %p740
        %p1295 = pneg %p764
        %p1296 = pneg %p761
        %p1297 = pneg %p785
        %p1298 = pneg %p782
        %p1299 = pneg %p806
        %p1300 = pneg %p803
        %p1301 = pneg %p827
        %p1302 = pneg %p824
        %p1303 = pneg %p848
        %p1304 = pneg %p845
        %p1305 = pneg %p869
        %p1306 = pneg %p866
        %p1307 = pneg %p890
        %p1308 = pneg %p887
        %p1309 = pneg %p916
        %p1310 = pneg %p913
        %s1311 = sand.u32 %s903, 1
        %s1312 = scalar_lea.sflag [#allocation4], %s1311
        %s1313 = sand.u32 %s903, 1
        %s1314 = scalar_lea.vmem [#allocation17], %s1313
        %p1315 = scmp.lt.s32.totalorder %s98, 1
        %s1316 = scalar_select %p1315, %s98, 1
        %s1317 = smul.addr %s1316, 8
        %s1318 = scalar_lea.vmem %s1, %s1317
        %p1319 = scmp.lt.s32.totalorder %s98, 1
        %s1320 = scalar_select %p1319, %s98, 1
        %s1321 = scalar_lea.vmem %s7, %s1320
        %v1322 = vld [vmem:[%s1318] sm:$0xff]
        %v1323 = vld [vmem:[%s1167] sm:$0xff]
        %v1324 = vld [vmem:[%s1177] sm:$0xff]
        %vm1325 = vcmp.gt.f32.partialorder %v1323, 0.5
        %v1326 = vld [vmem:[%s9] sm:$0xff]
        %v1327 = vld [vmem:[%s11] sm:$0x1]
        %v1329 = vperm.slane %v1327, 0
        %vm1331 = vcmask 64512
        %v1333 = vsel %vm1331, %v1322, 0
        %1335 = vmatpush.msra.mxu0 0.0
        %1336 = vmatpush.msra.mxu0 0.0
        %1337 = vmatpush.msra.mxu0 0.0
        %1338 = vmatpush.msra.mxu0 0.0
        %1339 = vmatpush.msra.mxu0 0.0
        %1340 = vmatpush.msra.mxu0 0.0
        %1341 = vmatpush.msra.mxu0 0.0
        %1342 = vmatpush.msra.mxu0 0.0
        %1343 = vmatpush.msra.mxu0 0.0
        %1344 = vmatpush.msra.mxu0 0.0
        %1345 = vmatpush.msra.mxu0 0.0
        %1346 = vmatpush.msra.mxu0 0.0
        %1347 = vmatpush.msra.mxu0 0.0
        %1348 = vmatpush.msra.mxu0 0.0
        %1349 = vmatpush.msra.mxu0 0.0
        %1350 = vmatpush.msra.mxu0 %v1326
        %1351 = vmatmul.f32.gmra.mxu0 %v1333
        %v1352 = vpop.f32.mrf.mxu0
        %v1353 = vadd.f32 %v1329, %v1352
        %1354 = vdwg.mxu0
        %v1355 = vld [vmem:[%s13] sm:$0xff]
        %v1356 = vld [vmem:[%s15] sm:$0x1]
        %v1358 = vperm.slane %v1356, 0
        %1360 = vmatpush.msra.mxu0 0.0
        %1361 = vmatpush.msra.mxu0 0.0
        %1362 = vmatpush.msra.mxu0 0.0
        %1363 = vmatpush.msra.mxu0 0.0
        %1364 = vmatpush.msra.mxu0 0.0
        %1365 = vmatpush.msra.mxu0 0.0
        %1366 = vmatpush.msra.mxu0 0.0
        %1367 = vmatpush.msra.mxu0 0.0
        %1368 = vmatpush.msra.mxu0 0.0
        %1369 = vmatpush.msra.mxu0 0.0
        %1370 = vmatpush.msra.mxu0 0.0
        %1371 = vmatpush.msra.mxu0 0.0
        %1372 = vmatpush.msra.mxu0 0.0
        %1373 = vmatpush.msra.mxu0 0.0
        %1374 = vmatpush.msra.mxu0 0.0
        %1375 = vmatpush.msra.mxu0 %v1355
        %1376 = vmatmul.f32.gmra.mxu0 %v1333
        %v1377 = vpop.f32.mrf.mxu0
        %v1378 = vadd.f32 %v1358, %v1377
        %1379 = vdwg.mxu0
        %v1381 = vrot.slane %v1378, 1
        %v1382 = vrot.slane %v1378, 2
        %v1383 = vrot.slane %v1378, 3
        %v1384 = vrot.slane %v1378, 4
        %v1385 = vrot.slane %v1378, 5
        %v1386 = vrot.slane %v1378, 6
        %v1387 = vrot.slane %v1378, 7
        %v1388 = vperm.slane %v1378, 0
        %v1389 = vperm.slane %v1381, 0
        %v1390 = vperm.slane %v1382, 0
        %v1391 = vperm.slane %v1383, 0
        %v1392 = vperm.slane %v1384, 0
        %v1393 = vperm.slane %v1385, 0
        %v1394 = vperm.slane %v1386, 0
        %v1395 = vperm.slane %v1387, 0
        %v1404 = vadd.f32 %v1388, %v1353
        %v1405 = vadd.f32 %v1389, %v1353
        %v1406 = vadd.f32 %v1390, %v1353
        %v1407 = vadd.f32 %v1391, %v1353
        %v1408 = vadd.f32 %v1392, %v1353
        %v1409 = vadd.f32 %v1393, %v1353
        %v1410 = vadd.f32 %v1394, %v1353
        %v1411 = vadd.f32 %v1395, %v1353
        %v1412 = vperm.slane %v1324, 0
        %v1413 = vlaneseq
        %v1414 = vshrl.u32 %v1413, 7
        %1416 = vset.pattern.permute.xlu0 %v1414
        %1417 = vperm.xlu0 %1416, %v1412
        %v1418 = vpop.permute.xlu0 %1417
        %v1419 = vperm.slane %v1324, 1
        %v1420 = vlaneseq
        %v1421 = vshrl.u32 %v1420, 7
        %1423 = vset.pattern.permute.xlu0 %v1421
        %1424 = vperm.xlu0 %1423, %v1419
        %v1425 = vpop.permute.xlu0 %1424
        %v1426 = vperm.slane %v1324, 2
        %v1427 = vlaneseq
        %v1428 = vshrl.u32 %v1427, 7
        %1430 = vset.pattern.permute.xlu0 %v1428
        %1431 = vperm.xlu0 %1430, %v1426
        %v1432 = vpop.permute.xlu0 %1431
        %v1433 = vperm.slane %v1324, 3
        %v1434 = vlaneseq
        %v1435 = vshrl.u32 %v1434, 7
        %1437 = vset.pattern.permute.xlu0 %v1435
        %1438 = vperm.xlu0 %1437, %v1433
        %v1439 = vpop.permute.xlu0 %1438
        %v1440 = vperm.slane %v1324, 4
        %v1441 = vlaneseq
        %v1442 = vshrl.u32 %v1441, 7
        %1444 = vset.pattern.permute.xlu0 %v1442
        %1445 = vperm.xlu0 %1444, %v1440
        %v1446 = vpop.permute.xlu0 %1445
        %v1447 = vperm.slane %v1324, 5
        %v1448 = vlaneseq
        %v1449 = vshrl.u32 %v1448, 7
        %1451 = vset.pattern.permute.xlu0 %v1449
        %1452 = vperm.xlu0 %1451, %v1447
        %v1453 = vpop.permute.xlu0 %1452
        %v1454 = vperm.slane %v1324, 6
        %v1455 = vlaneseq
        %v1456 = vshrl.u32 %v1455, 7
        %1458 = vset.pattern.permute.xlu0 %v1456
        %1459 = vperm.xlu0 %1458, %v1454
        %v1460 = vpop.permute.xlu0 %1459
        %v1461 = vperm.slane %v1324, 7
        %v1462 = vlaneseq
        %v1463 = vshrl.u32 %v1462, 7
        %1465 = vset.pattern.permute.xlu0 %v1463
        %1466 = vperm.xlu0 %1465, %v1461
        %v1467 = vpop.permute.xlu0 %1466
        %v1468 = vld [vmem:[%s17] sm:$0x1]
        %v1470 = vperm.slane %v1468, 0
        %v1472 = vmul.f32 %v1418, %v1470
        %v1473 = vmul.f32 %v1425, %v1470
        %v1474 = vmul.f32 %v1432, %v1470
        %v1475 = vmul.f32 %v1439, %v1470
        %v1476 = vmul.f32 %v1446, %v1470
        %v1477 = vmul.f32 %v1453, %v1470
        %v1478 = vmul.f32 %v1460, %v1470
        %v1479 = vmul.f32 %v1467, %v1470
        %v1480 = vadd.f32 %v1404, %v1472
        %v1481 = vadd.f32 %v1405, %v1473
        %v1482 = vadd.f32 %v1406, %v1474
        %v1483 = vadd.f32 %v1407, %v1475
        %v1484 = vadd.f32 %v1408, %v1476
        %v1485 = vadd.f32 %v1409, %v1477
        %v1486 = vadd.f32 %v1410, %v1478
        %v1487 = vadd.f32 %v1411, %v1479
        %vm1488 = vcmp.ge.f32.partialorder %v1480, 0.0
        %vm1489 = vcmp.ge.f32.partialorder %v1481, 0.0
        %vm1490 = vcmp.ge.f32.partialorder %v1482, 0.0
        %vm1491 = vcmp.ge.f32.partialorder %v1483, 0.0
        %vm1492 = vcmp.ge.f32.partialorder %v1484, 0.0
        %vm1493 = vcmp.ge.f32.partialorder %v1485, 0.0
        %vm1494 = vcmp.ge.f32.partialorder %v1486, 0.0
        %vm1495 = vcmp.ge.f32.partialorder %v1487, 0.0
        %v1496 = vmul.f32 %v1480, 0.2
        %v1497 = vmul.f32 %v1481, 0.2
        %v1498 = vmul.f32 %v1482, 0.2
        %v1499 = vmul.f32 %v1483, 0.2
        %v1500 = vmul.f32 %v1484, 0.2
        %v1501 = vmul.f32 %v1485, 0.2
        %v1502 = vmul.f32 %v1486, 0.2
        %v1503 = vmul.f32 %v1487, 0.2
        %v1504 = vsel %vm1488, %v1480, %v1496
        %v1505 = vsel %vm1489, %v1481, %v1497
        %v1506 = vsel %vm1490, %v1482, %v1498
        %v1507 = vsel %vm1491, %v1483, %v1499
        %v1508 = vsel %vm1492, %v1484, %v1500
        %v1509 = vsel %vm1493, %v1485, %v1501
        %v1510 = vsel %vm1494, %v1486, %v1502
        %v1511 = vsel %vm1495, %v1487, %v1503
        %v1512 = vld [vmem:[%s19] sm:$0x1]
        %v1514 = vperm.slane %v1512, 0
        %v1516 = vmul.f32 %v1504, %v1514
        %v1517 = vmul.f32 %v1505, %v1514
        %v1518 = vmul.f32 %v1506, %v1514
        %v1519 = vmul.f32 %v1507, %v1514
        %v1520 = vmul.f32 %v1508, %v1514
        %v1521 = vmul.f32 %v1509, %v1514
        %v1522 = vmul.f32 %v1510, %v1514
        %v1523 = vmul.f32 %v1511, %v1514
        %vm1524 = vcmask 261120
        %v1525 = vsel %vm1524, %v1516, 0.0
        %1526 = vadd.xlane.f32.xlu0 %v1525
        %v1527 = vpop.xlane.xlu0 %1526
        %v1528 = vsel %vm1524, %v1517, 0.0
        %1529 = vadd.xlane.f32.xlu0 %v1528
        %v1530 = vpop.xlane.xlu0 %1529
        %v1531 = vsel %vm1524, %v1518, 0.0
        %1532 = vadd.xlane.f32.xlu0 %v1531
        %v1533 = vpop.xlane.xlu0 %1532
        %v1534 = vsel %vm1524, %v1519, 0.0
        %1535 = vadd.xlane.f32.xlu0 %v1534
        %v1536 = vpop.xlane.xlu0 %1535
        %v1537 = vsel %vm1524, %v1520, 0.0
        %1538 = vadd.xlane.f32.xlu0 %v1537
        %v1539 = vpop.xlane.xlu0 %1538
        %v1540 = vsel %vm1524, %v1521, 0.0
        %1541 = vadd.xlane.f32.xlu0 %v1540
        %v1542 = vpop.xlane.xlu0 %1541
        %v1543 = vsel %vm1524, %v1522, 0.0
        %1544 = vadd.xlane.f32.xlu0 %v1543
        %v1545 = vpop.xlane.xlu0 %1544
        %v1546 = vsel %vm1524, %v1523, 0.0
        %1547 = vadd.xlane.f32.xlu0 %v1546
        %v1548 = vpop.xlane.xlu0 %1547
        %v1557 = vlaneseq
        %v1558 = vand.u32 %v1557, 127
        %v1559 = vperm.slane %v1527, %v1558
        %v1560 = vperm.slane %v1530, %v1558
        %v1561 = vperm.slane %v1533, %v1558
        %v1562 = vperm.slane %v1536, %v1558
        %v1563 = vperm.slane %v1539, %v1558
        %v1564 = vperm.slane %v1542, %v1558
        %v1565 = vperm.slane %v1545, %v1558
        %v1566 = vperm.slane %v1548, %v1558
        %vm1567 = vcmask 1041409
        %v1568 = vsel %vm1567, %v1560, %v1559
        %vm1569 = vcmask 1042434
        %v1570 = vsel %vm1569, %v1561, %v1568
        %vm1571 = vcmask 1043459
        %v1572 = vsel %vm1571, %v1562, %v1570
        %vm1573 = vcmask 1044484
        %v1574 = vsel %vm1573, %v1563, %v1572
        %vm1575 = vcmask 1045509
        %v1576 = vsel %vm1575, %v1564, %v1574
        %vm1577 = vcmask 1046534
        %v1578 = vsel %vm1577, %v1565, %v1576
        %vm1579 = vcmask 1047559
        %v1580 = vsel %vm1579, %v1566, %v1578
        %v1582 = vsel %vm1325, %v1580, -1e+30
        %v1583 = vsel %vm1331, %v1582, -inf
        %1584 = vmax.xlane.f32.xlu0 %v1583
        %v1585 = vpop.xlane.xlu0 %1584
        %v1586 = vsub.f32 %v1582, %v1585
        %v1587 = vmul.f32 %v1586, 1.442695
        %v1588 = vpow.pop %v1587
        %v1589 = vsel %vm1325, %v1588, 0.0
        %v1590 = vsel %vm1331, %v1589, 0.0
        %1591 = vadd.xlane.f32.xlu0 %v1590
        %v1592 = vpop.xlane.xlu0 %1591
        %v1593 = vmax.f32 %v1592, 1e-30
        %v1594 = vrcp.pop %v1593
        %v1595 = vmul.f32 %v1589, %v1594
        %v1597 = vsel %vm1331, %v1595, 0
        %1599 = vmatpush.msra.mxu0 0.0
        %1600 = vmatpush.msra.mxu0 0.0
        %1601 = vmatpush.msra.mxu0 0.0
        %1602 = vmatpush.msra.mxu0 0.0
        %1603 = vmatpush.msra.mxu0 0.0
        %1604 = vmatpush.msra.mxu0 0.0
        %1605 = vmatpush.msra.mxu0 0.0
        %1606 = vmatpush.msra.mxu0 0.0
        %1607 = vmatpush.msra.mxu0 0.0
        %1608 = vmatpush.msra.mxu0 0.0
        %1609 = vmatpush.msra.mxu0 0.0
        %1610 = vmatpush.msra.mxu0 0.0
        %1611 = vmatpush.msra.mxu0 0.0
        %1612 = vmatpush.msra.mxu0 0.0
        %1613 = vmatpush.msra.mxu0 0.0
        %1614 = vmatpush.msra.mxu0 %v1353
        %1615 = vmatmul.f32.gmra.mxu0 %v1597
        %v1616 = vpop.f32.mrf.mxu0
        %v1617 = vadd.f32 0.0, %v1616
        %1618 = vdwg.mxu0
        %1627 = vrot.lane.b32.xlu0 %v1516, 96
        %v1628 = vpop.permute.xlu0 %1627
        %1629 = vrot.lane.b32.xlu0 %v1517, 96
        %v1630 = vpop.permute.xlu0 %1629
        %1631 = vrot.lane.b32.xlu0 %v1518, 96
        %v1632 = vpop.permute.xlu0 %1631
        %1633 = vrot.lane.b32.xlu0 %v1519, 96
        %v1634 = vpop.permute.xlu0 %1633
        %1635 = vrot.lane.b32.xlu0 %v1520, 96
        %v1636 = vpop.permute.xlu0 %1635
        %1637 = vrot.lane.b32.xlu0 %v1521, 96
        %v1638 = vpop.permute.xlu0 %1637
        %1639 = vrot.lane.b32.xlu0 %v1522, 96
        %v1640 = vpop.permute.xlu0 %1639
        %1641 = vrot.lane.b32.xlu0 %v1523, 96
        %v1642 = vpop.permute.xlu0 %1641
        %v1651 = vsel %vm1524, %v1628, 0.0
        %1652 = vadd.xlane.f32.xlu0 %v1651
        %v1653 = vpop.xlane.xlu0 %1652
        %v1654 = vsel %vm1524, %v1630, 0.0
        %1655 = vadd.xlane.f32.xlu0 %v1654
        %v1656 = vpop.xlane.xlu0 %1655
        %v1657 = vsel %vm1524, %v1632, 0.0
        %1658 = vadd.xlane.f32.xlu0 %v1657
        %v1659 = vpop.xlane.xlu0 %1658
        %v1660 = vsel %vm1524, %v1634, 0.0
        %1661 = vadd.xlane.f32.xlu0 %v1660
        %v1662 = vpop.xlane.xlu0 %1661
        %v1663 = vsel %vm1524, %v1636, 0.0
        %1664 = vadd.xlane.f32.xlu0 %v1663
        %v1665 = vpop.xlane.xlu0 %1664
        %v1666 = vsel %vm1524, %v1638, 0.0
        %1667 = vadd.xlane.f32.xlu0 %v1666
        %v1668 = vpop.xlane.xlu0 %1667
        %v1669 = vsel %vm1524, %v1640, 0.0
        %1670 = vadd.xlane.f32.xlu0 %v1669
        %v1671 = vpop.xlane.xlu0 %1670
        %v1672 = vsel %vm1524, %v1642, 0.0
        %1673 = vadd.xlane.f32.xlu0 %v1672
        %v1674 = vpop.xlane.xlu0 %1673
        %v1683 = vperm.slane %v1653, %v1558
        %v1684 = vperm.slane %v1656, %v1558
        %v1685 = vperm.slane %v1659, %v1558
        %v1686 = vperm.slane %v1662, %v1558
        %v1687 = vperm.slane %v1665, %v1558
        %v1688 = vperm.slane %v1668, %v1558
        %v1689 = vperm.slane %v1671, %v1558
        %v1690 = vperm.slane %v1674, %v1558
        %v1691 = vsel %vm1567, %v1684, %v1683
        %v1692 = vsel %vm1569, %v1685, %v1691
        %v1693 = vsel %vm1571, %v1686, %v1692
        %v1694 = vsel %vm1573, %v1687, %v1693
        %v1695 = vsel %vm1575, %v1688, %v1694
        %v1696 = vsel %vm1577, %v1689, %v1695
        %v1697 = vsel %vm1579, %v1690, %v1696
        %v1699 = vsel %vm1325, %v1697, -1e+30
        %v1700 = vsel %vm1331, %v1699, -inf
        %1701 = vmax.xlane.f32.xlu0 %v1700
        %v1702 = vpop.xlane.xlu0 %1701
        %v1703 = vsub.f32 %v1699, %v1702
        %v1704 = vmul.f32 %v1703, 1.442695
        %v1705 = vpow.pop %v1704
        %v1706 = vsel %vm1325, %v1705, 0.0
        %v1707 = vsel %vm1331, %v1706, 0.0
        %1708 = vadd.xlane.f32.xlu0 %v1707
        %v1709 = vpop.xlane.xlu0 %1708
        %v1710 = vmax.f32 %v1709, 1e-30
        %v1711 = vrcp.pop %v1710
        %v1712 = vmul.f32 %v1706, %v1711
        %1714 = vrot.lane.b32.xlu0 %v1353, 96
        %v1715 = vpop.permute.xlu0 %1714
        %v1718 = vsel %vm1331, %v1712, 0
        %1720 = vmatpush.msra.mxu0 0.0
        %1721 = vmatpush.msra.mxu0 0.0
        %1722 = vmatpush.msra.mxu0 0.0
        %1723 = vmatpush.msra.mxu0 0.0
        %1724 = vmatpush.msra.mxu0 0.0
        %1725 = vmatpush.msra.mxu0 0.0
        %1726 = vmatpush.msra.mxu0 0.0
        %1727 = vmatpush.msra.mxu0 0.0
        %1728 = vmatpush.msra.mxu0 0.0
        %1729 = vmatpush.msra.mxu0 0.0
        %1730 = vmatpush.msra.mxu0 0.0
        %1731 = vmatpush.msra.mxu0 0.0
        %1732 = vmatpush.msra.mxu0 0.0
        %1733 = vmatpush.msra.mxu0 0.0
        %1734 = vmatpush.msra.mxu0 0.0
        %1735 = vmatpush.msra.mxu0 %v1715
        %1736 = vmatmul.f32.gmra.mxu0 %v1718
        %v1737 = vpop.f32.mrf.mxu0
        %v1738 = vadd.f32 0.0, %v1737
        %1739 = vdwg.mxu0
        %1741 = vrot.lane.b32.xlu0 %v1738, 32
        %v1742 = vpop.permute.xlu0 %1741
        %v1744 = vsel %vm1524, %v1617, %v1742
        %v1745 = vld [vmem:[%s21] sm:$0x1]
        %v1747 = vperm.slane %v1745, 0
        %v1749 = vadd.f32 %v1744, %v1747
        %v1750 = vmax.f32 %v1749, 0.0
        %v1751 = vld [vmem:[%s23] sm:$0xff]
        %v1752 = vld [vmem:[%s23 + $0x8] sm:$0xff]
        %v1753 = vld [vmem:[%s23 + $0x10] sm:$0xff]
        %v1754 = vld [vmem:[%s23 + $0x18] sm:$0xff]
        %v1755 = vld [vmem:[%s23 + $0x20] sm:$0xff]
        %v1756 = vld [vmem:[%s23 + $0x28] sm:$0xff]
        %v1757 = vld [vmem:[%s23 + $0x30] sm:$0xff]
        %v1758 = vld [vmem:[%s23 + $0x38] sm:$0xff]
        %v1759 = vld [vmem:[%s25] sm:$0x1]
        %v1761 = vperm.slane %v1759, 0
        %vm1763 = vcmask 523264
        %v1765 = vsel %vm1763, %v1750, 0
        %1767 = vmatpush.msra.mxu0 0.0
        %1768 = vmatpush.msra.mxu0 0.0
        %1769 = vmatpush.msra.mxu0 0.0
        %1770 = vmatpush.msra.mxu0 0.0
        %1771 = vmatpush.msra.mxu0 0.0
        %1772 = vmatpush.msra.mxu0 0.0
        %1773 = vmatpush.msra.mxu0 0.0
        %1774 = vmatpush.msra.mxu0 0.0
        %1775 = vmatpush.msra.mxu0 %v1758
        %1776 = vmatpush.msra.mxu0 %v1757
        %1777 = vmatpush.msra.mxu0 %v1756
        %1778 = vmatpush.msra.mxu0 %v1755
        %1779 = vmatpush.msra.mxu0 %v1754
        %1780 = vmatpush.msra.mxu0 %v1753
        %1781 = vmatpush.msra.mxu0 %v1752
        %1782 = vmatpush.msra.mxu0 %v1751
        %1783 = vmatmul.f32.gmra.mxu0 %v1765
        %v1784 = vpop.f32.mrf.mxu0
        %v1785 = vadd.f32 %v1761, %v1784
        %1786 = vdwg.mxu0
        %v1787 = vld [vmem:[%s27] sm:$0xff]
        %v1788 = vld [vmem:[%s27 + $0x8] sm:$0xff]
        %v1789 = vld [vmem:[%s27 + $0x10] sm:$0xff]
        %v1790 = vld [vmem:[%s27 + $0x18] sm:$0xff]
        %v1791 = vld [vmem:[%s27 + $0x20] sm:$0xff]
        %v1792 = vld [vmem:[%s27 + $0x28] sm:$0xff]
        %v1793 = vld [vmem:[%s27 + $0x30] sm:$0xff]
        %v1794 = vld [vmem:[%s27 + $0x38] sm:$0xff]
        %v1795 = vld [vmem:[%s29] sm:$0x1]
        %v1797 = vperm.slane %v1795, 0
        %1799 = vmatpush.msra.mxu0 0.0
        %1800 = vmatpush.msra.mxu0 0.0
        %1801 = vmatpush.msra.mxu0 0.0
        %1802 = vmatpush.msra.mxu0 0.0
        %1803 = vmatpush.msra.mxu0 0.0
        %1804 = vmatpush.msra.mxu0 0.0
        %1805 = vmatpush.msra.mxu0 0.0
        %1806 = vmatpush.msra.mxu0 0.0
        %1807 = vmatpush.msra.mxu0 %v1794
        %1808 = vmatpush.msra.mxu0 %v1793
        %1809 = vmatpush.msra.mxu0 %v1792
        %1810 = vmatpush.msra.mxu0 %v1791
        %1811 = vmatpush.msra.mxu0 %v1790
        %1812 = vmatpush.msra.mxu0 %v1789
        %1813 = vmatpush.msra.mxu0 %v1788
        %1814 = vmatpush.msra.mxu0 %v1787
        %1815 = vmatmul.f32.gmra.mxu0 %v1765
        %v1816 = vpop.f32.mrf.mxu0
        %v1817 = vadd.f32 %v1797, %v1816
        %1818 = vdwg.mxu0
        %v1820 = vrot.slane %v1817, 1
        %v1821 = vrot.slane %v1817, 2
        %v1822 = vrot.slane %v1817, 3
        %v1823 = vrot.slane %v1817, 4
        %v1824 = vrot.slane %v1817, 5
        %v1825 = vrot.slane %v1817, 6
        %v1826 = vrot.slane %v1817, 7
        %v1827 = vperm.slane %v1817, 0
        %v1828 = vperm.slane %v1820, 0
        %v1829 = vperm.slane %v1821, 0
        %v1830 = vperm.slane %v1822, 0
        %v1831 = vperm.slane %v1823, 0
        %v1832 = vperm.slane %v1824, 0
        %v1833 = vperm.slane %v1825, 0
        %v1834 = vperm.slane %v1826, 0
        %v1843 = vadd.f32 %v1827, %v1785
        %v1844 = vadd.f32 %v1828, %v1785
        %v1845 = vadd.f32 %v1829, %v1785
        %v1846 = vadd.f32 %v1830, %v1785
        %v1847 = vadd.f32 %v1831, %v1785
        %v1848 = vadd.f32 %v1832, %v1785
        %v1849 = vadd.f32 %v1833, %v1785
        %v1850 = vadd.f32 %v1834, %v1785
        %v1851 = vld [vmem:[%s31] sm:$0x1]
        %v1853 = vperm.slane %v1851, 0
        %v1855 = vmul.f32 %v1418, %v1853
        %v1856 = vmul.f32 %v1425, %v1853
        %v1857 = vmul.f32 %v1432, %v1853
        %v1858 = vmul.f32 %v1439, %v1853
        %v1859 = vmul.f32 %v1446, %v1853
        %v1860 = vmul.f32 %v1453, %v1853
        %v1861 = vmul.f32 %v1460, %v1853
        %v1862 = vmul.f32 %v1467, %v1853
        %v1863 = vadd.f32 %v1843, %v1855
        %v1864 = vadd.f32 %v1844, %v1856
        %v1865 = vadd.f32 %v1845, %v1857
        %v1866 = vadd.f32 %v1846, %v1858
        %v1867 = vadd.f32 %v1847, %v1859
        %v1868 = vadd.f32 %v1848, %v1860
        %v1869 = vadd.f32 %v1849, %v1861
        %v1870 = vadd.f32 %v1850, %v1862
        %vm1871 = vcmp.ge.f32.partialorder %v1863, 0.0
        %vm1872 = vcmp.ge.f32.partialorder %v1864, 0.0
        %vm1873 = vcmp.ge.f32.partialorder %v1865, 0.0
        %vm1874 = vcmp.ge.f32.partialorder %v1866, 0.0
        %vm1875 = vcmp.ge.f32.partialorder %v1867, 0.0
        %vm1876 = vcmp.ge.f32.partialorder %v1868, 0.0
        %vm1877 = vcmp.ge.f32.partialorder %v1869, 0.0
        %vm1878 = vcmp.ge.f32.partialorder %v1870, 0.0
        %v1879 = vmul.f32 %v1863, 0.2
        %v1880 = vmul.f32 %v1864, 0.2
        %v1881 = vmul.f32 %v1865, 0.2
        %v1882 = vmul.f32 %v1866, 0.2
        %v1883 = vmul.f32 %v1867, 0.2
        %v1884 = vmul.f32 %v1868, 0.2
        %v1885 = vmul.f32 %v1869, 0.2
        %v1886 = vmul.f32 %v1870, 0.2
        %v1887 = vsel %vm1871, %v1863, %v1879
        %v1888 = vsel %vm1872, %v1864, %v1880
        %v1889 = vsel %vm1873, %v1865, %v1881
        %v1890 = vsel %vm1874, %v1866, %v1882
        %v1891 = vsel %vm1875, %v1867, %v1883
        %v1892 = vsel %vm1876, %v1868, %v1884
        %v1893 = vsel %vm1877, %v1869, %v1885
        %v1894 = vsel %vm1878, %v1870, %v1886
        %v1895 = vld [vmem:[%s33] sm:$0x1]
        %v1897 = vperm.slane %v1895, 0
        %v1899 = vmul.f32 %v1887, %v1897
        %v1900 = vmul.f32 %v1888, %v1897
        %v1901 = vmul.f32 %v1889, %v1897
        %v1902 = vmul.f32 %v1890, %v1897
        %v1903 = vmul.f32 %v1891, %v1897
        %v1904 = vmul.f32 %v1892, %v1897
        %v1905 = vmul.f32 %v1893, %v1897
        %v1906 = vmul.f32 %v1894, %v1897
        %v1907 = vsel %vm1763, %v1899, 0.0
        %1908 = vadd.xlane.f32.xlu0 %v1907
        %v1909 = vpop.xlane.xlu0 %1908
        %v1910 = vsel %vm1763, %v1900, 0.0
        %1911 = vadd.xlane.f32.xlu0 %v1910
        %v1912 = vpop.xlane.xlu0 %1911
        %v1913 = vsel %vm1763, %v1901, 0.0
        %1914 = vadd.xlane.f32.xlu0 %v1913
        %v1915 = vpop.xlane.xlu0 %1914
        %v1916 = vsel %vm1763, %v1902, 0.0
        %1917 = vadd.xlane.f32.xlu0 %v1916
        %v1918 = vpop.xlane.xlu0 %1917
        %v1919 = vsel %vm1763, %v1903, 0.0
        %1920 = vadd.xlane.f32.xlu0 %v1919
        %v1921 = vpop.xlane.xlu0 %1920
        %v1922 = vsel %vm1763, %v1904, 0.0
        %1923 = vadd.xlane.f32.xlu0 %v1922
        %v1924 = vpop.xlane.xlu0 %1923
        %v1925 = vsel %vm1763, %v1905, 0.0
        %1926 = vadd.xlane.f32.xlu0 %v1925
        %v1927 = vpop.xlane.xlu0 %1926
        %v1928 = vsel %vm1763, %v1906, 0.0
        %1929 = vadd.xlane.f32.xlu0 %v1928
        %v1930 = vpop.xlane.xlu0 %1929
        %v1939 = vperm.slane %v1909, %v1558
        %v1940 = vperm.slane %v1912, %v1558
        %v1941 = vperm.slane %v1915, %v1558
        %v1942 = vperm.slane %v1918, %v1558
        %v1943 = vperm.slane %v1921, %v1558
        %v1944 = vperm.slane %v1924, %v1558
        %v1945 = vperm.slane %v1927, %v1558
        %v1946 = vperm.slane %v1930, %v1558
        %v1947 = vsel %vm1567, %v1940, %v1939
        %v1948 = vsel %vm1569, %v1941, %v1947
        %v1949 = vsel %vm1571, %v1942, %v1948
        %v1950 = vsel %vm1573, %v1943, %v1949
        %v1951 = vsel %vm1575, %v1944, %v1950
        %v1952 = vsel %vm1577, %v1945, %v1951
        %v1953 = vsel %vm1579, %v1946, %v1952
        %v1955 = vsel %vm1325, %v1953, -1e+30
        %v1956 = vsel %vm1331, %v1955, -inf
        %1957 = vmax.xlane.f32.xlu0 %v1956
        %v1958 = vpop.xlane.xlu0 %1957
        %v1959 = vsub.f32 %v1955, %v1958
        %v1960 = vmul.f32 %v1959, 1.442695
        %v1961 = vpow.pop %v1960
        %v1962 = vsel %vm1325, %v1961, 0.0
        %v1963 = vsel %vm1331, %v1962, 0.0
        %1964 = vadd.xlane.f32.xlu0 %v1963
        %v1965 = vpop.xlane.xlu0 %1964
        %v1966 = vmax.f32 %v1965, 1e-30
        %v1967 = vrcp.pop %v1966
        %v1968 = vmul.f32 %v1962, %v1967
        %1977 = vrot.lane.b32.xlu0 %v1899, 64
        %v1978 = vpop.permute.xlu0 %1977
        %1979 = vrot.lane.b32.xlu0 %v1900, 64
        %v1980 = vpop.permute.xlu0 %1979
        %1981 = vrot.lane.b32.xlu0 %v1901, 64
        %v1982 = vpop.permute.xlu0 %1981
        %1983 = vrot.lane.b32.xlu0 %v1902, 64
        %v1984 = vpop.permute.xlu0 %1983
        %1985 = vrot.lane.b32.xlu0 %v1903, 64
        %v1986 = vpop.permute.xlu0 %1985
        %1987 = vrot.lane.b32.xlu0 %v1904, 64
        %v1988 = vpop.permute.xlu0 %1987
        %1989 = vrot.lane.b32.xlu0 %v1905, 64
        %v1990 = vpop.permute.xlu0 %1989
        %1991 = vrot.lane.b32.xlu0 %v1906, 64
        %v1992 = vpop.permute.xlu0 %1991
        %v2001 = vsel %vm1763, %v1978, 0.0
        %2002 = vadd.xlane.f32.xlu0 %v2001
        %v2003 = vpop.xlane.xlu0 %2002
        %v2004 = vsel %vm1763, %v1980, 0.0
        %2005 = vadd.xlane.f32.xlu0 %v2004
        %v2006 = vpop.xlane.xlu0 %2005
        %v2007 = vsel %vm1763, %v1982, 0.0
        %2008 = vadd.xlane.f32.xlu0 %v2007
        %v2009 = vpop.xlane.xlu0 %2008
        %v2010 = vsel %vm1763, %v1984, 0.0
        %2011 = vadd.xlane.f32.xlu0 %v2010
        %v2012 = vpop.xlane.xlu0 %2011
        %v2013 = vsel %vm1763, %v1986, 0.0
        %2014 = vadd.xlane.f32.xlu0 %v2013
        %v2015 = vpop.xlane.xlu0 %2014
        %v2016 = vsel %vm1763, %v1988, 0.0
        %2017 = vadd.xlane.f32.xlu0 %v2016
        %v2018 = vpop.xlane.xlu0 %2017
        %v2019 = vsel %vm1763, %v1990, 0.0
        %2020 = vadd.xlane.f32.xlu0 %v2019
        %v2021 = vpop.xlane.xlu0 %2020
        %v2022 = vsel %vm1763, %v1992, 0.0
        %2023 = vadd.xlane.f32.xlu0 %v2022
        %v2024 = vpop.xlane.xlu0 %2023
        %v2033 = vperm.slane %v2003, %v1558
        %v2034 = vperm.slane %v2006, %v1558
        %v2035 = vperm.slane %v2009, %v1558
        %v2036 = vperm.slane %v2012, %v1558
        %v2037 = vperm.slane %v2015, %v1558
        %v2038 = vperm.slane %v2018, %v1558
        %v2039 = vperm.slane %v2021, %v1558
        %v2040 = vperm.slane %v2024, %v1558
        %v2041 = vsel %vm1567, %v2034, %v2033
        %v2042 = vsel %vm1569, %v2035, %v2041
        %v2043 = vsel %vm1571, %v2036, %v2042
        %v2044 = vsel %vm1573, %v2037, %v2043
        %v2045 = vsel %vm1575, %v2038, %v2044
        %v2046 = vsel %vm1577, %v2039, %v2045
        %v2047 = vsel %vm1579, %v2040, %v2046
        %v2049 = vsel %vm1325, %v2047, -1e+30
        %v2050 = vsel %vm1331, %v2049, -inf
        %2051 = vmax.xlane.f32.xlu0 %v2050
        %v2052 = vpop.xlane.xlu0 %2051
        %v2053 = vsub.f32 %v2049, %v2052
        %v2054 = vmul.f32 %v2053, 1.442695
        %v2055 = vpow.pop %v2054
        %v2056 = vsel %vm1325, %v2055, 0.0
        %v2057 = vsel %vm1331, %v2056, 0.0
        %2058 = vadd.xlane.f32.xlu0 %v2057
        %v2059 = vpop.xlane.xlu0 %2058
        %v2060 = vmax.f32 %v2059, 1e-30
        %v2061 = vrcp.pop %v2060
        %v2062 = vmul.f32 %v2056, %v2061
        %2064 = vrot.lane.b32.xlu0 %v1785, 64
        %v2065 = vpop.permute.xlu0 %2064
        %v2068 = vsel %vm1331, %v2062, 0
        %2070 = vmatpush.msra.mxu0 0.0
        %2071 = vmatpush.msra.mxu0 0.0
        %2072 = vmatpush.msra.mxu0 0.0
        %2073 = vmatpush.msra.mxu0 0.0
        %2074 = vmatpush.msra.mxu0 0.0
        %2075 = vmatpush.msra.mxu0 0.0
        %2076 = vmatpush.msra.mxu0 0.0
        %2077 = vmatpush.msra.mxu0 0.0
        %2078 = vmatpush.msra.mxu0 0.0
        %2079 = vmatpush.msra.mxu0 0.0
        %2080 = vmatpush.msra.mxu0 0.0
        %2081 = vmatpush.msra.mxu0 0.0
        %2082 = vmatpush.msra.mxu0 0.0
        %2083 = vmatpush.msra.mxu0 0.0
        %2084 = vmatpush.msra.mxu0 0.0
        %2085 = vmatpush.msra.mxu0 %v2065
        %2086 = vmatmul.f32.gmra.mxu0 %v2068
        %v2087 = vpop.f32.mrf.mxu0
        %v2088 = vadd.f32 0.0, %v2087
        %2089 = vdwg.mxu0
        %v2091 = vsel %vm1331, %v1968, 0
        %2093 = vmatpush.msra.mxu0 0.0
        %2094 = vmatpush.msra.mxu0 0.0
        %2095 = vmatpush.msra.mxu0 0.0
        %2096 = vmatpush.msra.mxu0 0.0
        %2097 = vmatpush.msra.mxu0 0.0
        %2098 = vmatpush.msra.mxu0 0.0
        %2099 = vmatpush.msra.mxu0 0.0
        %2100 = vmatpush.msra.mxu0 0.0
        %2101 = vmatpush.msra.mxu0 0.0
        %2102 = vmatpush.msra.mxu0 0.0
        %2103 = vmatpush.msra.mxu0 0.0
        %2104 = vmatpush.msra.mxu0 0.0
        %2105 = vmatpush.msra.mxu0 0.0
        %2106 = vmatpush.msra.mxu0 0.0
        %2107 = vmatpush.msra.mxu0 0.0
        %2108 = vmatpush.msra.mxu0 %v1785
        %2109 = vmatmul.f32.gmra.mxu0 %v2091
        %v2110 = vpop.f32.mrf.mxu0
        %v2111 = vadd.f32 %v2088, %v2110
        %2112 = vdwg.mxu0
        %v2113 = vmul.f32 %v2111, 0.5
        %v2114 = vld [vmem:[%s35] sm:$0x1]
        %v2116 = vperm.slane %v2114, 0
        %v2118 = vadd.f32 %v2113, %v2116
        %v2119 = vmax.f32 %v2118, 0.0
        %v2120 = vld [vmem:[#allocation7] sm:$0xff]
        %v2121 = vld [vmem:[#allocation7 + $0x8] sm:$0xff]
        %v2122 = vld [vmem:[#allocation7 + $0x10] sm:$0xff]
        %v2123 = vld [vmem:[#allocation7 + $0x18] sm:$0xff]
        %v2124 = vld [vmem:[#allocation7 + $0x20] sm:$0xff]
        %v2125 = vld [vmem:[#allocation7 + $0x28] sm:$0xff]
        %v2126 = vld [vmem:[#allocation7 + $0x30] sm:$0xff]
        %v2127 = vld [vmem:[#allocation7 + $0x38] sm:$0xff]
        %v2128 = vld [vmem:[%s39] sm:$0x1]
        %v2130 = vperm.slane %v2128, 0
        %v2133 = vsel %vm1763, %v2119, 0
        %2135 = vmatpush.msra.mxu0 0.0
        %2136 = vmatpush.msra.mxu0 0.0
        %2137 = vmatpush.msra.mxu0 0.0
        %2138 = vmatpush.msra.mxu0 0.0
        %2139 = vmatpush.msra.mxu0 0.0
        %2140 = vmatpush.msra.mxu0 0.0
        %2141 = vmatpush.msra.mxu0 0.0
        %2142 = vmatpush.msra.mxu0 0.0
        %2143 = vmatpush.msra.mxu0 %v2127
        %2144 = vmatpush.msra.mxu0 %v2126
        %2145 = vmatpush.msra.mxu0 %v2125
        %2146 = vmatpush.msra.mxu0 %v2124
        %2147 = vmatpush.msra.mxu0 %v2123
        %2148 = vmatpush.msra.mxu0 %v2122
        %2149 = vmatpush.msra.mxu0 %v2121
        %2150 = vmatpush.msra.mxu0 %v2120
        %2151 = vmatmul.f32.gmra.mxu0 %v2133
        %v2152 = vpop.f32.mrf.mxu0
        %v2153 = vadd.f32 %v2130, %v2152
        %2154 = vdwg.mxu0
        %v2155 = vsel %vm1763, %v2153, -inf
        %v2156 = vrot.slane %v2155, 4
        %v2157 = vmax.f32 %v2155, %v2156
        %v2158 = vrot.slane %v2157, 2
        %v2159 = vmax.f32 %v2157, %v2158
        %v2160 = vrot.slane %v2159, 1
        %v2161 = vmax.f32 %v2159, %v2160
        %v2162 = vsub.f32 %v2153, %v2161
        %v2163 = vmul.f32 %v2162, 1.442695
        %v2164 = vpow.pop %v2163
        %v2165 = vsel %vm1763, %v2164, 0.0
        %v2166 = vrot.slane %v2165, 4
        %v2167 = vadd.f32 %v2165, %v2166
        %v2168 = vrot.slane %v2167, 2
        %v2169 = vadd.f32 %v2167, %v2168
        %v2170 = vrot.slane %v2169, 1
        %v2171 = vadd.f32 %v2169, %v2170
        %v2172 = vmax.f32 %v2171, 1e-30
        %v2173 = vrcp.pop %v2172
        %v2174 = vmul.f32 %v2164, %v2173
        %v2175 = vmul.f32 %v2174, %v2119
        %v2176 = vsel %vm1763, %v2175, 0.0
        %v2177 = vrot.slane %v2176, 4
        %v2178 = vadd.f32 %v2176, %v2177
        %v2179 = vrot.slane %v2178, 2
        %v2180 = vadd.f32 %v2178, %v2179
        %v2181 = vrot.slane %v2180, 1
        %v2182 = vadd.f32 %v2180, %v2181
        %v2183 = vld [vmem:[#allocation8] sm:$0xff]
        %v2184 = vld [vmem:[#allocation8 + $0x8] sm:$0xff]
        %v2185 = vld [vmem:[#allocation8 + $0x10] sm:$0xff]
        %v2186 = vld [vmem:[#allocation8 + $0x18] sm:$0xff]
        %v2187 = vld [vmem:[#allocation8 + $0x20] sm:$0xff]
        %v2188 = vld [vmem:[#allocation8 + $0x28] sm:$0xff]
        %v2189 = vld [vmem:[#allocation8 + $0x30] sm:$0xff]
        %v2190 = vld [vmem:[#allocation8 + $0x38] sm:$0xff]
        %v2191 = vld [vmem:[%s43] sm:$0x1]
        %v2193 = vsel %vm1763, %v2182, 0
        %2195 = vmatpush.msra.mxu0 0.0
        %2196 = vmatpush.msra.mxu0 0.0
        %2197 = vmatpush.msra.mxu0 0.0
        %2198 = vmatpush.msra.mxu0 0.0
        %2199 = vmatpush.msra.mxu0 0.0
        %2200 = vmatpush.msra.mxu0 0.0
        %2201 = vmatpush.msra.mxu0 0.0
        %2202 = vmatpush.msra.mxu0 0.0
        %2203 = vmatpush.msra.mxu0 %v2190
        %2204 = vmatpush.msra.mxu0 %v2189
        %2205 = vmatpush.msra.mxu0 %v2188
        %2206 = vmatpush.msra.mxu0 %v2187
        %2207 = vmatpush.msra.mxu0 %v2186
        %2208 = vmatpush.msra.mxu0 %v2185
        %2209 = vmatpush.msra.mxu0 %v2184
        %2210 = vmatpush.msra.mxu0 %v2183
        %2211 = vmatmul.f32.gmra.mxu0 %v2193
        %v2212 = vpop.f32.mrf.mxu0
        %v2213 = vadd.f32 %v2191, %v2212
        %2214 = vdwg.mxu0
        %v2215 = vmax.f32 %v2213, 0.0
        %v2216 = vld [vmem:[%s45] sm:$0xff]
        %v2217 = vld [vmem:[%s45 + $0x8] sm:$0xff]
        %v2218 = vld [vmem:[%s45 + $0x10] sm:$0xff]
        %v2219 = vld [vmem:[%s45 + $0x18] sm:$0xff]
        %v2220 = vld [vmem:[%s45 + $0x20] sm:$0xff]
        %v2221 = vld [vmem:[%s45 + $0x28] sm:$0xff]
        %v2222 = vld [vmem:[%s45 + $0x30] sm:$0xff]
        %v2223 = vld [vmem:[%s45 + $0x38] sm:$0xff]
        %v2224 = vld [vmem:[%s45 + $0x40] sm:$0xff]
        %v2225 = vld [vmem:[%s45 + $0x48] sm:$0xff]
        %v2226 = vld [vmem:[%s45 + $0x50] sm:$0xff]
        %v2227 = vld [vmem:[%s45 + $0x58] sm:$0xff]
        %v2228 = vld [vmem:[%s45 + $0x60] sm:$0xff]
        %v2229 = vld [vmem:[%s45 + $0x68] sm:$0xff]
        %v2230 = vld [vmem:[%s45 + $0x70] sm:$0xff]
        %v2231 = vld [vmem:[%s45 + $0x78] sm:$0xff]
        %v2232 = vld [vmem:[%s47] sm:$0x1]
        %2233 = vmatpush.msra.mxu0 %v2231
        %2234 = vmatpush.msra.mxu0 %v2230
        %2235 = vmatpush.msra.mxu0 %v2229
        %2236 = vmatpush.msra.mxu0 %v2228
        %2237 = vmatpush.msra.mxu0 %v2227
        %2238 = vmatpush.msra.mxu0 %v2226
        %2239 = vmatpush.msra.mxu0 %v2225
        %2240 = vmatpush.msra.mxu0 %v2224
        %2241 = vmatpush.msra.mxu0 %v2223
        %2242 = vmatpush.msra.mxu0 %v2222
        %2243 = vmatpush.msra.mxu0 %v2221
        %2244 = vmatpush.msra.mxu0 %v2220
        %2245 = vmatpush.msra.mxu0 %v2219
        %2246 = vmatpush.msra.mxu0 %v2218
        %2247 = vmatpush.msra.mxu0 %v2217
        %2248 = vmatpush.msra.mxu0 %v2216
        %2249 = vmatmul.f32.gmra.mxu0 %v2215
        %v2250 = vpop.f32.mrf.mxu0
        %v2251 = vadd.f32 %v2232, %v2250
        %2252 = vdwg.mxu0
        %v2253 = vld [vmem:[%s1321] sm:$0x1]
        %v2254 = vld [vmem:[%s49] sm:$0xff]
        %v2255 = vld [vmem:[%s49 + $0x8] sm:$0xff]
        %v2256 = vld [vmem:[%s49 + $0x10] sm:$0xff]
        %v2257 = vld [vmem:[%s49 + $0x18] sm:$0xff]
        %v2258 = vld [vmem:[%s49 + $0x20] sm:$0xff]
        %v2259 = vld [vmem:[%s49 + $0x28] sm:$0xff]
        %v2260 = vld [vmem:[%s49 + $0x30] sm:$0xff]
        %v2261 = vld [vmem:[%s49 + $0x38] sm:$0xff]
        %v2262 = vld [vmem:[%s49 + $0x40] sm:$0xff]
        %v2263 = vld [vmem:[%s49 + $0x48] sm:$0xff]
        %v2264 = vld [vmem:[%s49 + $0x50] sm:$0xff]
        %v2265 = vld [vmem:[%s49 + $0x58] sm:$0xff]
        %v2266 = vld [vmem:[%s49 + $0x60] sm:$0xff]
        %v2267 = vld [vmem:[%s49 + $0x68] sm:$0xff]
        %v2268 = vld [vmem:[%s49 + $0x70] sm:$0xff]
        %v2269 = vld [vmem:[%s49 + $0x78] sm:$0xff]
        %v2270 = vld [vmem:[%s51] sm:$0x3]
        %v2272 = vperm.slane %v2270, 0
        %v2273 = vperm.slane %v2270, 1
        %v2277 = vsel %vm1763, %v2253, 0
        %2279 = vmatpush.msra.mxu0 0.0
        %2280 = vmatpush.msra.mxu0 0.0
        %2281 = vmatpush.msra.mxu0 0.0
        %2282 = vmatpush.msra.mxu0 0.0
        %2283 = vmatpush.msra.mxu0 0.0
        %2284 = vmatpush.msra.mxu0 0.0
        %2285 = vmatpush.msra.mxu0 0.0
        %2286 = vmatpush.msra.mxu0 0.0
        %2287 = vmatpush.msra.mxu0 %v2268
        %2288 = vmatpush.msra.mxu0 %v2266
        %2289 = vmatpush.msra.mxu0 %v2264
        %2290 = vmatpush.msra.mxu0 %v2262
        %2291 = vmatpush.msra.mxu0 %v2260
        %2292 = vmatpush.msra.mxu0 %v2258
        %2293 = vmatpush.msra.mxu0 %v2256
        %2294 = vmatpush.msra.mxu0 %v2254
        %2295 = vmatmul.f32.gmra.mxu0 %v2277
        %v2296 = vpop.f32.mrf.mxu0
        %v2297 = vadd.f32 %v2272, %v2296
        %2298 = vdwg.mxu0
        %2299 = vmatpush.msra.mxu0 0.0
        %2300 = vmatpush.msra.mxu0 0.0
        %2301 = vmatpush.msra.mxu0 0.0
        %2302 = vmatpush.msra.mxu0 0.0
        %2303 = vmatpush.msra.mxu0 0.0
        %2304 = vmatpush.msra.mxu0 0.0
        %2305 = vmatpush.msra.mxu0 0.0
        %2306 = vmatpush.msra.mxu0 0.0
        %2307 = vmatpush.msra.mxu0 %v2269
        %2308 = vmatpush.msra.mxu0 %v2267
        %2309 = vmatpush.msra.mxu0 %v2265
        %2310 = vmatpush.msra.mxu0 %v2263
        %2311 = vmatpush.msra.mxu0 %v2261
        %2312 = vmatpush.msra.mxu0 %v2259
        %2313 = vmatpush.msra.mxu0 %v2257
        %2314 = vmatpush.msra.mxu0 %v2255
        %2315 = vmatmul.f32.gmra.mxu0 %v2277
        %v2316 = vpop.f32.mrf.mxu0
        %v2317 = vadd.f32 %v2273, %v2316
        %2318 = vdwg.mxu0
        %v2319 = vmax.f32 %v2297, 0.0
        %v2320 = vmax.f32 %v2317, 0.0
        %v2321 = vld [vmem:[%s53] sm:$0xff]
        %v2322 = vld [vmem:[%s53 + $0x8] sm:$0xff]
        %v2323 = vld [vmem:[%s53 + $0x10] sm:$0xff]
        %v2324 = vld [vmem:[%s53 + $0x18] sm:$0xff]
        %v2325 = vld [vmem:[%s53 + $0x20] sm:$0xff]
        %v2326 = vld [vmem:[%s53 + $0x28] sm:$0xff]
        %v2327 = vld [vmem:[%s53 + $0x30] sm:$0xff]
        %v2328 = vld [vmem:[%s53 + $0x38] sm:$0xff]
        %v2329 = vld [vmem:[%s53 + $0x40] sm:$0xff]
        %v2330 = vld [vmem:[%s53 + $0x48] sm:$0xff]
        %v2331 = vld [vmem:[%s53 + $0x50] sm:$0xff]
        %v2332 = vld [vmem:[%s53 + $0x58] sm:$0xff]
        %v2333 = vld [vmem:[%s53 + $0x60] sm:$0xff]
        %v2334 = vld [vmem:[%s53 + $0x68] sm:$0xff]
        %v2335 = vld [vmem:[%s53 + $0x70] sm:$0xff]
        %v2336 = vld [vmem:[%s53 + $0x78] sm:$0xff]
        %v2337 = vld [vmem:[%s53 + $0x80] sm:$0xff]
        %v2338 = vld [vmem:[%s53 + $0x88] sm:$0xff]
        %v2339 = vld [vmem:[%s53 + $0x90] sm:$0xff]
        %v2340 = vld [vmem:[%s53 + $0x98] sm:$0xff]
        %v2341 = vld [vmem:[%s53 + $0xa0] sm:$0xff]
        %v2342 = vld [vmem:[%s53 + $0xa8] sm:$0xff]
        %v2343 = vld [vmem:[%s53 + $0xb0] sm:$0xff]
        %v2344 = vld [vmem:[%s53 + $0xb8] sm:$0xff]
        %v2345 = vld [vmem:[%s53 + $0xc0] sm:$0xff]
        %v2346 = vld [vmem:[%s53 + $0xc8] sm:$0xff]
        %v2347 = vld [vmem:[%s53 + $0xd0] sm:$0xff]
        %v2348 = vld [vmem:[%s53 + $0xd8] sm:$0xff]
        %v2349 = vld [vmem:[%s53 + $0xe0] sm:$0xff]
        %v2350 = vld [vmem:[%s53 + $0xe8] sm:$0xff]
        %v2351 = vld [vmem:[%s53 + $0xf0] sm:$0xff]
        %v2352 = vld [vmem:[%s53 + $0xf8] sm:$0xff]
        %v2353 = vld [vmem:[#allocation10] sm:$0x1]
        %2354 = vmatpush.msra.mxu0 %v2336
        %2355 = vmatpush.msra.mxu0 %v2335
        %2356 = vmatpush.msra.mxu0 %v2334
        %2357 = vmatpush.msra.mxu0 %v2333
        %2358 = vmatpush.msra.mxu0 %v2332
        %2359 = vmatpush.msra.mxu0 %v2331
        %2360 = vmatpush.msra.mxu0 %v2330
        %2361 = vmatpush.msra.mxu0 %v2329
        %2362 = vmatpush.msra.mxu0 %v2328
        %2363 = vmatpush.msra.mxu0 %v2327
        %2364 = vmatpush.msra.mxu0 %v2326
        %2365 = vmatpush.msra.mxu0 %v2325
        %2366 = vmatpush.msra.mxu0 %v2324
        %2367 = vmatpush.msra.mxu0 %v2323
        %2368 = vmatpush.msra.mxu0 %v2322
        %2369 = vmatpush.msra.mxu0 %v2321
        %2370 = vmatmul.f32.gmra.mxu0 %v2319
        %v2371 = vpop.f32.mrf.mxu0
        %v2372 = vadd.f32 %v2353, %v2371
        %2373 = vdwg.mxu0
        %2374 = vmatpush.msra.mxu0 %v2352
        %2375 = vmatpush.msra.mxu0 %v2351
        %2376 = vmatpush.msra.mxu0 %v2350
        %2377 = vmatpush.msra.mxu0 %v2349
        %2378 = vmatpush.msra.mxu0 %v2348
        %2379 = vmatpush.msra.mxu0 %v2347
        %2380 = vmatpush.msra.mxu0 %v2346
        %2381 = vmatpush.msra.mxu0 %v2345
        %2382 = vmatpush.msra.mxu0 %v2344
        %2383 = vmatpush.msra.mxu0 %v2343
        %2384 = vmatpush.msra.mxu0 %v2342
        %2385 = vmatpush.msra.mxu0 %v2341
        %2386 = vmatpush.msra.mxu0 %v2340
        %2387 = vmatpush.msra.mxu0 %v2339
        %2388 = vmatpush.msra.mxu0 %v2338
        %2389 = vmatpush.msra.mxu0 %v2337
        %2390 = vmatmul.f32.gmra.mxu0 %v2320
        %v2391 = vpop.f32.mrf.mxu0
        %v2392 = vadd.f32 %v2372, %v2391
        %2393 = vdwg.mxu0
        %v2394 = vmax.f32 %v2392, 0.0
        %v2395 = vld [vmem:[%s57] sm:$0xff]
        %v2396 = vld [vmem:[%s57 + $0x8] sm:$0xff]
        %v2397 = vld [vmem:[%s57 + $0x10] sm:$0xff]
        %v2398 = vld [vmem:[%s57 + $0x18] sm:$0xff]
        %v2399 = vld [vmem:[%s57 + $0x20] sm:$0xff]
        %v2400 = vld [vmem:[%s57 + $0x28] sm:$0xff]
        %v2401 = vld [vmem:[%s57 + $0x30] sm:$0xff]
        %v2402 = vld [vmem:[%s57 + $0x38] sm:$0xff]
        %v2403 = vld [vmem:[%s57 + $0x40] sm:$0xff]
        %v2404 = vld [vmem:[%s57 + $0x48] sm:$0xff]
        %v2405 = vld [vmem:[%s57 + $0x50] sm:$0xff]
        %v2406 = vld [vmem:[%s57 + $0x58] sm:$0xff]
        %v2407 = vld [vmem:[%s57 + $0x60] sm:$0xff]
        %v2408 = vld [vmem:[%s57 + $0x68] sm:$0xff]
        %v2409 = vld [vmem:[%s57 + $0x70] sm:$0xff]
        %v2410 = vld [vmem:[%s57 + $0x78] sm:$0xff]
        %v2411 = vld [vmem:[#allocation11] sm:$0x1]
        %2412 = vmatpush.msra.mxu0 %v2410
        %2413 = vmatpush.msra.mxu0 %v2409
        %2414 = vmatpush.msra.mxu0 %v2408
        %2415 = vmatpush.msra.mxu0 %v2407
        %2416 = vmatpush.msra.mxu0 %v2406
        %2417 = vmatpush.msra.mxu0 %v2405
        %2418 = vmatpush.msra.mxu0 %v2404
        %2419 = vmatpush.msra.mxu0 %v2403
        %2420 = vmatpush.msra.mxu0 %v2402
        %2421 = vmatpush.msra.mxu0 %v2401
        %2422 = vmatpush.msra.mxu0 %v2400
        %2423 = vmatpush.msra.mxu0 %v2399
        %2424 = vmatpush.msra.mxu0 %v2398
        %2425 = vmatpush.msra.mxu0 %v2397
        %2426 = vmatpush.msra.mxu0 %v2396
        %2427 = vmatpush.msra.mxu0 %v2395
        %2428 = vmatmul.f32.gmra.mxu0 %v2394
        %v2429 = vpop.f32.mrf.mxu0
        %v2430 = vadd.f32 %v2411, %v2429
        %2431 = vdwg.mxu0
        %v2432 = vmax.f32 %v2430, 0.0
        %v2433 = vld [vmem:[%s61] sm:$0xff]
        %v2434 = vld [vmem:[%s61 + $0x8] sm:$0xff]
        %v2435 = vld [vmem:[%s61 + $0x10] sm:$0xff]
        %v2436 = vld [vmem:[%s61 + $0x18] sm:$0xff]
        %v2437 = vld [vmem:[%s61 + $0x20] sm:$0xff]
        %v2438 = vld [vmem:[%s61 + $0x28] sm:$0xff]
        %v2439 = vld [vmem:[%s61 + $0x30] sm:$0xff]
        %v2440 = vld [vmem:[%s61 + $0x38] sm:$0xff]
        %v2441 = vld [vmem:[#allocation13] sm:$0x1]
        %v2443 = vsel %vm1763, %v2432, 0
        %2445 = vmatpush.msra.mxu0 0.0
        %2446 = vmatpush.msra.mxu0 0.0
        %2447 = vmatpush.msra.mxu0 0.0
        %2448 = vmatpush.msra.mxu0 0.0
        %2449 = vmatpush.msra.mxu0 0.0
        %2450 = vmatpush.msra.mxu0 0.0
        %2451 = vmatpush.msra.mxu0 0.0
        %2452 = vmatpush.msra.mxu0 0.0
        %2453 = vmatpush.msra.mxu0 %v2440
        %2454 = vmatpush.msra.mxu0 %v2439
        %2455 = vmatpush.msra.mxu0 %v2438
        %2456 = vmatpush.msra.mxu0 %v2437
        %2457 = vmatpush.msra.mxu0 %v2436
        %2458 = vmatpush.msra.mxu0 %v2435
        %2459 = vmatpush.msra.mxu0 %v2434
        %2460 = vmatpush.msra.mxu0 %v2433
        %2461 = vmatmul.f32.gmra.mxu0 %v2443
        %v2462 = vpop.f32.mrf.mxu0
        %v2463 = vadd.f32 %v2441, %v2462
        %2464 = vdwg.mxu0
        %v2465 = vld [vmem:[#allocation14] sm:$0xff]
        %v2466 = vld [vmem:[#allocation14 + $0x8] sm:$0xff]
        %v2467 = vld [vmem:[#allocation14 + $0x10] sm:$0xff]
        %v2468 = vld [vmem:[#allocation14 + $0x18] sm:$0xff]
        %v2469 = vld [vmem:[#allocation14 + $0x20] sm:$0xff]
        %v2470 = vld [vmem:[#allocation14 + $0x28] sm:$0xff]
        %v2471 = vld [vmem:[#allocation14 + $0x30] sm:$0xff]
        %v2472 = vld [vmem:[#allocation14 + $0x38] sm:$0xff]
        %v2473 = vld [vmem:[#allocation16] sm:$0xff]
        %v2474 = vld [vmem:[#allocation16 + $0x8] sm:$0xff]
        %v2475 = vld [vmem:[#allocation16 + $0x10] sm:$0xff]
        %v2476 = vld [vmem:[#allocation16 + $0x18] sm:$0xff]
        %v2478 = vsel %vm1524, %v2463, 0
        %2480 = vmatpush.msra.mxu0 0.0
        %2481 = vmatpush.msra.mxu0 0.0
        %2482 = vmatpush.msra.mxu0 0.0
        %2483 = vmatpush.msra.mxu0 0.0
        %2484 = vmatpush.msra.mxu0 0.0
        %2485 = vmatpush.msra.mxu0 0.0
        %2486 = vmatpush.msra.mxu0 0.0
        %2487 = vmatpush.msra.mxu0 0.0
        %2488 = vmatpush.msra.mxu0 0.0
        %2489 = vmatpush.msra.mxu0 0.0
        %2490 = vmatpush.msra.mxu0 0.0
        %2491 = vmatpush.msra.mxu0 0.0
        %2492 = vmatpush.msra.mxu0 %v2476
        %2493 = vmatpush.msra.mxu0 %v2475
        %2494 = vmatpush.msra.mxu0 %v2474
        %2495 = vmatpush.msra.mxu0 %v2473
        %2496 = vmatmul.f32.gmra.mxu0 %v2478
        %v2497 = vpop.f32.mrf.mxu0
        %v2498 = vadd.f32 0.0, %v2497
        %2499 = vdwg.mxu0
        %v2501 = vsel %vm1763, %v2251, 0
        %2503 = vmatpush.msra.mxu0 0.0
        %2504 = vmatpush.msra.mxu0 0.0
        %2505 = vmatpush.msra.mxu0 0.0
        %2506 = vmatpush.msra.mxu0 0.0
        %2507 = vmatpush.msra.mxu0 0.0
        %2508 = vmatpush.msra.mxu0 0.0
        %2509 = vmatpush.msra.mxu0 0.0
        %2510 = vmatpush.msra.mxu0 0.0
        %2511 = vmatpush.msra.mxu0 %v2472
        %2512 = vmatpush.msra.mxu0 %v2471
        %2513 = vmatpush.msra.mxu0 %v2470
        %2514 = vmatpush.msra.mxu0 %v2469
        %2515 = vmatpush.msra.mxu0 %v2468
        %2516 = vmatpush.msra.mxu0 %v2467
        %2517 = vmatpush.msra.mxu0 %v2466
        %2518 = vmatpush.msra.mxu0 %v2465
        %2519 = vmatmul.f32.gmra.mxu0 %v2501
        %v2520 = vpop.f32.mrf.mxu0
        %v2521 = vadd.f32 %v2498, %v2520
        %2522 = vdwg.mxu0
        %v2523 = vld [vmem:[%s69] sm:$0x1]
        %v2524 = vadd.f32 %v2521, %v2523
        %v2525 = vmax.f32 %v2524, 0.0
        %v2526 = vld [vmem:[%s71] sm:$0xff]
        %v2527 = vld [vmem:[%s71 + $0x8] sm:$0xff]
        %v2528 = vld [vmem:[%s71 + $0x10] sm:$0xff]
        %v2529 = vld [vmem:[%s71 + $0x18] sm:$0xff]
        %v2530 = vld [vmem:[%s71 + $0x20] sm:$0xff]
        %v2531 = vld [vmem:[%s71 + $0x28] sm:$0xff]
        %v2532 = vld [vmem:[%s71 + $0x30] sm:$0xff]
        %v2533 = vld [vmem:[%s71 + $0x38] sm:$0xff]
        %v2534 = vld [vmem:[%s71 + $0x40] sm:$0xff]
        %v2535 = vld [vmem:[%s71 + $0x48] sm:$0xff]
        %v2536 = vld [vmem:[%s71 + $0x50] sm:$0xff]
        %v2537 = vld [vmem:[%s71 + $0x58] sm:$0xff]
        %v2538 = vld [vmem:[%s71 + $0x60] sm:$0xff]
        %v2539 = vld [vmem:[%s71 + $0x68] sm:$0xff]
        %v2540 = vld [vmem:[%s71 + $0x70] sm:$0xff]
        %v2541 = vld [vmem:[%s71 + $0x78] sm:$0xff]
        %v2542 = vld [vmem:[%s73] sm:$0x1]
        %2543 = vmatpush.msra.mxu0 %v2541
        %2544 = vmatpush.msra.mxu0 %v2540
        %2545 = vmatpush.msra.mxu0 %v2539
        %2546 = vmatpush.msra.mxu0 %v2538
        %2547 = vmatpush.msra.mxu0 %v2537
        %2548 = vmatpush.msra.mxu0 %v2536
        %2549 = vmatpush.msra.mxu0 %v2535
        %2550 = vmatpush.msra.mxu0 %v2534
        %2551 = vmatpush.msra.mxu0 %v2533
        %2552 = vmatpush.msra.mxu0 %v2532
        %2553 = vmatpush.msra.mxu0 %v2531
        %2554 = vmatpush.msra.mxu0 %v2530
        %2555 = vmatpush.msra.mxu0 %v2529
        %2556 = vmatpush.msra.mxu0 %v2528
        %2557 = vmatpush.msra.mxu0 %v2527
        %2558 = vmatpush.msra.mxu0 %v2526
        %2559 = vmatmul.f32.gmra.mxu0 %v2525
        %v2560 = vpop.f32.mrf.mxu0
        %v2561 = vadd.f32 %v2542, %v2560
        %2562 = vdwg.mxu0
        %vm2563 = vcmask 24576
        %2564 = vst.msk [vmem:[%s1314] sm:$0x1] %vm2563, %v2561
        %s2565 = sand.u32 %s903, 1
        %s2566 = scalar_lea.sflag [#allocation4], %s2565
        %s2567 = sand.u32 %s903, 1
        %s2568 = scalar_lea.vmem [#allocation17], %s2567
        // Predicated region
        $region205: #{dqn_forward.1} parent=167 // pred_check
          %p2569 = pneg %p913
        $region206: #{dqn_forward.1} parent=167 // pred_check_branch
          %2571 = sbr.rel (%p2569) target = $region208
        $region207: #{dqn_forward.1} parent=167 // pred_region
          %2573 = vsyncadd %s2566, 0
          %s2574 = scalar_lea.hbm %s75, %s98
          %s2576 = sshll.u32 %s2568, 4
          %s2577 = int_to_ptr.vmem [resolvable:$true] %s2576
          %s2578 = sshll.u32 %s2574, 4
          %s2579 = int_to_ptr.hbm [resolvable:$true] %s2578
          %2581 = dma.vmem_to_hbm [thread:$0]  %s2577, 16, %s2579, %s2566
        $region208: #{dqn_forward.1} parent=167 // pred_fallthru
          _
      $region168: #{dqn_forward.1} parent=5 // pred_fallthru
        _
      %p2582 = scmp.le.s32.totalorder 2, %s93
      // Predicated region
      $region209: #{dqn_forward.1} parent=5 // pred_check
        %p2583 = pneg %p2582
      $region210: #{dqn_forward.1} parent=5 // pred_check_branch
        %2585 = sbr.rel (%p2583) target = $region212
      $region211: #{dqn_forward.1} parent=5 // pred_region
        %s2586 = ssub.s32 %s93, 2
        // Predicated region
        $region213: #{dqn_forward.1} parent=211 // pred_check
          %p2587 = pneg %p919
        $region214: #{dqn_forward.1} parent=211 // pred_check_branch
          %2589 = sbr.rel (%p2587) target = $region216
        $region215: #{dqn_forward.1} parent=211 // pred_region
          %s2590 = sand.u32 %s904, 1
          %s2591 = scalar_lea.sflag [#allocation4], %s2590
          %s2592 = sand.u32 %s904, 1
          %s2593 = scalar_lea.vmem [#allocation17], %s2592
          %2595 = dma.done %s2591, 16
        $region216: #{dqn_forward.1} parent=211 // pred_fallthru
          _
      $region212: #{dqn_forward.1} parent=5 // pred_fallthru
        _
    $region6: #{dqn_forward.1} parent=1 // loop_footer
      %s97 = sadd.s32 1, %s93
    $region7: #{dqn_forward.1} parent=1 // loop_footer_branch
      %92 = sbr.rel target = $region3
    $region8: #{dqn_forward.1} parent=1 // loop_exit
      _
    %2596 = vsyncpa [#allocation3], 1
    %s2597 = scalar_lea.sflag [#allocation3], 1
    %2598 = vsyncpa %s2597, 1
    %2599 = vsyncpa [#allocation6], 1
    %s2600 = scalar_lea.sflag [#allocation6], 1
    %2601 = vsyncpa %s2600, 1
    %2602 = vsyncpa [#allocation9], 1
    %2603 = vsyncpa [#allocation12], 1
    %2604 = vsyncpa [#allocation15], 1
    %2605 = vsyncpa [#allocation4], 1
    %s2606 = scalar_lea.sflag [#allocation4], 1
    %2607 = vsyncpa %s2606, 1

</llo_original>
